<compile_context>
chip_gen: v7x
topology: tpu7x:2x2x1
jax: 0.10.0
libtpu: 0.0.40
codegen_flags: <defaults>
</compile_context>

<pallas_src>
import functools

import jax
import jax.numpy as jnp
from jax.experimental import pallas as pl
from jax.experimental.pallas import tpu as pltpu

_NEG_SLOPE = 0.01   # nn.LeakyReLU default
_BN_EPS = 1e-5      # nn.BatchNorm2d default
_LANES = 128


# ---------------------------------------------------------------------------
# Fused GEMM + per-column shift (+ LeakyReLU):  Y = act(X @ W + shift)
# Single dot per grid step (full K resident), bf16 operands, f32 epilogue.
# ---------------------------------------------------------------------------
def _gemm_bias_act_kernel(x_ref, w_ref, shift_ref, o_ref, *, apply_act):
    y = jnp.dot(x_ref[...], w_ref[...], preferred_element_type=jnp.float32)
    y = y + shift_ref[...]
    if apply_act:
        y = jnp.where(y >= 0, y, _NEG_SLOPE * y)
    o_ref[...] = y.astype(o_ref.dtype)


def _pick_m_tile(m, cap=1024):
    # ~2 grid steps keeps both v7x TensorCores busy on the "parallel" axis while
    # the ~0.35us/step overhead stays negligible on single-TC v5e/v6e.
    for t in (1024, 512, 256, 128, 64, 32, 16, 8):
        if t <= cap and t <= m // 2 and m % t == 0:
            return t
    return m


def gemm_bias_act(x, w_pad, shift_pad, *, apply_act, out_dtype, n_real):
    """x: [M,K] bf16, w_pad: [K,128] bf16, shift_pad: [1,128] f32 -> [M,128]."""
    m, kdim = x.shape
    kp, n_pad = w_pad.shape
    assert kdim == kp, (kdim, kp)

    tm = _pick_m_tile(m)
    grid = (m // tm,)

    kernel = functools.partial(_gemm_bias_act_kernel, apply_act=apply_act)
    cost = pl.CostEstimate(
        flops=2 * m * kdim * n_real,
        transcendentals=0,
        bytes_accessed=(x.size * x.dtype.itemsize
                        + w_pad.size * w_pad.dtype.itemsize
                        + shift_pad.size * 4
                        + m * n_pad * jnp.dtype(out_dtype).itemsize),
    )

    return pl.pallas_call(
        kernel,
        out_shape=jax.ShapeDtypeStruct((m, n_pad), out_dtype),
        grid_spec=pltpu.PrefetchScalarGridSpec(
            num_scalar_prefetch=0,
            grid=grid,
            in_specs=[
                pl.BlockSpec((tm, kdim), lambda i: (i, 0)),
                pl.BlockSpec((kp, n_pad), lambda i: (0, 0)),
                pl.BlockSpec((1, n_pad), lambda i: (0, 0)),
            ],
            out_specs=pl.BlockSpec((tm, n_pad), lambda i: (i, 0)),
        ),
        compiler_params=pltpu.CompilerParams(
            dimension_semantics=("parallel",)),
        cost_estimate=cost,
    )(x, w_pad, shift_pad)


# ---------------------------------------------------------------------------
# Fused fc (+LeakyReLU) + fc1:  logits = leaky(x @ W1 + b1) @ W2 + b2
# W2/b2 stay resident in VMEM; one pallas_call instead of two.
# ---------------------------------------------------------------------------
def _fc_fused_kernel(x_ref, w1_ref, b1_ref, w2_ref, b2_ref, o_ref):
    h = jnp.dot(x_ref[...], w1_ref[...], preferred_element_type=jnp.float32)
    h = h + b1_ref[...]
    h = jnp.where(h >= 0, h, _NEG_SLOPE * h)
    y = jnp.dot(h, w2_ref[...], preferred_element_type=jnp.float32)
    o_ref[...] = (y + b2_ref[...]).astype(o_ref.dtype)


def fc_fused(x, w1, b1, w2, b2):
    """x: [M,K] bf16, w1: [K,128] bf16, w2: [128,128] f32 -> [M,128] f32."""
    m, kdim = x.shape
    n1 = w1.shape[1]
    n2 = w2.shape[1]
    cost = pl.CostEstimate(
        flops=2 * m * kdim * n1 + 2 * m * n1 * n2,
        transcendentals=0,
        bytes_accessed=(x.size * x.dtype.itemsize + w1.size * 2
                        + w2.size * 4 + (n1 + n2) * 4 + m * n2 * 4),
    )
    return pl.pallas_call(
        _fc_fused_kernel,
        out_shape=jax.ShapeDtypeStruct((m, n2), jnp.float32),
        grid_spec=pltpu.PrefetchScalarGridSpec(
            num_scalar_prefetch=0,
            grid=(1,),
            in_specs=[
                pl.BlockSpec((m, kdim), lambda i: (0, 0)),
                pl.BlockSpec((kdim, n1), lambda i: (0, 0)),
                pl.BlockSpec((1, n1), lambda i: (0, 0)),
                pl.BlockSpec((n1, n2), lambda i: (0, 0)),
                pl.BlockSpec((1, n2), lambda i: (0, 0)),
            ],
            out_specs=pl.BlockSpec((m, n2), lambda i: (0, 0)),
        ),
        compiler_params=pltpu.CompilerParams(
            dimension_semantics=("arbitrary",)),
        cost_estimate=cost,
    )(x, w1, b1, w2, b2)


# ---------------------------------------------------------------------------
# Wrapper: im2col (layout plumbing) + the fused Pallas layers.
# ---------------------------------------------------------------------------
def _im2col_3x3(x, stride):
    """x: [B,H,W,C] NHWC, 3x3 window, padding=1 -> ([B*Ho*Wo, 9*C], Ho, Wo)."""
    b, h, w, c = x.shape
    ho = (h + 2 - 3) // stride + 1
    wo = (w + 2 - 3) // stride + 1
    xp = jnp.pad(x, ((0, 0), (1, 1), (1, 1), (0, 0)))
    cols = []
    for ky in range(3):
        for kx in range(3):
            cols.append(xp[:, ky:ky + stride * (ho - 1) + 1:stride,
                           kx:kx + stride * (wo - 1) + 1:stride, :])
    patches = jnp.stack(cols, axis=3)            # [B, Ho, Wo, 9, C]
    return patches.reshape(b * ho * wo, 9 * c), ho, wo


def prepare_params(params):
    """One-time parameter prep: BN folding, weight flatten/permute, 128-lane
    padding, bf16 cast.  Keeps the per-call path free of weight plumbing."""
    prep = {}
    for name in ("conv1", "conv2", "conv3"):
        w, bias, gamma, beta, mean, var = params[name]
        cout, cin = w.shape[0], w.shape[1]
        scale = gamma / jnp.sqrt(var + _BN_EPS)          # folded eval-mode BN
        shift = (bias - mean) * scale + beta
        # [Cout,Cin,3,3] -> [(ky,kx,cin), Cout], matching im2col column order.
        w_mat = jnp.transpose(w, (2, 3, 1, 0)).reshape(9 * cin, cout)
        w_mat = w_mat * scale[None, :]                    # scale folded into W
        w_pad = jnp.zeros((9 * cin, _LANES), jnp.float32).at[:, :cout].set(w_mat)
        shift_pad = jnp.zeros((1, _LANES), jnp.float32).at[0, :cout].set(shift)
        prep[name] = (w_pad.astype(jnp.bfloat16), shift_pad)

    fc_w, fc_b = params["fc"]                             # [100,1280], [100]
    fc1_w, fc1_b = params["fc1"]                          # [2,100], [2]
    n_hidden, in_feats = fc_w.shape
    c3 = params["conv3"][0].shape[0]                      # 80
    sp = int(round((in_feats // c3) ** 0.5))              # 4
    # PyTorch flattens NCHW (col = c*sp*sp + y*sp + x); pre-permute the fc
    # weight columns so the kernel can consume the NHWC flatten directly.
    w1 = jnp.transpose(fc_w.reshape(n_hidden, c3, sp, sp), (0, 2, 3, 1))
    w1 = w1.reshape(n_hidden, in_feats).T                 # [1280, 100]
    w1_pad = jnp.zeros((in_feats, _LANES), jnp.float32).at[:, :n_hidden].set(w1)
    b1_pad = jnp.zeros((1, _LANES), jnp.float32).at[0, :n_hidden].set(fc_b)
    n_out = fc1_w.shape[0]
    w2_pad = jnp.zeros((_LANES, _LANES), jnp.float32).at[:n_hidden, :n_out].set(fc1_w.T)
    b2_pad = jnp.zeros((1, _LANES), jnp.float32).at[0, :n_out].set(fc1_b)
    prep["fc"] = (w1_pad.astype(jnp.bfloat16), b1_pad, w2_pad, b2_pad)
    return prep


def _conv_layer(h, layer_prep, *, stride, cout):
    w_pad, shift_pad = layer_prep
    bsz = h.shape[0]
    cols, ho, wo = _im2col_3x3(h, stride)                 # bf16 [B*Ho*Wo, 9*Cin]
    y = gemm_bias_act(cols, w_pad, shift_pad,
                      apply_act=True, out_dtype=jnp.bfloat16, n_real=cout)
    return y[:, :cout].reshape(bsz, ho, wo, cout)


def custom_cnn_forward(x_nchw, prep):
    """x_nchw: [B,3,32,32] float32 -> logits [B,2]."""
    x = jnp.transpose(x_nchw, (0, 2, 3, 1)).astype(jnp.bfloat16)   # NHWC, bf16

    h = _conv_layer(x, prep["conv1"], stride=1, cout=20)   # [B,32,32,20]
    h = _conv_layer(h, prep["conv2"], stride=2, cout=40)   # [B,16,16,40]
    h = _conv_layer(h, prep["conv3"], stride=2, cout=80)   # [B, 8, 8,80]

    # 2x2 maxpool in plain JAX: a pallas_call here would be pure launch overhead.
    b, hh, ww, c = h.shape
    h = h.reshape(b, hh // 2, 2, ww // 2, 2, c).max(axis=(2, 4))   # [B,4,4,80]
    h = h.reshape(b, -1)     # NHWC flatten; fc weights were pre-permuted to match

    w1, b1, w2, b2 = prep["fc"]
    logits = fc_fused(h, w1, b1, w2, b2)                   # fused fc+act+fc1
    return logits[:, :2]


# ---------------------------------------------------------------------------
# Pure-JAX reference for correctness checking.
# ---------------------------------------------------------------------------
def reference_forward(x, params):
    def leaky(v):
        return jnp.where(v >= 0, v, _NEG_SLOPE * v)

    def block(h, p, stride):
        w, bias, gamma, beta, mean, var = p
        y = jax.lax.conv_general_dilated(
            h, w, window_strides=(stride, stride), padding=((1, 1), (1, 1)),
            dimension_numbers=("NCHW", "OIHW", "NCHW"),
            precision=jax.lax.Precision.HIGHEST)
        y = y + bias[None, :, None, None]
        s = gamma / jnp.sqrt(var + _BN_EPS)
        y = (y - mean[None, :, None, None]) * s[None, :, None, None] \
            + beta[None, :, None, None]
        return leaky(y)

    h = block(x, params["conv1"], 1)
    h = block(h, params["conv2"], 2)
    h = block(h, params["conv3"], 2)
    b, c, hh, ww = h.shape
    h = h.reshape(b, c, hh // 2, 2, ww // 2, 2).max(axis=(3, 5))
    h = h.reshape(b, -1)
    fc_w, fc_b = params["fc"]
    h = leaky(jnp.dot(h, fc_w.T, precision=jax.lax.Precision.HIGHEST) + fc_b)
    fc1_w, fc1_b = params["fc1"]
    return jnp.dot(h, fc1_w.T, precision=jax.lax.Precision.HIGHEST) + fc1_b


def init_params(key):
    def conv_block_params(k, cout, cin):
        kw, kb, kg, kbeta, km, kv = jax.random.split(k, 6)
        bound = 1.0 / jnp.sqrt(jnp.float32(cin * 9))
        w = jax.random.uniform(kw, (cout, cin, 3, 3), jnp.float32, -bound, bound)
        b = jax.random.uniform(kb, (cout,), jnp.float32, -bound, bound)
        gamma = jax.random.uniform(kg, (cout,), jnp.float32, 0.5, 1.5)
        beta = 0.1 * jax.random.normal(kbeta, (cout,), jnp.float32)
        mean = 0.1 * jax.random.normal(km, (cout,), jnp.float32)
        var = jax.random.uniform(kv, (cout,), jnp.float32, 0.5, 1.5)
        return (w, b, gamma, beta, mean, var)

    def linear_params(k, cout, cin):
        kw, kb = jax.random.split(k)
        bound = 1.0 / jnp.sqrt(jnp.float32(cin))
        w = jax.random.uniform(kw, (cout, cin), jnp.float32, -bound, bound)
        b = jax.random.uniform(kb, (cout,), jnp.float32, -bound, bound)
        return (w, b)

    k1, k2, k3, k4, k5 = jax.random.split(key, 5)
    return {
        "conv1": conv_block_params(k1, 20, 3),
        "conv2": conv_block_params(k2, 40, 20),
        "conv3": conv_block_params(k3, 80, 40),
        "fc": linear_params(k4, 100, 80 * 4 * 4),
        "fc1": linear_params(k5, 2, 100),
    }


if __name__ == "__main__":
    key = jax.random.PRNGKey(0)
    k_x, k_p = jax.random.split(key)

    batch = 2
    x = jax.random.normal(k_x, (batch, 3, 32, 32), dtype=jnp.float32)
    params = init_params(k_p)
    prep = prepare_params(params)            # one-time weight prep (outside jit)

    forward = jax.jit(custom_cnn_forward)
    out = jax.block_until_ready(forward(x, prep))

    ref = jax.block_until_ready(reference_forward(x, params))
    assert out.shape == (batch, 2), out.shape
    # bf16 MXU inputs with f32 accumulation: tolerance chosen accordingly.
    assert jnp.allclose(out, ref, atol=5e-2, rtol=5e-2), (out, ref)

    print("KERNEL_OK")
</pallas_src>

<mosaic_0001>
module attributes {stable_mosaic.version = 11 : i64} {
  func.func @_gemm_bias_act_kernel(%arg0: i32, %arg1: memref<1024x27xbf16, #tpu.memory_space<vmem>>, %arg2: memref<27x128xbf16, #tpu.memory_space<vmem>>, %arg3: memref<1x128xf32, #tpu.memory_space<vmem>>, %arg4: memref<1024x128xbf16, #tpu.memory_space<vmem>>) attributes {dimension_semantics = [#tpu.dimension_semantics<parallel>], iteration_bounds = array<i64: 2>, scalar_prefetch = 0 : i64, scratch_operands = 0 : i64, tpu.core_type = #tpu.core_type<tc>, window_params = [{transform_indices = @transform_0, window_bounds = array<i64: 1024, 27>}, {pipeline_mode = #tpu.pipeline_mode<synchronous>, transform_indices = @transform_1, window_bounds = array<i64: 27, 128>}, {pipeline_mode = #tpu.pipeline_mode<synchronous>, transform_indices = @transform_2, window_bounds = array<i64: 1, 128>}, {transform_indices = @transform_3, window_bounds = array<i64: 1024, 128>}]} {
    %c0 = arith.constant 0 : index
    %c0_0 = arith.constant 0 : index
    %0 = vector.load %arg1[%c0, %c0_0] : memref<1024x27xbf16, #tpu.memory_space<vmem>>, vector<1024x27xbf16>
    %c0_1 = arith.constant 0 : index
    %c0_2 = arith.constant 0 : index
    %1 = vector.load %arg2[%c0_1, %c0_2] : memref<27x128xbf16, #tpu.memory_space<vmem>>, vector<27x128xbf16>
    %cst = arith.constant dense<0.000000e+00> : vector<1024x128xf32>
    %2 = tpu.matmul %0, %1, %cst {dimension_numbers = #tpu.dot_dimension_numbers<[1], [0], [0], [1], [0, 0, 1, 1], [], []>} : vector<1024x27xbf16>, vector<27x128xbf16>, vector<1024x128xf32> -> vector<1024x128xf32>
    %c0_3 = arith.constant 0 : index
    %c0_4 = arith.constant 0 : index
    %3 = vector.load %arg3[%c0_3, %c0_4] : memref<1x128xf32, #tpu.memory_space<vmem>>, vector<1x128xf32>
    %4 = vector.broadcast %3 : vector<1x128xf32> to vector<1024x128xf32>
    %5 = arith.addf %2, %4 : vector<1024x128xf32>
    %cst_5 = arith.constant 0.000000e+00 : f32
    %6 = vector.broadcast %cst_5 : f32 to vector<1024x128xf32>
    %7 = arith.cmpf oge, %5, %6 : vector<1024x128xf32>
    %cst_6 = arith.constant 0.00999999977 : f32
    %8 = vector.broadcast %cst_6 : f32 to vector<1024x128xf32>
    %9 = arith.mulf %8, %5 : vector<1024x128xf32>
    %10 = arith.select %7, %5, %9 : vector<1024x128xi1>, vector<1024x128xf32>
    %11 = arith.truncf %10 : vector<1024x128xf32> to vector<1024x128xbf16>
    %c0_7 = arith.constant 0 : index
    %c0_8 = arith.constant 0 : index
    %12 = vector.load %arg4[%c0_7, %c0_8] : memref<1024x128xbf16, #tpu.memory_space<vmem>>, vector<1024x128xbf16>
    tpu.vector_store %arg4[%c0_7, %c0_8], %11 {strides = array<i32>} : memref<1024x128xbf16, #tpu.memory_space<vmem>>, vector<1024x128xbf16>,
    return
  }
  func.func @transform_0(%arg0: i32) -> (i32, i32) {
    %c0_i32 = arith.constant 0 : i32
    %c0_i32_0 = arith.constant 0 : i32
    return %arg0, %c0_i32 : i32, i32
  }
  func.func @transform_1(%arg0: i32) -> (i32, i32) {
    %c0_i32 = arith.constant 0 : i32
    %c0_i32_0 = arith.constant 0 : i32
    %c0_i32_1 = arith.constant 0 : i32
    return %c0_i32, %c0_i32_0 : i32, i32
  }
  func.func @transform_2(%arg0: i32) -> (i32, i32) {
    %c0_i32 = arith.constant 0 : i32
    %c0_i32_0 = arith.constant 0 : i32
    %c0_i32_1 = arith.constant 0 : i32
    return %c0_i32, %c0_i32_0 : i32, i32
  }
  func.func @transform_3(%arg0: i32) -> (i32, i32) {
    %c0_i32 = arith.constant 0 : i32
    %c0_i32_0 = arith.constant 0 : i32
    return %arg0, %c0_i32 : i32, i32
  }
}

module attributes {stable_mosaic.version = 11 : i64} {
  func.func @_gemm_bias_act_kernel(%arg0: i32, %arg1: memref<256x180xbf16, #tpu.memory_space<vmem>>, %arg2: memref<180x128xbf16, #tpu.memory_space<vmem>>, %arg3: memref<1x128xf32, #tpu.memory_space<vmem>>, %arg4: memref<256x128xbf16, #tpu.memory_space<vmem>>) attributes {dimension_semantics = [#tpu.dimension_semantics<parallel>], iteration_bounds = array<i64: 2>, scalar_prefetch = 0 : i64, scratch_operands = 0 : i64, tpu.core_type = #tpu.core_type<tc>, window_params = [{transform_indices = @transform_0, window_bounds = array<i64: 256, 180>}, {pipeline_mode = #tpu.pipeline_mode<synchronous>, transform_indices = @transform_1, window_bounds = array<i64: 180, 128>}, {pipeline_mode = #tpu.pipeline_mode<synchronous>, transform_indices = @transform_2, window_bounds = array<i64: 1, 128>}, {transform_indices = @transform_3, window_bounds = array<i64: 256, 128>}]} {
    %c0 = arith.constant 0 : index
    %c0_0 = arith.constant 0 : index
    %0 = vector.load %arg1[%c0, %c0_0] : memref<256x180xbf16, #tpu.memory_space<vmem>>, vector<256x180xbf16>
    %c0_1 = arith.constant 0 : index
    %c0_2 = arith.constant 0 : index
    %1 = vector.load %arg2[%c0_1, %c0_2] : memref<180x128xbf16, #tpu.memory_space<vmem>>, vector<180x128xbf16>
    %cst = arith.constant dense<0.000000e+00> : vector<256x128xf32>
    %2 = tpu.matmul %0, %1, %cst {dimension_numbers = #tpu.dot_dimension_numbers<[1], [0], [0], [1], [0, 0, 1, 1], [], []>} : vector<256x180xbf16>, vector<180x128xbf16>, vector<256x128xf32> -> vector<256x128xf32>
    %c0_3 = arith.constant 0 : index
    %c0_4 = arith.constant 0 : index
    %3 = vector.load %arg3[%c0_3, %c0_4] : memref<1x128xf32, #tpu.memory_space<vmem>>, vector<1x128xf32>
    %4 = vector.broadcast %3 : vector<1x128xf32> to vector<256x128xf32>
    %5 = arith.addf %2, %4 : vector<256x128xf32>
    %cst_5 = arith.constant 0.000000e+00 : f32
    %6 = vector.broadcast %cst_5 : f32 to vector<256x128xf32>
    %7 = arith.cmpf oge, %5, %6 : vector<256x128xf32>
    %cst_6 = arith.constant 0.00999999977 : f32
    %8 = vector.broadcast %cst_6 : f32 to vector<256x128xf32>
    %9 = arith.mulf %8, %5 : vector<256x128xf32>
    %10 = arith.select %7, %5, %9 : vector<256x128xi1>, vector<256x128xf32>
    %11 = arith.truncf %10 : vector<256x128xf32> to vector<256x128xbf16>
    %c0_7 = arith.constant 0 : index
    %c0_8 = arith.constant 0 : index
    %12 = vector.load %arg4[%c0_7, %c0_8] : memref<256x128xbf16, #tpu.memory_space<vmem>>, vector<256x128xbf16>
    tpu.vector_store %arg4[%c0_7, %c0_8], %11 {strides = array<i32>} : memref<256x128xbf16, #tpu.memory_space<vmem>>, vector<256x128xbf16>,
    return
  }
  func.func @transform_0(%arg0: i32) -> (i32, i32) {
    %c0_i32 = arith.constant 0 : i32
    %c0_i32_0 = arith.constant 0 : i32
    return %arg0, %c0_i32 : i32, i32
  }
  func.func @transform_1(%arg0: i32) -> (i32, i32) {
    %c0_i32 = arith.constant 0 : i32
    %c0_i32_0 = arith.constant 0 : i32
    %c0_i32_1 = arith.constant 0 : i32
    return %c0_i32, %c0_i32_0 : i32, i32
  }
  func.func @transform_2(%arg0: i32) -> (i32, i32) {
    %c0_i32 = arith.constant 0 : i32
    %c0_i32_0 = arith.constant 0 : i32
    %c0_i32_1 = arith.constant 0 : i32
    return %c0_i32, %c0_i32_0 : i32, i32
  }
  func.func @transform_3(%arg0: i32) -> (i32, i32) {
    %c0_i32 = arith.constant 0 : i32
    %c0_i32_0 = arith.constant 0 : i32
    return %arg0, %c0_i32 : i32, i32
  }
}

module attributes {stable_mosaic.version = 11 : i64} {
  func.func @_gemm_bias_act_kernel(%arg0: i32, %arg1: memref<64x360xbf16, #tpu.memory_space<vmem>>, %arg2: memref<360x128xbf16, #tpu.memory_space<vmem>>, %arg3: memref<1x128xf32, #tpu.memory_space<vmem>>, %arg4: memref<64x128xbf16, #tpu.memory_space<vmem>>) attributes {dimension_semantics = [#tpu.dimension_semantics<parallel>], iteration_bounds = array<i64: 2>, scalar_prefetch = 0 : i64, scratch_operands = 0 : i64, tpu.core_type = #tpu.core_type<tc>, window_params = [{transform_indices = @transform_0, window_bounds = array<i64: 64, 360>}, {pipeline_mode = #tpu.pipeline_mode<synchronous>, transform_indices = @transform_1, window_bounds = array<i64: 360, 128>}, {pipeline_mode = #tpu.pipeline_mode<synchronous>, transform_indices = @transform_2, window_bounds = array<i64: 1, 128>}, {transform_indices = @transform_3, window_bounds = array<i64: 64, 128>}]} {
    %c0 = arith.constant 0 : index
    %c0_0 = arith.constant 0 : index
    %0 = vector.load %arg1[%c0, %c0_0] : memref<64x360xbf16, #tpu.memory_space<vmem>>, vector<64x360xbf16>
    %c0_1 = arith.constant 0 : index
    %c0_2 = arith.constant 0 : index
    %1 = vector.load %arg2[%c0_1, %c0_2] : memref<360x128xbf16, #tpu.memory_space<vmem>>, vector<360x128xbf16>
    %cst = arith.constant dense<0.000000e+00> : vector<64x128xf32>
    %2 = tpu.matmul %0, %1, %cst {dimension_numbers = #tpu.dot_dimension_numbers<[1], [0], [0], [1], [0, 0, 1, 1], [], []>} : vector<64x360xbf16>, vector<360x128xbf16>, vector<64x128xf32> -> vector<64x128xf32>
    %c0_3 = arith.constant 0 : index
    %c0_4 = arith.constant 0 : index
    %3 = vector.load %arg3[%c0_3, %c0_4] : memref<1x128xf32, #tpu.memory_space<vmem>>, vector<1x128xf32>
    %4 = vector.broadcast %3 : vector<1x128xf32> to vector<64x128xf32>
    %5 = arith.addf %2, %4 : vector<64x128xf32>
    %cst_5 = arith.constant 0.000000e+00 : f32
    %6 = vector.broadcast %cst_5 : f32 to vector<64x128xf32>
    %7 = arith.cmpf oge, %5, %6 : vector<64x128xf32>
    %cst_6 = arith.constant 0.00999999977 : f32
    %8 = vector.broadcast %cst_6 : f32 to vector<64x128xf32>
    %9 = arith.mulf %8, %5 : vector<64x128xf32>
    %10 = arith.select %7, %5, %9 : vector<64x128xi1>, vector<64x128xf32>
    %11 = arith.truncf %10 : vector<64x128xf32> to vector<64x128xbf16>
    %c0_7 = arith.constant 0 : index
    %c0_8 = arith.constant 0 : index
    %12 = vector.load %arg4[%c0_7, %c0_8] : memref<64x128xbf16, #tpu.memory_space<vmem>>, vector<64x128xbf16>
    tpu.vector_store %arg4[%c0_7, %c0_8], %11 {strides = array<i32>} : memref<64x128xbf16, #tpu.memory_space<vmem>>, vector<64x128xbf16>,
    return
  }
  func.func @transform_0(%arg0: i32) -> (i32, i32) {
    %c0_i32 = arith.constant 0 : i32
    %c0_i32_0 = arith.constant 0 : i32
    return %arg0, %c0_i32 : i32, i32
  }
  func.func @transform_1(%arg0: i32) -> (i32, i32) {
    %c0_i32 = arith.constant 0 : i32
    %c0_i32_0 = arith.constant 0 : i32
    %c0_i32_1 = arith.constant 0 : i32
    return %c0_i32, %c0_i32_0 : i32, i32
  }
  func.func @transform_2(%arg0: i32) -> (i32, i32) {
    %c0_i32 = arith.constant 0 : i32
    %c0_i32_0 = arith.constant 0 : i32
    %c0_i32_1 = arith.constant 0 : i32
    return %c0_i32, %c0_i32_0 : i32, i32
  }
  func.func @transform_3(%arg0: i32) -> (i32, i32) {
    %c0_i32 = arith.constant 0 : i32
    %c0_i32_0 = arith.constant 0 : i32
    return %arg0, %c0_i32 : i32, i32
  }
}

module attributes {stable_mosaic.version = 11 : i64} {
  func.func @_fc_fused_kernel(%arg0: i32, %arg1: memref<2x1280xbf16, #tpu.memory_space<vmem>>, %arg2: memref<1280x128xbf16, #tpu.memory_space<vmem>>, %arg3: memref<1x128xf32, #tpu.memory_space<vmem>>, %arg4: memref<128x128xf32, #tpu.memory_space<vmem>>, %arg5: memref<1x128xf32, #tpu.memory_space<vmem>>, %arg6: memref<2x128xf32, #tpu.memory_space<vmem>>) attributes {dimension_semantics = [#tpu.dimension_semantics<arbitrary>], iteration_bounds = array<i64: 1>, scalar_prefetch = 0 : i64, scratch_operands = 0 : i64, tpu.core_type = #tpu.core_type<tc>, window_params = [{pipeline_mode = #tpu.pipeline_mode<synchronous>, transform_indices = @transform_0, window_bounds = array<i64: 2, 1280>}, {pipeline_mode = #tpu.pipeline_mode<synchronous>, transform_indices = @transform_1, window_bounds = array<i64: 1280, 128>}, {pipeline_mode = #tpu.pipeline_mode<synchronous>, transform_indices = @transform_2, window_bounds = array<i64: 1, 128>}, {pipeline_mode = #tpu.pipeline_mode<synchronous>, transform_indices = @transform_3, window_bounds = array<i64: 128, 128>}, {pipeline_mode = #tpu.pipeline_mode<synchronous>, transform_indices = @transform_4, window_bounds = array<i64: 1, 128>}, {pipeline_mode = #tpu.pipeline_mode<synchronous>, transform_indices = @transform_5, window_bounds = array<i64: 2, 128>}]} {
    %c0 = arith.constant 0 : index
    %c0_0 = arith.constant 0 : index
    %0 = vector.load %arg1[%c0, %c0_0] : memref<2x1280xbf16, #tpu.memory_space<vmem>>, vector<2x1280xbf16>
    %c0_1 = arith.constant 0 : index
    %c0_2 = arith.constant 0 : index
    %1 = vector.load %arg2[%c0_1, %c0_2] : memref<1280x128xbf16, #tpu.memory_space<vmem>>, vector<1280x128xbf16>
    %cst = arith.constant dense<0.000000e+00> : vector<2x128xf32>
    %2 = tpu.matmul %0, %1, %cst {dimension_numbers = #tpu.dot_dimension_numbers<[1], [0], [0], [1], [0, 0, 1, 1], [], []>} : vector<2x1280xbf16>, vector<1280x128xbf16>, vector<2x128xf32> -> vector<2x128xf32>
    %c0_3 = arith.constant 0 : index
    %c0_4 = arith.constant 0 : index
    %3 = vector.load %arg3[%c0_3, %c0_4] : memref<1x128xf32, #tpu.memory_space<vmem>>, vector<1x128xf32>
    %4 = vector.broadcast %3 : vector<1x128xf32> to vector<2x128xf32>
    %5 = arith.addf %2, %4 : vector<2x128xf32>
    %cst_5 = arith.constant 0.000000e+00 : f32
    %6 = vector.broadcast %cst_5 : f32 to vector<2x128xf32>
    %7 = arith.cmpf oge, %5, %6 : vector<2x128xf32>
    %cst_6 = arith.constant 0.00999999977 : f32
    %8 = vector.broadcast %cst_6 : f32 to vector<2x128xf32>
    %9 = arith.mulf %8, %5 : vector<2x128xf32>
    %10 = arith.select %7, %5, %9 : vector<2x128xi1>, vector<2x128xf32>
    %c0_7 = arith.constant 0 : index
    %c0_8 = arith.constant 0 : index
    %11 = vector.load %arg4[%c0_7, %c0_8] : memref<128x128xf32, #tpu.memory_space<vmem>>, vector<128x128xf32>
    %cst_9 = arith.constant dense<0.000000e+00> : vector<2x128xf32>
    %12 = tpu.matmul %10, %11, %cst_9 {dimension_numbers = #tpu.dot_dimension_numbers<[1], [0], [0], [1], [0, 0, 1, 1], [], []>} : vector<2x128xf32>, vector<128x128xf32>, vector<2x128xf32> -> vector<2x128xf32>
    %c0_10 = arith.constant 0 : index
    %c0_11 = arith.constant 0 : index
    %13 = vector.load %arg5[%c0_10, %c0_11] : memref<1x128xf32, #tpu.memory_space<vmem>>, vector<1x128xf32>
    %14 = vector.broadcast %13 : vector<1x128xf32> to vector<2x128xf32>
    %15 = arith.addf %12, %14 : vector<2x128xf32>
    %c0_12 = arith.constant 0 : index
    %c0_13 = arith.constant 0 : index
    %16 = vector.load %arg6[%c0_12, %c0_13] : memref<2x128xf32, #tpu.memory_space<vmem>>, vector<2x128xf32>
    tpu.vector_store %arg6[%c0_12, %c0_13], %15 {strides = array<i32>} : memref<2x128xf32, #tpu.memory_space<vmem>>, vector<2x128xf32>,
    return
  }
  func.func @transform_0(%arg0: i32) -> (i32, i32) {
    %c0_i32 = arith.constant 0 : i32
    %c0_i32_0 = arith.constant 0 : i32
    %c0_i32_1 = arith.constant 0 : i32
    return %c0_i32, %c0_i32_0 : i32, i32
  }
  func.func @transform_1(%arg0: i32) -> (i32, i32) {
    %c0_i32 = arith.constant 0 : i32
    %c0_i32_0 = arith.constant 0 : i32
    %c0_i32_1 = arith.constant 0 : i32
    return %c0_i32, %c0_i32_0 : i32, i32
  }
  func.func @transform_2(%arg0: i32) -> (i32, i32) {
    %c0_i32 = arith.constant 0 : i32
    %c0_i32_0 = arith.constant 0 : i32
    %c0_i32_1 = arith.constant 0 : i32
    return %c0_i32, %c0_i32_0 : i32, i32
  }
  func.func @transform_3(%arg0: i32) -> (i32, i32) {
    %c0_i32 = arith.constant 0 : i32
    %c0_i32_0 = arith.constant 0 : i32
    %c0_i32_1 = arith.constant 0 : i32
    return %c0_i32, %c0_i32_0 : i32, i32
  }
  func.func @transform_4(%arg0: i32) -> (i32, i32) {
    %c0_i32 = arith.constant 0 : i32
    %c0_i32_0 = arith.constant 0 : i32
    %c0_i32_1 = arith.constant 0 : i32
    return %c0_i32, %c0_i32_0 : i32, i32
  }
  func.func @transform_5(%arg0: i32) -> (i32, i32) {
    %c0_i32 = arith.constant 0 : i32
    %c0_i32_0 = arith.constant 0 : i32
    %c0_i32_1 = arith.constant 0 : i32
    return %c0_i32, %c0_i32_0 : i32, i32
  }
}

</mosaic_0001>

<llo_original>
// kernel: custom_cnn_forward.4
$region0: #{custom_cnn_forward.4}
  #allocation0 [shape = 'u32[]', space=smem, size = 0x4, offset = 0x4, fixed_abs, tag = 'smem constant byte address 0x4 - core index']
  #allocation1 [shape = 'u32[144,128]{1,0:T(1,128)}', space=vmem, size = 0x12000, scoped, tag = 'internal scratch']
  %s0 = inlined_call_operand.vmem [shape: bf16[2048,27], index: 0, kind: input, shape index: {}]
  %s1 = inlined_call_operand.vmem [shape: bf16[27,128], index: 1, kind: input, shape index: {}]
  %s2 = inlined_call_operand.vmem [shape: f32[1,128], index: 2, kind: input, shape index: {}]
  %s3 = inlined_call_operand.vmem [shape: bf16[2048,128], index: 3, kind: output, shape index: {}]
  %s4 = sld [smem:[#allocation0]]
  $region45: #{custom_cnn_forward.4} parent=0
    _
  %s6 = ssub.s32 1, %s4
  %s7 = scalar_select 0, %s6, %s4
  loop: start=0, step=1, limit=4
  $region2: #{custom_cnn_forward.4} parent=0 // loop_pre_header
    _
  $region3: #{custom_cnn_forward.4} parent=0 // loop_header
    %s9 = sphi 0, %s13
    %p10 = scmp.ge.s32.totalorder %s9, 4
    %s19 = sphi 0, %s21
    %s22 = sphi 0, %s19
    %s23 = sphi 0, %s22
    %s39 = sphi 0, %s23
    %s43 = sphi 0, %s43
    %s45 = sphi 0, %s43
    %s46 = sphi 0, %s45
    %s60 = sphi 0, %s46
    %s64 = sphi 0, %s64
    %s66 = sphi 0, %s64
    %s67 = sphi 0, %s66
    %s81 = sphi 0, %s67
    %s87 = sphi 0, %s89
    %s90 = sphi 0, %s87
    %s91 = sphi 0, %s90
    %s107 = sphi 0, %s91
  $region4: #{custom_cnn_forward.4} parent=0 // loop_header_branch
    %12 = sbr.rel (%p10) target = $region8
  $region5: #{custom_cnn_forward.4} parent=0 // loop_body
    %s14 = ssub.s32 %s9, 1
    %s15 = ssub.s32 %s9, 2
    %s16 = sadd.s32 %s9, 1
    %s17 = ssub.s32 %s9, %s16
    %p18 = scmp.eq.s32.totalorder %s17, 0
    %s20 = sadd.s32 %s19, 1
    %s21 = scalar_select %p18, %s19, %s20
    %p24 = pneg %p18
    %p25 = scmp.eq.s32.totalorder %s9, 1
    %p26 = por %p24, %p25
    %p27 = scmp.ne.s32.totalorder %s19, %s22
    %p28 = scmp.eq.s32.totalorder %s9, 0
    %p29 = por %p27, %p28
    %p30 = scmp.ne.s32.totalorder %s19, %s22
    %p31 = scmp.eq.s32.totalorder %s14, 1
    %p32 = por %p30, %p31
    %p33 = scmp.ne.s32.totalorder %s22, %s23
    %p34 = scmp.eq.s32.totalorder %s14, 0
    %p35 = por %p33, %p34
    %p36 = scmp.ne.s32.totalorder %s22, %s23
    %p37 = scmp.eq.s32.totalorder %s15, 1
    %p38 = por %p36, %p37
    %p40 = scmp.ne.s32.totalorder %s23, %s39
    %p41 = scmp.eq.s32.totalorder %s15, 0
    %p42 = por %p40, %p41
    %s44 = sadd.s32 %s43, 1
    %p47 = scmp.eq.s32.totalorder %s9, 1
    %p48 = scmp.ne.s32.totalorder %s43, %s45
    %p49 = scmp.eq.s32.totalorder %s9, 0
    %p50 = por %p48, %p49
    %p51 = scmp.ne.s32.totalorder %s43, %s45
    %p52 = scmp.eq.s32.totalorder %s14, 1
    %p53 = por %p51, %p52
    %p54 = scmp.ne.s32.totalorder %s45, %s46
    %p55 = scmp.eq.s32.totalorder %s14, 0
    %p56 = por %p54, %p55
    %p57 = scmp.ne.s32.totalorder %s45, %s46
    %p58 = scmp.eq.s32.totalorder %s15, 1
    %p59 = por %p57, %p58
    %p61 = scmp.ne.s32.totalorder %s46, %s60
    %p62 = scmp.eq.s32.totalorder %s15, 0
    %p63 = por %p61, %p62
    %s65 = sadd.s32 %s64, 1
    %p68 = scmp.eq.s32.totalorder %s9, 1
    %p69 = scmp.ne.s32.totalorder %s64, %s66
    %p70 = scmp.eq.s32.totalorder %s9, 0
    %p71 = por %p69, %p70
    %p72 = scmp.ne.s32.totalorder %s64, %s66
    %p73 = scmp.eq.s32.totalorder %s14, 1
    %p74 = por %p72, %p73
    %p75 = scmp.ne.s32.totalorder %s66, %s67
    %p76 = scmp.eq.s32.totalorder %s14, 0
    %p77 = por %p75, %p76
    %p78 = scmp.ne.s32.totalorder %s66, %s67
    %p79 = scmp.eq.s32.totalorder %s15, 1
    %p80 = por %p78, %p79
    %p82 = scmp.ne.s32.totalorder %s67, %s81
    %p83 = scmp.eq.s32.totalorder %s15, 0
    %p84 = por %p82, %p83
    %s85 = ssub.s32 %s9, %s16
    %p86 = scmp.eq.s32.totalorder %s85, 0
    %s88 = sadd.s32 %s87, 1
    %s89 = scalar_select %p86, %s87, %s88
    %p92 = pneg %p86
    %p93 = scmp.eq.s32.totalorder %s9, 1
    %p94 = por %p92, %p93
    %p95 = scmp.ne.s32.totalorder %s87, %s90
    %p96 = scmp.eq.s32.totalorder %s9, 0
    %p97 = por %p95, %p96
    %p98 = scmp.ne.s32.totalorder %s87, %s90
    %p99 = scmp.eq.s32.totalorder %s14, 1
    %p100 = por %p98, %p99
    %p101 = scmp.ne.s32.totalorder %s90, %s91
    %p102 = scmp.eq.s32.totalorder %s14, 0
    %p103 = por %p101, %p102
    %p104 = scmp.ne.s32.totalorder %s90, %s91
    %p105 = scmp.eq.s32.totalorder %s15, 1
    %p106 = por %p104, %p105
    %p108 = scmp.ne.s32.totalorder %s91, %s107
    %p109 = scmp.eq.s32.totalorder %s15, 0
    %p110 = por %p108, %p109
    %p111 = scmp.le.s32.totalorder 1, %s9
    %p112 = scmp.lt.s32.totalorder %s9, 3
    %p113 = pnand %p111, %p112
    %p114 = pneg %p113
    // Predicated region
    $region9: #{custom_cnn_forward.4} parent=5 // pred_check
      _
    $region10: #{custom_cnn_forward.4} parent=5 // pred_check_branch
      %116 = sbr.rel (%p113) target = $region12
    $region11: #{custom_cnn_forward.4} parent=5 // pred_region
      %s117 = ssub.s32 %s9, 1
      // Predicated region
      $region13: #{custom_cnn_forward.4} parent=11 // pred_check
        %p118 = pneg %p56
      $region14: #{custom_cnn_forward.4} parent=11 // pred_check_branch
        %120 = sbr.rel (%p118) target = $region16
      $region15: #{custom_cnn_forward.4} parent=11 // pred_region
        _
      $region16: #{custom_cnn_forward.4} parent=11 // pred_fallthru
        _
      // Predicated region
      $region17: #{custom_cnn_forward.4} parent=11 // pred_check
        %p121 = pneg %p77
      $region18: #{custom_cnn_forward.4} parent=11 // pred_check_branch
        %123 = sbr.rel (%p121) target = $region20
      $region19: #{custom_cnn_forward.4} parent=11 // pred_region
        _
      $region20: #{custom_cnn_forward.4} parent=11 // pred_fallthru
        _
    $region12: #{custom_cnn_forward.4} parent=5 // pred_fallthru
      _
    %p124 = scmp.lt.s32.totalorder %s9, 2
    // Predicated region
    $region21: #{custom_cnn_forward.4} parent=5 // pred_check
      %p125 = pneg %p124
    $region22: #{custom_cnn_forward.4} parent=5 // pred_check_branch
      %127 = sbr.rel (%p125) target = $region24
    $region23: #{custom_cnn_forward.4} parent=5 // pred_region
      // Predicated region
      $region25: #{custom_cnn_forward.4} parent=23 // pred_check
        %p128 = pneg %p29
      $region26: #{custom_cnn_forward.4} parent=23 // pred_check_branch
        %130 = sbr.rel (%p128) target = $region28
      $region27: #{custom_cnn_forward.4} parent=23 // pred_region
        %s131 = smul.u32 128, %s9
        %p132 = scmp.lt.s32.totalorder %s131, 255
        %s133 = scalar_select %p132, %s131, 255
        %s134 = smul.addr %s133, 4
        %s135 = scalar_lea.vmem %s0, %s134
        %s136 = smul.u32 128, %s9
      $region28: #{custom_cnn_forward.4} parent=23 // pred_fallthru
        _
    $region24: #{custom_cnn_forward.4} parent=5 // pred_fallthru
      _
    %p137 = scmp.le.s32.totalorder 1, %s9
    %p138 = scmp.lt.s32.totalorder %s9, 3
    %p139 = pnand %p137, %p138
    %p140 = pneg %p139
    // Predicated region
    $region29: #{custom_cnn_forward.4} parent=5 // pred_check
      _
    $region30: #{custom_cnn_forward.4} parent=5 // pred_check_branch
      %142 = sbr.rel (%p139) target = $region32
    $region31: #{custom_cnn_forward.4} parent=5 // pred_region
      %s143 = ssub.s32 %s9, 1
      %s144 = smul.u32 128, %s14
      %p145 = scmp.lt.s32.totalorder %s144, 255
      %s146 = scalar_select %p145, %s144, 255
      %s147 = smul.addr %s146, 4
      %s148 = scalar_lea.vmem %s0, %s147
      %p149 = pneg %p35
      %p150 = pneg %p32
      %p151 = pneg %p56
      %p152 = pneg %p53
      %p153 = pneg %p77
      %p154 = pneg %p74
      %p155 = pneg %p103
      %p156 = pneg %p100
      %s157 = smul.u32 128, %s14
      %p158 = scmp.lt.s32.totalorder %s157, 255
      %s159 = scalar_select %p158, %s157, 255
      %s160 = smul.addr %s159, 4
      %s161 = scalar_lea.vmem %s3, %s160
      %s162 = smul.u32 128, %s14
      %p163 = scmp.lt.s32.totalorder %s162, 255
      %s164 = scalar_select %p163, %s162, 255
      %s165 = smul.addr %s164, 4
      %s166 = scalar_lea.vmem %s0, %s165
      %s167 = smul.u32 128, %s14
      %s168 = smul.u32 128, %s14
      %p169 = scmp.lt.s32.totalorder %s168, 255
      %s170 = scalar_select %p169, %s168, 255
      %s171 = smul.addr %s170, 4
      %s172 = scalar_lea.vmem %s3, %s171
      %s173 = smul.u32 128, %s14
      %v175 = vld [vmem:[%s166] sm:$0xf]
      %v176 = vld [vmem:[%s166 + $0x4] sm:$0xf]
      %v177 = vld [vmem:[%s166 + $0x8] sm:$0xf]
      %v178 = vld [vmem:[%s166 + $0xc] sm:$0xf]
      %v179 = vld [vmem:[%s166 + $0x10] sm:$0xf]
      %v180 = vld [vmem:[%s166 + $0x14] sm:$0xf]
      %v181 = vld [vmem:[%s166 + $0x18] sm:$0xf]
      %v182 = vld [vmem:[%s166 + $0x1c] sm:$0xf]
      %v183 = vld [vmem:[%s166 + $0x20] sm:$0xf]
      %v184 = vld [vmem:[%s166 + $0x24] sm:$0xf]
      %v185 = vld [vmem:[%s166 + $0x28] sm:$0xf]
      %v186 = vld [vmem:[%s166 + $0x2c] sm:$0xf]
      %v187 = vld [vmem:[%s166 + $0x30] sm:$0xf]
      %v188 = vld [vmem:[%s166 + $0x34] sm:$0xf]
      %v189 = vld [vmem:[%s166 + $0x38] sm:$0xf]
      %v190 = vld [vmem:[%s166 + $0x3c] sm:$0xf]
      %v191 = vld [vmem:[%s166 + $0x40] sm:$0xf]
      %v192 = vld [vmem:[%s166 + $0x44] sm:$0xf]
      %v193 = vld [vmem:[%s166 + $0x48] sm:$0xf]
      %v194 = vld [vmem:[%s166 + $0x4c] sm:$0xf]
      %v195 = vld [vmem:[%s166 + $0x50] sm:$0xf]
      %v196 = vld [vmem:[%s166 + $0x54] sm:$0xf]
      %v197 = vld [vmem:[%s166 + $0x58] sm:$0xf]
      %v198 = vld [vmem:[%s166 + $0x5c] sm:$0xf]
      %v199 = vld [vmem:[%s166 + $0x60] sm:$0xf]
      %v200 = vld [vmem:[%s166 + $0x64] sm:$0xf]
      %v201 = vld [vmem:[%s166 + $0x68] sm:$0xf]
      %v202 = vld [vmem:[%s166 + $0x6c] sm:$0xf]
      %v203 = vld [vmem:[%s166 + $0x70] sm:$0xf]
      %v204 = vld [vmem:[%s166 + $0x74] sm:$0xf]
      %v205 = vld [vmem:[%s166 + $0x78] sm:$0xf]
      %v206 = vld [vmem:[%s166 + $0x7c] sm:$0xf]
      %v207 = vld [vmem:[%s166 + $0x80] sm:$0xf]
      %v208 = vld [vmem:[%s166 + $0x84] sm:$0xf]
      %v209 = vld [vmem:[%s166 + $0x88] sm:$0xf]
      %v210 = vld [vmem:[%s166 + $0x8c] sm:$0xf]
      %v211 = vld [vmem:[%s166 + $0x90] sm:$0xf]
      %v212 = vld [vmem:[%s166 + $0x94] sm:$0xf]
      %v213 = vld [vmem:[%s166 + $0x98] sm:$0xf]
      %v214 = vld [vmem:[%s166 + $0x9c] sm:$0xf]
      %v215 = vld [vmem:[%s166 + $0xa0] sm:$0xf]
      %v216 = vld [vmem:[%s166 + $0xa4] sm:$0xf]
      %v217 = vld [vmem:[%s166 + $0xa8] sm:$0xf]
      %v218 = vld [vmem:[%s166 + $0xac] sm:$0xf]
      %v219 = vld [vmem:[%s166 + $0xb0] sm:$0xf]
      %v220 = vld [vmem:[%s166 + $0xb4] sm:$0xf]
      %v221 = vld [vmem:[%s166 + $0xb8] sm:$0xf]
      %v222 = vld [vmem:[%s166 + $0xbc] sm:$0xf]
      %v223 = vld [vmem:[%s166 + $0xc0] sm:$0xf]
      %v224 = vld [vmem:[%s166 + $0xc4] sm:$0xf]
      %v225 = vld [vmem:[%s166 + $0xc8] sm:$0xf]
      %v226 = vld [vmem:[%s166 + $0xcc] sm:$0xf]
      %v227 = vld [vmem:[%s166 + $0xd0] sm:$0xf]
      %v228 = vld [vmem:[%s166 + $0xd4] sm:$0xf]
      %v229 = vld [vmem:[%s166 + $0xd8] sm:$0xf]
      %v230 = vld [vmem:[%s166 + $0xdc] sm:$0xf]
      %v231 = vld [vmem:[%s166 + $0xe0] sm:$0xf]
      %v232 = vld [vmem:[%s166 + $0xe4] sm:$0xf]
      %v233 = vld [vmem:[%s166 + $0xe8] sm:$0xf]
      %v234 = vld [vmem:[%s166 + $0xec] sm:$0xf]
      %v235 = vld [vmem:[%s166 + $0xf0] sm:$0xf]
      %v236 = vld [vmem:[%s166 + $0xf4] sm:$0xf]
      %v237 = vld [vmem:[%s166 + $0xf8] sm:$0xf]
      %v238 = vld [vmem:[%s166 + $0xfc] sm:$0xf]
      %v239 = vld [vmem:[%s166 + $0x100] sm:$0xf]
      %v240 = vld [vmem:[%s166 + $0x104] sm:$0xf]
      %v241 = vld [vmem:[%s166 + $0x108] sm:$0xf]
      %v242 = vld [vmem:[%s166 + $0x10c] sm:$0xf]
      %v243 = vld [vmem:[%s166 + $0x110] sm:$0xf]
      %v244 = vld [vmem:[%s166 + $0x114] sm:$0xf]
      %v245 = vld [vmem:[%s166 + $0x118] sm:$0xf]
      %v246 = vld [vmem:[%s166 + $0x11c] sm:$0xf]
      %v247 = vld [vmem:[%s166 + $0x120] sm:$0xf]
      %v248 = vld [vmem:[%s166 + $0x124] sm:$0xf]
      %v249 = vld [vmem:[%s166 + $0x128] sm:$0xf]
      %v250 = vld [vmem:[%s166 + $0x12c] sm:$0xf]
      %v251 = vld [vmem:[%s166 + $0x130] sm:$0xf]
      %v252 = vld [vmem:[%s166 + $0x134] sm:$0xf]
      %v253 = vld [vmem:[%s166 + $0x138] sm:$0xf]
      %v254 = vld [vmem:[%s166 + $0x13c] sm:$0xf]
      %v255 = vld [vmem:[%s166 + $0x140] sm:$0xf]
      %v256 = vld [vmem:[%s166 + $0x144] sm:$0xf]
      %v257 = vld [vmem:[%s166 + $0x148] sm:$0xf]
      %v258 = vld [vmem:[%s166 + $0x14c] sm:$0xf]
      %v259 = vld [vmem:[%s166 + $0x150] sm:$0xf]
      %v260 = vld [vmem:[%s166 + $0x154] sm:$0xf]
      %v261 = vld [vmem:[%s166 + $0x158] sm:$0xf]
      %v262 = vld [vmem:[%s166 + $0x15c] sm:$0xf]
      %v263 = vld [vmem:[%s166 + $0x160] sm:$0xf]
      %v264 = vld [vmem:[%s166 + $0x164] sm:$0xf]
      %v265 = vld [vmem:[%s166 + $0x168] sm:$0xf]
      %v266 = vld [vmem:[%s166 + $0x16c] sm:$0xf]
      %v267 = vld [vmem:[%s166 + $0x170] sm:$0xf]
      %v268 = vld [vmem:[%s166 + $0x174] sm:$0xf]
      %v269 = vld [vmem:[%s166 + $0x178] sm:$0xf]
      %v270 = vld [vmem:[%s166 + $0x17c] sm:$0xf]
      %v271 = vld [vmem:[%s166 + $0x180] sm:$0xf]
      %v272 = vld [vmem:[%s166 + $0x184] sm:$0xf]
      %v273 = vld [vmem:[%s166 + $0x188] sm:$0xf]
      %v274 = vld [vmem:[%s166 + $0x18c] sm:$0xf]
      %v275 = vld [vmem:[%s166 + $0x190] sm:$0xf]
      %v276 = vld [vmem:[%s166 + $0x194] sm:$0xf]
      %v277 = vld [vmem:[%s166 + $0x198] sm:$0xf]
      %v278 = vld [vmem:[%s166 + $0x19c] sm:$0xf]
      %v279 = vld [vmem:[%s166 + $0x1a0] sm:$0xf]
      %v280 = vld [vmem:[%s166 + $0x1a4] sm:$0xf]
      %v281 = vld [vmem:[%s166 + $0x1a8] sm:$0xf]
      %v282 = vld [vmem:[%s166 + $0x1ac] sm:$0xf]
      %v283 = vld [vmem:[%s166 + $0x1b0] sm:$0xf]
      %v284 = vld [vmem:[%s166 + $0x1b4] sm:$0xf]
      %v285 = vld [vmem:[%s166 + $0x1b8] sm:$0xf]
      %v286 = vld [vmem:[%s166 + $0x1bc] sm:$0xf]
      %v287 = vld [vmem:[%s166 + $0x1c0] sm:$0xf]
      %v288 = vld [vmem:[%s166 + $0x1c4] sm:$0xf]
      %v289 = vld [vmem:[%s166 + $0x1c8] sm:$0xf]
      %v290 = vld [vmem:[%s166 + $0x1cc] sm:$0xf]
      %v291 = vld [vmem:[%s166 + $0x1d0] sm:$0xf]
      %v292 = vld [vmem:[%s166 + $0x1d4] sm:$0xf]
      %v293 = vld [vmem:[%s166 + $0x1d8] sm:$0xf]
      %v294 = vld [vmem:[%s166 + $0x1dc] sm:$0xf]
      %v295 = vld [vmem:[%s166 + $0x1e0] sm:$0xf]
      %v296 = vld [vmem:[%s166 + $0x1e4] sm:$0xf]
      %v297 = vld [vmem:[%s166 + $0x1e8] sm:$0xf]
      %v298 = vld [vmem:[%s166 + $0x1ec] sm:$0xf]
      %v299 = vld [vmem:[%s166 + $0x1f0] sm:$0xf]
      %v300 = vld [vmem:[%s166 + $0x1f4] sm:$0xf]
      %v301 = vld [vmem:[%s166 + $0x1f8] sm:$0xf]
      %v302 = vld [vmem:[%s166 + $0x1fc] sm:$0xf]
      %v303 = vld [vmem:[%s1] sm:$0xf]
      %v304 = vld [vmem:[%s1 + $0x4] sm:$0xf]
      %v305 = vld [vmem:[%s1 + $0x8] sm:$0xf]
      %v306 = vld [vmem:[%s1 + $0xc] sm:$0x3]
      %v307 = vld [vmem:[%s2] sm:$0x1]
      %v309 = vlaneseq
      %v310 = vshrl.u32 %v309, 7
      %v311 = vsub.s32 0, %v310
      %v312 = vrot.slane %v307, %v311
      %v442 = vunpack.c.l.b16 %v175
      %v443 = vunpack.c.l.b16 %v176
      %v444 = vunpack.c.l.b16 %v177
      %v445 = vunpack.c.l.b16 %v178
      %v446 = vunpack.c.l.b16 %v179
      %v447 = vunpack.c.l.b16 %v180
      %v448 = vunpack.c.l.b16 %v181
      %v449 = vunpack.c.l.b16 %v182
      %v450 = vunpack.c.l.b16 %v183
      %v451 = vunpack.c.l.b16 %v184
      %v452 = vunpack.c.l.b16 %v185
      %v453 = vunpack.c.l.b16 %v186
      %v454 = vunpack.c.l.b16 %v187
      %v455 = vunpack.c.l.b16 %v188
      %v456 = vunpack.c.l.b16 %v189
      %v457 = vunpack.c.l.b16 %v190
      %v458 = vunpack.c.l.b16 %v191
      %v459 = vunpack.c.l.b16 %v192
      %v460 = vunpack.c.l.b16 %v193
      %v461 = vunpack.c.l.b16 %v194
      %v462 = vunpack.c.l.b16 %v195
      %v463 = vunpack.c.l.b16 %v196
      %v464 = vunpack.c.l.b16 %v197
      %v465 = vunpack.c.l.b16 %v198
      %v466 = vunpack.c.l.b16 %v199
      %v467 = vunpack.c.l.b16 %v200
      %v468 = vunpack.c.l.b16 %v201
      %v469 = vunpack.c.l.b16 %v202
      %v470 = vunpack.c.l.b16 %v203
      %v471 = vunpack.c.l.b16 %v204
      %v472 = vunpack.c.l.b16 %v205
      %v473 = vunpack.c.l.b16 %v206
      %v474 = vunpack.c.l.b16 %v207
      %v475 = vunpack.c.l.b16 %v208
      %v476 = vunpack.c.l.b16 %v209
      %v477 = vunpack.c.l.b16 %v210
      %v478 = vunpack.c.l.b16 %v211
      %v479 = vunpack.c.l.b16 %v212
      %v480 = vunpack.c.l.b16 %v213
      %v481 = vunpack.c.l.b16 %v214
      %v482 = vunpack.c.l.b16 %v215
      %v483 = vunpack.c.l.b16 %v216
      %v484 = vunpack.c.l.b16 %v217
      %v485 = vunpack.c.l.b16 %v218
      %v486 = vunpack.c.l.b16 %v219
      %v487 = vunpack.c.l.b16 %v220
      %v488 = vunpack.c.l.b16 %v221
      %v489 = vunpack.c.l.b16 %v222
      %v490 = vunpack.c.l.b16 %v223
      %v491 = vunpack.c.l.b16 %v224
      %v492 = vunpack.c.l.b16 %v225
      %v493 = vunpack.c.l.b16 %v226
      %v494 = vunpack.c.l.b16 %v227
      %v495 = vunpack.c.l.b16 %v228
      %v496 = vunpack.c.l.b16 %v229
      %v497 = vunpack.c.l.b16 %v230
      %v498 = vunpack.c.l.b16 %v231
      %v499 = vunpack.c.l.b16 %v232
      %v500 = vunpack.c.l.b16 %v233
      %v501 = vunpack.c.l.b16 %v234
      %v502 = vunpack.c.l.b16 %v235
      %v503 = vunpack.c.l.b16 %v236
      %v504 = vunpack.c.l.b16 %v237
      %v505 = vunpack.c.l.b16 %v238
      %v506 = vunpack.c.l.b16 %v239
      %v507 = vunpack.c.l.b16 %v240
      %v508 = vunpack.c.l.b16 %v241
      %v509 = vunpack.c.l.b16 %v242
      %v510 = vunpack.c.l.b16 %v243
      %v511 = vunpack.c.l.b16 %v244
      %v512 = vunpack.c.l.b16 %v245
      %v513 = vunpack.c.l.b16 %v246
      %v514 = vunpack.c.l.b16 %v247
      %v515 = vunpack.c.l.b16 %v248
      %v516 = vunpack.c.l.b16 %v249
      %v517 = vunpack.c.l.b16 %v250
      %v518 = vunpack.c.l.b16 %v251
      %v519 = vunpack.c.l.b16 %v252
      %v520 = vunpack.c.l.b16 %v253
      %v521 = vunpack.c.l.b16 %v254
      %v522 = vunpack.c.l.b16 %v255
      %v523 = vunpack.c.l.b16 %v256
      %v524 = vunpack.c.l.b16 %v257
      %v525 = vunpack.c.l.b16 %v258
      %v526 = vunpack.c.l.b16 %v259
      %v527 = vunpack.c.l.b16 %v260
      %v528 = vunpack.c.l.b16 %v261
      %v529 = vunpack.c.l.b16 %v262
      %v530 = vunpack.c.l.b16 %v263
      %v531 = vunpack.c.l.b16 %v264
      %v532 = vunpack.c.l.b16 %v265
      %v533 = vunpack.c.l.b16 %v266
      %v534 = vunpack.c.l.b16 %v267
      %v535 = vunpack.c.l.b16 %v268
      %v536 = vunpack.c.l.b16 %v269
      %v537 = vunpack.c.l.b16 %v270
      %v538 = vunpack.c.l.b16 %v271
      %v539 = vunpack.c.l.b16 %v272
      %v540 = vunpack.c.l.b16 %v273
      %v541 = vunpack.c.l.b16 %v274
      %v542 = vunpack.c.l.b16 %v275
      %v543 = vunpack.c.l.b16 %v276
      %v544 = vunpack.c.l.b16 %v277
      %v545 = vunpack.c.l.b16 %v278
      %v546 = vunpack.c.l.b16 %v279
      %v547 = vunpack.c.l.b16 %v280
      %v548 = vunpack.c.l.b16 %v281
      %v549 = vunpack.c.l.b16 %v282
      %v550 = vunpack.c.l.b16 %v283
      %v551 = vunpack.c.l.b16 %v284
      %v552 = vunpack.c.l.b16 %v285
      %v553 = vunpack.c.l.b16 %v286
      %v554 = vunpack.c.l.b16 %v287
      %v555 = vunpack.c.l.b16 %v288
      %v556 = vunpack.c.l.b16 %v289
      %v557 = vunpack.c.l.b16 %v290
      %v558 = vunpack.c.l.b16 %v291
      %v559 = vunpack.c.l.b16 %v292
      %v560 = vunpack.c.l.b16 %v293
      %v561 = vunpack.c.l.b16 %v294
      %v562 = vunpack.c.l.b16 %v295
      %v563 = vunpack.c.l.b16 %v296
      %v564 = vunpack.c.l.b16 %v297
      %v565 = vunpack.c.l.b16 %v298
      %v566 = vunpack.c.l.b16 %v299
      %v567 = vunpack.c.l.b16 %v300
      %v568 = vunpack.c.l.b16 %v301
      %v569 = vunpack.c.l.b16 %v302
      %v570 = vpack.c.b16 %v443, %v442
      %v571 = vpack.c.b16 %v445, %v444
      %v572 = vpack.c.b16 %v447, %v446
      %v573 = vpack.c.b16 %v449, %v448
      %v574 = vpack.c.b16 %v451, %v450
      %v575 = vpack.c.b16 %v453, %v452
      %v576 = vpack.c.b16 %v455, %v454
      %v577 = vpack.c.b16 %v457, %v456
      %v578 = vpack.c.b16 %v459, %v458
      %v579 = vpack.c.b16 %v461, %v460
      %v580 = vpack.c.b16 %v463, %v462
      %v581 = vpack.c.b16 %v465, %v464
      %v582 = vpack.c.b16 %v467, %v466
      %v583 = vpack.c.b16 %v469, %v468
      %v584 = vpack.c.b16 %v471, %v470
      %v585 = vpack.c.b16 %v473, %v472
      %v586 = vpack.c.b16 %v475, %v474
      %v587 = vpack.c.b16 %v477, %v476
      %v588 = vpack.c.b16 %v479, %v478
      %v589 = vpack.c.b16 %v481, %v480
      %v590 = vpack.c.b16 %v483, %v482
      %v591 = vpack.c.b16 %v485, %v484
      %v592 = vpack.c.b16 %v487, %v486
      %v593 = vpack.c.b16 %v489, %v488
      %v594 = vpack.c.b16 %v491, %v490
      %v595 = vpack.c.b16 %v493, %v492
      %v596 = vpack.c.b16 %v495, %v494
      %v597 = vpack.c.b16 %v497, %v496
      %v598 = vpack.c.b16 %v499, %v498
      %v599 = vpack.c.b16 %v501, %v500
      %v600 = vpack.c.b16 %v503, %v502
      %v601 = vpack.c.b16 %v505, %v504
      %v602 = vpack.c.b16 %v507, %v506
      %v603 = vpack.c.b16 %v509, %v508
      %v604 = vpack.c.b16 %v511, %v510
      %v605 = vpack.c.b16 %v513, %v512
      %v606 = vpack.c.b16 %v515, %v514
      %v607 = vpack.c.b16 %v517, %v516
      %v608 = vpack.c.b16 %v519, %v518
      %v609 = vpack.c.b16 %v521, %v520
      %v610 = vpack.c.b16 %v523, %v522
      %v611 = vpack.c.b16 %v525, %v524
      %v612 = vpack.c.b16 %v527, %v526
      %v613 = vpack.c.b16 %v529, %v528
      %v614 = vpack.c.b16 %v531, %v530
      %v615 = vpack.c.b16 %v533, %v532
      %v616 = vpack.c.b16 %v535, %v534
      %v617 = vpack.c.b16 %v537, %v536
      %v618 = vpack.c.b16 %v539, %v538
      %v619 = vpack.c.b16 %v541, %v540
      %v620 = vpack.c.b16 %v543, %v542
      %v621 = vpack.c.b16 %v545, %v544
      %v622 = vpack.c.b16 %v547, %v546
      %v623 = vpack.c.b16 %v549, %v548
      %v624 = vpack.c.b16 %v551, %v550
      %v625 = vpack.c.b16 %v553, %v552
      %v626 = vpack.c.b16 %v555, %v554
      %v627 = vpack.c.b16 %v557, %v556
      %v628 = vpack.c.b16 %v559, %v558
      %v629 = vpack.c.b16 %v561, %v560
      %v630 = vpack.c.b16 %v563, %v562
      %v631 = vpack.c.b16 %v565, %v564
      %v632 = vpack.c.b16 %v567, %v566
      %v633 = vpack.c.b16 %v569, %v568
      %v638 = vunpack.c.l.b16 %v303
      %v639 = vunpack.c.l.b16 %v304
      %v640 = vunpack.c.l.b16 %v305
      %v641 = vunpack.c.l.b16 %v306
      %v642 = vpack.c.b16 %v639, %v638
      %v643 = vpack.c.b16 %v641, %v640
      %vm645 = vcmask 220160
      %v647 = vsel %vm645, %v570, 0
      %v650 = vsel %vm645, %v571, 0
      %v653 = vsel %vm645, %v572, 0
      %v656 = vsel %vm645, %v573, 0
      %v659 = vsel %vm645, %v574, 0
      %v662 = vsel %vm645, %v575, 0
      %v665 = vsel %vm645, %v576, 0
      %v668 = vsel %vm645, %v577, 0
      %v671 = vsel %vm645, %v578, 0
      %v674 = vsel %vm645, %v579, 0
      %v677 = vsel %vm645, %v580, 0
      %v680 = vsel %vm645, %v581, 0
      %v683 = vsel %vm645, %v582, 0
      %v686 = vsel %vm645, %v583, 0
      %v689 = vsel %vm645, %v584, 0
      %v692 = vsel %vm645, %v585, 0
      %v695 = vsel %vm645, %v586, 0
      %v698 = vsel %vm645, %v587, 0
      %v701 = vsel %vm645, %v588, 0
      %v704 = vsel %vm645, %v589, 0
      %v707 = vsel %vm645, %v590, 0
      %v710 = vsel %vm645, %v591, 0
      %v713 = vsel %vm645, %v592, 0
      %v716 = vsel %vm645, %v593, 0
      %v719 = vsel %vm645, %v594, 0
      %v722 = vsel %vm645, %v595, 0
      %v725 = vsel %vm645, %v596, 0
      %v728 = vsel %vm645, %v597, 0
      %v731 = vsel %vm645, %v598, 0
      %v734 = vsel %vm645, %v599, 0
      %v737 = vsel %vm645, %v600, 0
      %v740 = vsel %vm645, %v601, 0
      %v743 = vsel %vm645, %v602, 0
      %v746 = vsel %vm645, %v603, 0
      %v749 = vsel %vm645, %v604, 0
      %v752 = vsel %vm645, %v605, 0
      %v755 = vsel %vm645, %v606, 0
      %v758 = vsel %vm645, %v607, 0
      %v761 = vsel %vm645, %v608, 0
      %v764 = vsel %vm645, %v609, 0
      %v767 = vsel %vm645, %v610, 0
      %v770 = vsel %vm645, %v611, 0
      %v773 = vsel %vm645, %v612, 0
      %v776 = vsel %vm645, %v613, 0
      %v779 = vsel %vm645, %v614, 0
      %v782 = vsel %vm645, %v615, 0
      %v785 = vsel %vm645, %v616, 0
      %v788 = vsel %vm645, %v617, 0
      %v791 = vsel %vm645, %v618, 0
      %v794 = vsel %vm645, %v619, 0
      %v797 = vsel %vm645, %v620, 0
      %v800 = vsel %vm645, %v621, 0
      %v803 = vsel %vm645, %v622, 0
      %v806 = vsel %vm645, %v623, 0
      %v809 = vsel %vm645, %v624, 0
      %v812 = vsel %vm645, %v625, 0
      %v815 = vsel %vm645, %v626, 0
      %v818 = vsel %vm645, %v627, 0
      %v821 = vsel %vm645, %v628, 0
      %v824 = vsel %vm645, %v629, 0
      %v827 = vsel %vm645, %v630, 0
      %v830 = vsel %vm645, %v631, 0
      %v833 = vsel %vm645, %v632, 0
      %v836 = vsel %vm645, %v633, 0
      %vm838 = vcmask 1044480
      %vm839 = vcmask 1045504
      %v840 = vsel %vm838, 4294967295, 65535
      %v841 = vsel %vm839, %v840, 0
      %v843 = vand.u32 %v643, %v841
      %845 = vmatprep.subr.bf16.mxu0 0
      %846 = vmatpush1.bf16.msra.mxu0 %v642
      %847 = vmatprep.subr.bf16.mxu0 0
      %848 = vmatpush1.bf16.msra.mxu0 %v843
      %849 = vmatprep.subr.bf16.mxu0 0
      %850 = vmatpush1.bf16.msra.mxu0 0
      %851 = vmatprep.subr.bf16.mxu0 0
      %852 = vmatpush1.bf16.msra.mxu0 0
      %853 = vmatprep.subr.bf16.mxu0 0
      %854 = vmatpush1.bf16.msra.mxu0 0
      %855 = vmatprep.subr.bf16.mxu0 0
      %856 = vmatpush1.bf16.msra.mxu0 0
      %857 = vmatprep.subr.bf16.mxu0 0
      %858 = vmatpush1.bf16.msra.mxu0 0
      %859 = vmatprep.subr.bf16.mxu0 0
      %860 = vmatpush1.bf16.msra.mxu0 0
      %861 = vmatprep.subr.bf16.mxu0 0
      %862 = vmatpush1.bf16.msra.mxu0 0
      %863 = vmatprep.subr.bf16.mxu0 0
      %864 = vmatpush1.bf16.msra.mxu0 0
      %865 = vmatprep.subr.bf16.mxu0 0
      %866 = vmatpush1.bf16.msra.mxu0 0
      %867 = vmatprep.subr.bf16.mxu0 0
      %868 = vmatpush1.bf16.msra.mxu0 0
      %869 = vmatprep.subr.bf16.mxu0 0
      %870 = vmatpush1.bf16.msra.mxu0 0
      %871 = vmatprep.subr.bf16.mxu0 0
      %872 = vmatpush1.bf16.msra.mxu0 0
      %873 = vmatprep.subr.bf16.mxu0 0
      %874 = vmatpush1.bf16.msra.mxu0 0
      %875 = vmatprep.subr.bf16.mxu0 0
      %876 = vmatpush1.bf16.msra.mxu0 0
      %877 = vmatprep.mubr.bf16.mxu0 0
      %878 = vmatmul.mubr.bf16.gmra.mrb[0].mxu0 %v647
      %v879 = vpop.f32.mrb[0].mxu0
      %v880 = vadd.f32 %v312, %v879
      %v881 = vpop.f32.mrb[0].mxu0
      %v882 = vpop.f32.mrb[0].mxu0
      %v883 = vadd.f32 %v312, %v882
      %v884 = vpop.f32.mrb[0].mxu0
      %885 = vmatprep.mubr.bf16.mxu0 0
      %886 = vmatmul.mubr.bf16.gmra.mrb[0].mxu0 %v650
      %v887 = vpop.f32.mrb[0].mxu0
      %v888 = vadd.f32 %v312, %v887
      %v889 = vpop.f32.mrb[0].mxu0
      %v890 = vpop.f32.mrb[0].mxu0
      %v891 = vadd.f32 %v312, %v890
      %v892 = vpop.f32.mrb[0].mxu0
      %893 = vmatprep.mubr.bf16.mxu0 0
      %894 = vmatmul.mubr.bf16.gmra.mrb[0].mxu0 %v653
      %v895 = vpop.f32.mrb[0].mxu0
      %v896 = vadd.f32 %v312, %v895
      %v897 = vpop.f32.mrb[0].mxu0
      %v898 = vpop.f32.mrb[0].mxu0
      %v899 = vadd.f32 %v312, %v898
      %v900 = vpop.f32.mrb[0].mxu0
      %901 = vmatprep.mubr.bf16.mxu0 0
      %902 = vmatmul.mubr.bf16.gmra.mrb[0].mxu0 %v656
      %v903 = vpop.f32.mrb[0].mxu0
      %v904 = vadd.f32 %v312, %v903
      %v905 = vpop.f32.mrb[0].mxu0
      %v906 = vpop.f32.mrb[0].mxu0
      %v907 = vadd.f32 %v312, %v906
      %v908 = vpop.f32.mrb[0].mxu0
      %909 = vmatprep.mubr.bf16.mxu0 0
      %910 = vmatmul.mubr.bf16.gmra.mrb[0].mxu0 %v659
      %v911 = vpop.f32.mrb[0].mxu0
      %v912 = vadd.f32 %v312, %v911
      %v913 = vpop.f32.mrb[0].mxu0
      %v914 = vpop.f32.mrb[0].mxu0
      %v915 = vadd.f32 %v312, %v914
      %v916 = vpop.f32.mrb[0].mxu0
      %917 = vmatprep.mubr.bf16.mxu0 0
      %918 = vmatmul.mubr.bf16.gmra.mrb[0].mxu0 %v662
      %v919 = vpop.f32.mrb[0].mxu0
      %v920 = vadd.f32 %v312, %v919
      %v921 = vpop.f32.mrb[0].mxu0
      %v922 = vpop.f32.mrb[0].mxu0
      %v923 = vadd.f32 %v312, %v922
      %v924 = vpop.f32.mrb[0].mxu0
      %925 = vmatprep.mubr.bf16.mxu0 0
      %926 = vmatmul.mubr.bf16.gmra.mrb[0].mxu0 %v665
      %v927 = vpop.f32.mrb[0].mxu0
      %v928 = vadd.f32 %v312, %v927
      %v929 = vpop.f32.mrb[0].mxu0
      %v930 = vpop.f32.mrb[0].mxu0
      %v931 = vadd.f32 %v312, %v930
      %v932 = vpop.f32.mrb[0].mxu0
      %933 = vmatprep.mubr.bf16.mxu0 0
      %934 = vmatmul.mubr.bf16.gmra.mrb[0].mxu0 %v668
      %v935 = vpop.f32.mrb[0].mxu0
      %v936 = vadd.f32 %v312, %v935
      %v937 = vpop.f32.mrb[0].mxu0
      %v938 = vpop.f32.mrb[0].mxu0
      %v939 = vadd.f32 %v312, %v938
      %v940 = vpop.f32.mrb[0].mxu0
      %941 = vmatprep.mubr.bf16.mxu0 0
      %942 = vmatmul.mubr.bf16.gmra.mrb[0].mxu0 %v671
      %v943 = vpop.f32.mrb[0].mxu0
      %v944 = vadd.f32 %v312, %v943
      %v945 = vpop.f32.mrb[0].mxu0
      %v946 = vpop.f32.mrb[0].mxu0
      %v947 = vadd.f32 %v312, %v946
      %v948 = vpop.f32.mrb[0].mxu0
      %949 = vmatprep.mubr.bf16.mxu0 0
      %950 = vmatmul.mubr.bf16.gmra.mrb[0].mxu0 %v674
      %v951 = vpop.f32.mrb[0].mxu0
      %v952 = vadd.f32 %v312, %v951
      %v953 = vpop.f32.mrb[0].mxu0
      %v954 = vpop.f32.mrb[0].mxu0
      %v955 = vadd.f32 %v312, %v954
      %v956 = vpop.f32.mrb[0].mxu0
      %957 = vmatprep.mubr.bf16.mxu0 0
      %958 = vmatmul.mubr.bf16.gmra.mrb[0].mxu0 %v677
      %v959 = vpop.f32.mrb[0].mxu0
      %v960 = vadd.f32 %v312, %v959
      %v961 = vpop.f32.mrb[0].mxu0
      %v962 = vpop.f32.mrb[0].mxu0
      %v963 = vadd.f32 %v312, %v962
      %v964 = vpop.f32.mrb[0].mxu0
      %965 = vmatprep.mubr.bf16.mxu0 0
      %966 = vmatmul.mubr.bf16.gmra.mrb[0].mxu0 %v680
      %v967 = vpop.f32.mrb[0].mxu0
      %v968 = vadd.f32 %v312, %v967
      %v969 = vpop.f32.mrb[0].mxu0
      %v970 = vpop.f32.mrb[0].mxu0
      %v971 = vadd.f32 %v312, %v970
      %v972 = vpop.f32.mrb[0].mxu0
      %973 = vmatprep.mubr.bf16.mxu0 0
      %974 = vmatmul.mubr.bf16.gmra.mrb[0].mxu0 %v683
      %v975 = vpop.f32.mrb[0].mxu0
      %v976 = vadd.f32 %v312, %v975
      %v977 = vpop.f32.mrb[0].mxu0
      %v978 = vpop.f32.mrb[0].mxu0
      %v979 = vadd.f32 %v312, %v978
      %v980 = vpop.f32.mrb[0].mxu0
      %981 = vmatprep.mubr.bf16.mxu0 0
      %982 = vmatmul.mubr.bf16.gmra.mrb[0].mxu0 %v686
      %v983 = vpop.f32.mrb[0].mxu0
      %v984 = vadd.f32 %v312, %v983
      %v985 = vpop.f32.mrb[0].mxu0
      %v986 = vpop.f32.mrb[0].mxu0
      %v987 = vadd.f32 %v312, %v986
      %v988 = vpop.f32.mrb[0].mxu0
      %989 = vmatprep.mubr.bf16.mxu0 0
      %990 = vmatmul.mubr.bf16.gmra.mrb[0].mxu0 %v689
      %v991 = vpop.f32.mrb[0].mxu0
      %v992 = vadd.f32 %v312, %v991
      %v993 = vpop.f32.mrb[0].mxu0
      %v994 = vpop.f32.mrb[0].mxu0
      %v995 = vadd.f32 %v312, %v994
      %v996 = vpop.f32.mrb[0].mxu0
      %997 = vmatprep.mubr.bf16.mxu0 0
      %998 = vmatmul.mubr.bf16.gmra.mrb[0].mxu0 %v692
      %v999 = vpop.f32.mrb[0].mxu0
      %v1000 = vadd.f32 %v312, %v999
      %v1001 = vpop.f32.mrb[0].mxu0
      %v1002 = vpop.f32.mrb[0].mxu0
      %v1003 = vadd.f32 %v312, %v1002
      %v1004 = vpop.f32.mrb[0].mxu0
      %1005 = vmatprep.mubr.bf16.mxu0 0
      %1006 = vmatmul.mubr.bf16.gmra.mrb[0].mxu0 %v695
      %v1007 = vpop.f32.mrb[0].mxu0
      %v1008 = vadd.f32 %v312, %v1007
      %v1009 = vpop.f32.mrb[0].mxu0
      %v1010 = vpop.f32.mrb[0].mxu0
      %v1011 = vadd.f32 %v312, %v1010
      %v1012 = vpop.f32.mrb[0].mxu0
      %1013 = vmatprep.mubr.bf16.mxu0 0
      %1014 = vmatmul.mubr.bf16.gmra.mrb[0].mxu0 %v698
      %v1015 = vpop.f32.mrb[0].mxu0
      %v1016 = vadd.f32 %v312, %v1015
      %v1017 = vpop.f32.mrb[0].mxu0
      %v1018 = vpop.f32.mrb[0].mxu0
      %v1019 = vadd.f32 %v312, %v1018
      %v1020 = vpop.f32.mrb[0].mxu0
      %1021 = vmatprep.mubr.bf16.mxu0 0
      %1022 = vmatmul.mubr.bf16.gmra.mrb[0].mxu0 %v701
      %v1023 = vpop.f32.mrb[0].mxu0
      %v1024 = vadd.f32 %v312, %v1023
      %v1025 = vpop.f32.mrb[0].mxu0
      %v1026 = vpop.f32.mrb[0].mxu0
      %v1027 = vadd.f32 %v312, %v1026
      %v1028 = vpop.f32.mrb[0].mxu0
      %1029 = vmatprep.mubr.bf16.mxu0 0
      %1030 = vmatmul.mubr.bf16.gmra.mrb[0].mxu0 %v704
      %v1031 = vpop.f32.mrb[0].mxu0
      %v1032 = vadd.f32 %v312, %v1031
      %v1033 = vpop.f32.mrb[0].mxu0
      %v1034 = vpop.f32.mrb[0].mxu0
      %v1035 = vadd.f32 %v312, %v1034
      %v1036 = vpop.f32.mrb[0].mxu0
      %1037 = vmatprep.mubr.bf16.mxu0 0
      %1038 = vmatmul.mubr.bf16.gmra.mrb[0].mxu0 %v707
      %v1039 = vpop.f32.mrb[0].mxu0
      %v1040 = vadd.f32 %v312, %v1039
      %v1041 = vpop.f32.mrb[0].mxu0
      %v1042 = vpop.f32.mrb[0].mxu0
      %v1043 = vadd.f32 %v312, %v1042
      %v1044 = vpop.f32.mrb[0].mxu0
      %1045 = vmatprep.mubr.bf16.mxu0 0
      %1046 = vmatmul.mubr.bf16.gmra.mrb[0].mxu0 %v710
      %v1047 = vpop.f32.mrb[0].mxu0
      %v1048 = vadd.f32 %v312, %v1047
      %v1049 = vpop.f32.mrb[0].mxu0
      %v1050 = vpop.f32.mrb[0].mxu0
      %v1051 = vadd.f32 %v312, %v1050
      %v1052 = vpop.f32.mrb[0].mxu0
      %1053 = vmatprep.mubr.bf16.mxu0 0
      %1054 = vmatmul.mubr.bf16.gmra.mrb[0].mxu0 %v713
      %v1055 = vpop.f32.mrb[0].mxu0
      %v1056 = vadd.f32 %v312, %v1055
      %v1057 = vpop.f32.mrb[0].mxu0
      %v1058 = vpop.f32.mrb[0].mxu0
      %v1059 = vadd.f32 %v312, %v1058
      %v1060 = vpop.f32.mrb[0].mxu0
      %1061 = vmatprep.mubr.bf16.mxu0 0
      %1062 = vmatmul.mubr.bf16.gmra.mrb[0].mxu0 %v716
      %v1063 = vpop.f32.mrb[0].mxu0
      %v1064 = vadd.f32 %v312, %v1063
      %v1065 = vpop.f32.mrb[0].mxu0
      %v1066 = vpop.f32.mrb[0].mxu0
      %v1067 = vadd.f32 %v312, %v1066
      %v1068 = vpop.f32.mrb[0].mxu0
      %1069 = vmatprep.mubr.bf16.mxu0 0
      %1070 = vmatmul.mubr.bf16.gmra.mrb[0].mxu0 %v719
      %v1071 = vpop.f32.mrb[0].mxu0
      %v1072 = vadd.f32 %v312, %v1071
      %v1073 = vpop.f32.mrb[0].mxu0
      %v1074 = vpop.f32.mrb[0].mxu0
      %v1075 = vadd.f32 %v312, %v1074
      %v1076 = vpop.f32.mrb[0].mxu0
      %1077 = vmatprep.mubr.bf16.mxu0 0
      %1078 = vmatmul.mubr.bf16.gmra.mrb[0].mxu0 %v722
      %v1079 = vpop.f32.mrb[0].mxu0
      %v1080 = vadd.f32 %v312, %v1079
      %v1081 = vpop.f32.mrb[0].mxu0
      %v1082 = vpop.f32.mrb[0].mxu0
      %v1083 = vadd.f32 %v312, %v1082
      %v1084 = vpop.f32.mrb[0].mxu0
      %1085 = vmatprep.mubr.bf16.mxu0 0
      %1086 = vmatmul.mubr.bf16.gmra.mrb[0].mxu0 %v725
      %v1087 = vpop.f32.mrb[0].mxu0
      %v1088 = vadd.f32 %v312, %v1087
      %v1089 = vpop.f32.mrb[0].mxu0
      %v1090 = vpop.f32.mrb[0].mxu0
      %v1091 = vadd.f32 %v312, %v1090
      %v1092 = vpop.f32.mrb[0].mxu0
      %1093 = vmatprep.mubr.bf16.mxu0 0
      %1094 = vmatmul.mubr.bf16.gmra.mrb[0].mxu0 %v728
      %v1095 = vpop.f32.mrb[0].mxu0
      %v1096 = vadd.f32 %v312, %v1095
      %v1097 = vpop.f32.mrb[0].mxu0
      %v1098 = vpop.f32.mrb[0].mxu0
      %v1099 = vadd.f32 %v312, %v1098
      %v1100 = vpop.f32.mrb[0].mxu0
      %1101 = vmatprep.mubr.bf16.mxu0 0
      %1102 = vmatmul.mubr.bf16.gmra.mrb[0].mxu0 %v731
      %v1103 = vpop.f32.mrb[0].mxu0
      %v1104 = vadd.f32 %v312, %v1103
      %v1105 = vpop.f32.mrb[0].mxu0
      %v1106 = vpop.f32.mrb[0].mxu0
      %v1107 = vadd.f32 %v312, %v1106
      %v1108 = vpop.f32.mrb[0].mxu0
      %1109 = vmatprep.mubr.bf16.mxu0 0
      %1110 = vmatmul.mubr.bf16.gmra.mrb[0].mxu0 %v734
      %v1111 = vpop.f32.mrb[0].mxu0
      %v1112 = vadd.f32 %v312, %v1111
      %v1113 = vpop.f32.mrb[0].mxu0
      %v1114 = vpop.f32.mrb[0].mxu0
      %v1115 = vadd.f32 %v312, %v1114
      %v1116 = vpop.f32.mrb[0].mxu0
      %1117 = vmatprep.mubr.bf16.mxu0 0
      %1118 = vmatmul.mubr.bf16.gmra.mrb[0].mxu0 %v737
      %v1119 = vpop.f32.mrb[0].mxu0
      %v1120 = vadd.f32 %v312, %v1119
      %v1121 = vpop.f32.mrb[0].mxu0
      %v1122 = vpop.f32.mrb[0].mxu0
      %v1123 = vadd.f32 %v312, %v1122
      %v1124 = vpop.f32.mrb[0].mxu0
      %1125 = vmatprep.mubr.bf16.mxu0 0
      %1126 = vmatmul.mubr.bf16.gmra.mrb[0].mxu0 %v740
      %v1127 = vpop.f32.mrb[0].mxu0
      %v1128 = vadd.f32 %v312, %v1127
      %v1129 = vpop.f32.mrb[0].mxu0
      %v1130 = vpop.f32.mrb[0].mxu0
      %v1131 = vadd.f32 %v312, %v1130
      %v1132 = vpop.f32.mrb[0].mxu0
      %1133 = vmatprep.mubr.bf16.mxu0 0
      %1134 = vmatmul.mubr.bf16.gmra.mrb[0].mxu0 %v743
      %v1135 = vpop.f32.mrb[0].mxu0
      %v1136 = vadd.f32 %v312, %v1135
      %v1137 = vpop.f32.mrb[0].mxu0
      %v1138 = vpop.f32.mrb[0].mxu0
      %v1139 = vadd.f32 %v312, %v1138
      %v1140 = vpop.f32.mrb[0].mxu0
      %1141 = vmatprep.mubr.bf16.mxu0 0
      %1142 = vmatmul.mubr.bf16.gmra.mrb[0].mxu0 %v746
      %v1143 = vpop.f32.mrb[0].mxu0
      %v1144 = vadd.f32 %v312, %v1143
      %v1145 = vpop.f32.mrb[0].mxu0
      %v1146 = vpop.f32.mrb[0].mxu0
      %v1147 = vadd.f32 %v312, %v1146
      %v1148 = vpop.f32.mrb[0].mxu0
      %1149 = vmatprep.mubr.bf16.mxu0 0
      %1150 = vmatmul.mubr.bf16.gmra.mrb[0].mxu0 %v749
      %v1151 = vpop.f32.mrb[0].mxu0
      %v1152 = vadd.f32 %v312, %v1151
      %v1153 = vpop.f32.mrb[0].mxu0
      %v1154 = vpop.f32.mrb[0].mxu0
      %v1155 = vadd.f32 %v312, %v1154
      %v1156 = vpop.f32.mrb[0].mxu0
      %1157 = vmatprep.mubr.bf16.mxu0 0
      %1158 = vmatmul.mubr.bf16.gmra.mrb[0].mxu0 %v752
      %v1159 = vpop.f32.mrb[0].mxu0
      %v1160 = vadd.f32 %v312, %v1159
      %v1161 = vpop.f32.mrb[0].mxu0
      %v1162 = vpop.f32.mrb[0].mxu0
      %v1163 = vadd.f32 %v312, %v1162
      %v1164 = vpop.f32.mrb[0].mxu0
      %1165 = vmatprep.mubr.bf16.mxu0 0
      %1166 = vmatmul.mubr.bf16.gmra.mrb[0].mxu0 %v755
      %v1167 = vpop.f32.mrb[0].mxu0
      %v1168 = vadd.f32 %v312, %v1167
      %v1169 = vpop.f32.mrb[0].mxu0
      %v1170 = vpop.f32.mrb[0].mxu0
      %v1171 = vadd.f32 %v312, %v1170
      %v1172 = vpop.f32.mrb[0].mxu0
      %1173 = vmatprep.mubr.bf16.mxu0 0
      %1174 = vmatmul.mubr.bf16.gmra.mrb[0].mxu0 %v758
      %v1175 = vpop.f32.mrb[0].mxu0
      %v1176 = vadd.f32 %v312, %v1175
      %v1177 = vpop.f32.mrb[0].mxu0
      %v1178 = vpop.f32.mrb[0].mxu0
      %v1179 = vadd.f32 %v312, %v1178
      %v1180 = vpop.f32.mrb[0].mxu0
      %1181 = vmatprep.mubr.bf16.mxu0 0
      %1182 = vmatmul.mubr.bf16.gmra.mrb[0].mxu0 %v761
      %v1183 = vpop.f32.mrb[0].mxu0
      %v1184 = vadd.f32 %v312, %v1183
      %v1185 = vpop.f32.mrb[0].mxu0
      %v1186 = vpop.f32.mrb[0].mxu0
      %v1187 = vadd.f32 %v312, %v1186
      %v1188 = vpop.f32.mrb[0].mxu0
      %1189 = vmatprep.mubr.bf16.mxu0 0
      %1190 = vmatmul.mubr.bf16.gmra.mrb[0].mxu0 %v764
      %v1191 = vpop.f32.mrb[0].mxu0
      %v1192 = vadd.f32 %v312, %v1191
      %v1193 = vpop.f32.mrb[0].mxu0
      %v1194 = vpop.f32.mrb[0].mxu0
      %v1195 = vadd.f32 %v312, %v1194
      %v1196 = vpop.f32.mrb[0].mxu0
      %1197 = vmatprep.mubr.bf16.mxu0 0
      %1198 = vmatmul.mubr.bf16.gmra.mrb[0].mxu0 %v767
      %v1199 = vpop.f32.mrb[0].mxu0
      %v1200 = vadd.f32 %v312, %v1199
      %v1201 = vpop.f32.mrb[0].mxu0
      %v1202 = vpop.f32.mrb[0].mxu0
      %v1203 = vadd.f32 %v312, %v1202
      %v1204 = vpop.f32.mrb[0].mxu0
      %1205 = vmatprep.mubr.bf16.mxu0 0
      %1206 = vmatmul.mubr.bf16.gmra.mrb[0].mxu0 %v770
      %v1207 = vpop.f32.mrb[0].mxu0
      %v1208 = vadd.f32 %v312, %v1207
      %v1209 = vpop.f32.mrb[0].mxu0
      %v1210 = vpop.f32.mrb[0].mxu0
      %v1211 = vadd.f32 %v312, %v1210
      %v1212 = vpop.f32.mrb[0].mxu0
      %1213 = vmatprep.mubr.bf16.mxu0 0
      %1214 = vmatmul.mubr.bf16.gmra.mrb[0].mxu0 %v773
      %v1215 = vpop.f32.mrb[0].mxu0
      %v1216 = vadd.f32 %v312, %v1215
      %v1217 = vpop.f32.mrb[0].mxu0
      %v1218 = vpop.f32.mrb[0].mxu0
      %v1219 = vadd.f32 %v312, %v1218
      %v1220 = vpop.f32.mrb[0].mxu0
      %1221 = vmatprep.mubr.bf16.mxu0 0
      %1222 = vmatmul.mubr.bf16.gmra.mrb[0].mxu0 %v776
      %v1223 = vpop.f32.mrb[0].mxu0
      %v1224 = vadd.f32 %v312, %v1223
      %v1225 = vpop.f32.mrb[0].mxu0
      %v1226 = vpop.f32.mrb[0].mxu0
      %v1227 = vadd.f32 %v312, %v1226
      %v1228 = vpop.f32.mrb[0].mxu0
      %1229 = vmatprep.mubr.bf16.mxu0 0
      %1230 = vmatmul.mubr.bf16.gmra.mrb[0].mxu0 %v779
      %v1231 = vpop.f32.mrb[0].mxu0
      %v1232 = vadd.f32 %v312, %v1231
      %v1233 = vpop.f32.mrb[0].mxu0
      %v1234 = vpop.f32.mrb[0].mxu0
      %v1235 = vadd.f32 %v312, %v1234
      %v1236 = vpop.f32.mrb[0].mxu0
      %1237 = vmatprep.mubr.bf16.mxu0 0
      %1238 = vmatmul.mubr.bf16.gmra.mrb[0].mxu0 %v782
      %v1239 = vpop.f32.mrb[0].mxu0
      %v1240 = vadd.f32 %v312, %v1239
      %v1241 = vpop.f32.mrb[0].mxu0
      %v1242 = vpop.f32.mrb[0].mxu0
      %v1243 = vadd.f32 %v312, %v1242
      %v1244 = vpop.f32.mrb[0].mxu0
      %1245 = vmatprep.mubr.bf16.mxu0 0
      %1246 = vmatmul.mubr.bf16.gmra.mrb[0].mxu0 %v785
      %v1247 = vpop.f32.mrb[0].mxu0
      %v1248 = vadd.f32 %v312, %v1247
      %v1249 = vpop.f32.mrb[0].mxu0
      %v1250 = vpop.f32.mrb[0].mxu0
      %v1251 = vadd.f32 %v312, %v1250
      %v1252 = vpop.f32.mrb[0].mxu0
      %1253 = vmatprep.mubr.bf16.mxu0 0
      %1254 = vmatmul.mubr.bf16.gmra.mrb[0].mxu0 %v788
      %v1255 = vpop.f32.mrb[0].mxu0
      %v1256 = vadd.f32 %v312, %v1255
      %v1257 = vpop.f32.mrb[0].mxu0
      %v1258 = vpop.f32.mrb[0].mxu0
      %v1259 = vadd.f32 %v312, %v1258
      %v1260 = vpop.f32.mrb[0].mxu0
      %1261 = vmatprep.mubr.bf16.mxu0 0
      %1262 = vmatmul.mubr.bf16.gmra.mrb[0].mxu0 %v791
      %v1263 = vpop.f32.mrb[0].mxu0
      %v1264 = vadd.f32 %v312, %v1263
      %v1265 = vpop.f32.mrb[0].mxu0
      %v1266 = vpop.f32.mrb[0].mxu0
      %v1267 = vadd.f32 %v312, %v1266
      %v1268 = vpop.f32.mrb[0].mxu0
      %1269 = vmatprep.mubr.bf16.mxu0 0
      %1270 = vmatmul.mubr.bf16.gmra.mrb[0].mxu0 %v794
      %v1271 = vpop.f32.mrb[0].mxu0
      %v1272 = vadd.f32 %v312, %v1271
      %v1273 = vpop.f32.mrb[0].mxu0
      %v1274 = vpop.f32.mrb[0].mxu0
      %v1275 = vadd.f32 %v312, %v1274
      %v1276 = vpop.f32.mrb[0].mxu0
      %1277 = vmatprep.mubr.bf16.mxu0 0
      %1278 = vmatmul.mubr.bf16.gmra.mrb[0].mxu0 %v797
      %v1279 = vpop.f32.mrb[0].mxu0
      %v1280 = vadd.f32 %v312, %v1279
      %v1281 = vpop.f32.mrb[0].mxu0
      %v1282 = vpop.f32.mrb[0].mxu0
      %v1283 = vadd.f32 %v312, %v1282
      %v1284 = vpop.f32.mrb[0].mxu0
      %1285 = vmatprep.mubr.bf16.mxu0 0
      %1286 = vmatmul.mubr.bf16.gmra.mrb[0].mxu0 %v800
      %v1287 = vpop.f32.mrb[0].mxu0
      %v1288 = vadd.f32 %v312, %v1287
      %v1289 = vpop.f32.mrb[0].mxu0
      %v1290 = vpop.f32.mrb[0].mxu0
      %v1291 = vadd.f32 %v312, %v1290
      %v1292 = vpop.f32.mrb[0].mxu0
      %1293 = vmatprep.mubr.bf16.mxu0 0
      %1294 = vmatmul.mubr.bf16.gmra.mrb[0].mxu0 %v803
      %v1295 = vpop.f32.mrb[0].mxu0
      %v1296 = vadd.f32 %v312, %v1295
      %v1297 = vpop.f32.mrb[0].mxu0
      %v1298 = vpop.f32.mrb[0].mxu0
      %v1299 = vadd.f32 %v312, %v1298
      %v1300 = vpop.f32.mrb[0].mxu0
      %1301 = vmatprep.mubr.bf16.mxu0 0
      %1302 = vmatmul.mubr.bf16.gmra.mrb[0].mxu0 %v806
      %v1303 = vpop.f32.mrb[0].mxu0
      %v1304 = vadd.f32 %v312, %v1303
      %v1305 = vpop.f32.mrb[0].mxu0
      %v1306 = vpop.f32.mrb[0].mxu0
      %v1307 = vadd.f32 %v312, %v1306
      %v1308 = vpop.f32.mrb[0].mxu0
      %1309 = vmatprep.mubr.bf16.mxu0 0
      %1310 = vmatmul.mubr.bf16.gmra.mrb[0].mxu0 %v809
      %v1311 = vpop.f32.mrb[0].mxu0
      %v1312 = vadd.f32 %v312, %v1311
      %v1313 = vpop.f32.mrb[0].mxu0
      %v1314 = vpop.f32.mrb[0].mxu0
      %v1315 = vadd.f32 %v312, %v1314
      %v1316 = vpop.f32.mrb[0].mxu0
      %1317 = vmatprep.mubr.bf16.mxu0 0
      %1318 = vmatmul.mubr.bf16.gmra.mrb[0].mxu0 %v812
      %v1319 = vpop.f32.mrb[0].mxu0
      %v1320 = vadd.f32 %v312, %v1319
      %v1321 = vpop.f32.mrb[0].mxu0
      %v1322 = vpop.f32.mrb[0].mxu0
      %v1323 = vadd.f32 %v312, %v1322
      %v1324 = vpop.f32.mrb[0].mxu0
      %1325 = vmatprep.mubr.bf16.mxu0 0
      %1326 = vmatmul.mubr.bf16.gmra.mrb[0].mxu0 %v815
      %v1327 = vpop.f32.mrb[0].mxu0
      %v1328 = vadd.f32 %v312, %v1327
      %v1329 = vpop.f32.mrb[0].mxu0
      %v1330 = vpop.f32.mrb[0].mxu0
      %v1331 = vadd.f32 %v312, %v1330
      %v1332 = vpop.f32.mrb[0].mxu0
      %1333 = vmatprep.mubr.bf16.mxu0 0
      %1334 = vmatmul.mubr.bf16.gmra.mrb[0].mxu0 %v818
      %v1335 = vpop.f32.mrb[0].mxu0
      %v1336 = vadd.f32 %v312, %v1335
      %v1337 = vpop.f32.mrb[0].mxu0
      %v1338 = vpop.f32.mrb[0].mxu0
      %v1339 = vadd.f32 %v312, %v1338
      %v1340 = vpop.f32.mrb[0].mxu0
      %1341 = vmatprep.mubr.bf16.mxu0 0
      %1342 = vmatmul.mubr.bf16.gmra.mrb[0].mxu0 %v821
      %v1343 = vpop.f32.mrb[0].mxu0
      %v1344 = vadd.f32 %v312, %v1343
      %v1345 = vpop.f32.mrb[0].mxu0
      %v1346 = vpop.f32.mrb[0].mxu0
      %v1347 = vadd.f32 %v312, %v1346
      %v1348 = vpop.f32.mrb[0].mxu0
      %1349 = vmatprep.mubr.bf16.mxu0 0
      %1350 = vmatmul.mubr.bf16.gmra.mrb[0].mxu0 %v824
      %v1351 = vpop.f32.mrb[0].mxu0
      %v1352 = vadd.f32 %v312, %v1351
      %v1353 = vpop.f32.mrb[0].mxu0
      %v1354 = vpop.f32.mrb[0].mxu0
      %v1355 = vadd.f32 %v312, %v1354
      %v1356 = vpop.f32.mrb[0].mxu0
      %1357 = vmatprep.mubr.bf16.mxu0 0
      %1358 = vmatmul.mubr.bf16.gmra.mrb[0].mxu0 %v827
      %v1359 = vpop.f32.mrb[0].mxu0
      %v1360 = vadd.f32 %v312, %v1359
      %v1361 = vpop.f32.mrb[0].mxu0
      %v1362 = vpop.f32.mrb[0].mxu0
      %v1363 = vadd.f32 %v312, %v1362
      %v1364 = vpop.f32.mrb[0].mxu0
      %1365 = vmatprep.mubr.bf16.mxu0 0
      %1366 = vmatmul.mubr.bf16.gmra.mrb[0].mxu0 %v830
      %v1367 = vpop.f32.mrb[0].mxu0
      %v1368 = vadd.f32 %v312, %v1367
      %v1369 = vpop.f32.mrb[0].mxu0
      %v1370 = vpop.f32.mrb[0].mxu0
      %v1371 = vadd.f32 %v312, %v1370
      %v1372 = vpop.f32.mrb[0].mxu0
      %1373 = vmatprep.mubr.bf16.mxu0 0
      %1374 = vmatmul.mubr.bf16.gmra.mrb[0].mxu0 %v833
      %v1375 = vpop.f32.mrb[0].mxu0
      %v1376 = vadd.f32 %v312, %v1375
      %v1377 = vpop.f32.mrb[0].mxu0
      %v1378 = vpop.f32.mrb[0].mxu0
      %v1379 = vadd.f32 %v312, %v1378
      %v1380 = vpop.f32.mrb[0].mxu0
      %1381 = vmatprep.mubr.bf16.mxu0 0
      %1382 = vmatmul.mubr.bf16.gmra.mrb[0].mxu0 %v836
      %v1383 = vpop.f32.mrb[0].mxu0
      %v1384 = vadd.f32 %v312, %v1383
      %v1385 = vpop.f32.mrb[0].mxu0
      %v1386 = vpop.f32.mrb[0].mxu0
      %v1387 = vadd.f32 %v312, %v1386
      %v1388 = vpop.f32.mrb[0].mxu0
      %1389 = vdwg.mxu0
      %vm1390 = vcmp.ge.f32.partialorder %v880, 0.0
      %vm1391 = vcmp.ge.f32.partialorder %v883, 0.0
      %vm1392 = vcmp.ge.f32.partialorder %v888, 0.0
      %vm1393 = vcmp.ge.f32.partialorder %v891, 0.0
      %vm1394 = vcmp.ge.f32.partialorder %v896, 0.0
      %vm1395 = vcmp.ge.f32.partialorder %v899, 0.0
      %vm1396 = vcmp.ge.f32.partialorder %v904, 0.0
      %vm1397 = vcmp.ge.f32.partialorder %v907, 0.0
      %vm1398 = vcmp.ge.f32.partialorder %v912, 0.0
      %vm1399 = vcmp.ge.f32.partialorder %v915, 0.0
      %vm1400 = vcmp.ge.f32.partialorder %v920, 0.0
      %vm1401 = vcmp.ge.f32.partialorder %v923, 0.0
      %vm1402 = vcmp.ge.f32.partialorder %v928, 0.0
      %vm1403 = vcmp.ge.f32.partialorder %v931, 0.0
      %vm1404 = vcmp.ge.f32.partialorder %v936, 0.0
      %vm1405 = vcmp.ge.f32.partialorder %v939, 0.0
      %vm1406 = vcmp.ge.f32.partialorder %v944, 0.0
      %vm1407 = vcmp.ge.f32.partialorder %v947, 0.0
      %vm1408 = vcmp.ge.f32.partialorder %v952, 0.0
      %vm1409 = vcmp.ge.f32.partialorder %v955, 0.0
      %vm1410 = vcmp.ge.f32.partialorder %v960, 0.0
      %vm1411 = vcmp.ge.f32.partialorder %v963, 0.0
      %vm1412 = vcmp.ge.f32.partialorder %v968, 0.0
      %vm1413 = vcmp.ge.f32.partialorder %v971, 0.0
      %vm1414 = vcmp.ge.f32.partialorder %v976, 0.0
      %vm1415 = vcmp.ge.f32.partialorder %v979, 0.0
      %vm1416 = vcmp.ge.f32.partialorder %v984, 0.0
      %vm1417 = vcmp.ge.f32.partialorder %v987, 0.0
      %vm1418 = vcmp.ge.f32.partialorder %v992, 0.0
      %vm1419 = vcmp.ge.f32.partialorder %v995, 0.0
      %vm1420 = vcmp.ge.f32.partialorder %v1000, 0.0
      %vm1421 = vcmp.ge.f32.partialorder %v1003, 0.0
      %vm1422 = vcmp.ge.f32.partialorder %v1008, 0.0
      %vm1423 = vcmp.ge.f32.partialorder %v1011, 0.0
      %vm1424 = vcmp.ge.f32.partialorder %v1016, 0.0
      %vm1425 = vcmp.ge.f32.partialorder %v1019, 0.0
      %vm1426 = vcmp.ge.f32.partialorder %v1024, 0.0
      %vm1427 = vcmp.ge.f32.partialorder %v1027, 0.0
      %vm1428 = vcmp.ge.f32.partialorder %v1032, 0.0
      %vm1429 = vcmp.ge.f32.partialorder %v1035, 0.0
      %vm1430 = vcmp.ge.f32.partialorder %v1040, 0.0
      %vm1431 = vcmp.ge.f32.partialorder %v1043, 0.0
      %vm1432 = vcmp.ge.f32.partialorder %v1048, 0.0
      %vm1433 = vcmp.ge.f32.partialorder %v1051, 0.0
      %vm1434 = vcmp.ge.f32.partialorder %v1056, 0.0
      %vm1435 = vcmp.ge.f32.partialorder %v1059, 0.0
      %vm1436 = vcmp.ge.f32.partialorder %v1064, 0.0
      %vm1437 = vcmp.ge.f32.partialorder %v1067, 0.0
      %vm1438 = vcmp.ge.f32.partialorder %v1072, 0.0
      %vm1439 = vcmp.ge.f32.partialorder %v1075, 0.0
      %vm1440 = vcmp.ge.f32.partialorder %v1080, 0.0
      %vm1441 = vcmp.ge.f32.partialorder %v1083, 0.0
      %vm1442 = vcmp.ge.f32.partialorder %v1088, 0.0
      %vm1443 = vcmp.ge.f32.partialorder %v1091, 0.0
      %vm1444 = vcmp.ge.f32.partialorder %v1096, 0.0
      %vm1445 = vcmp.ge.f32.partialorder %v1099, 0.0
      %vm1446 = vcmp.ge.f32.partialorder %v1104, 0.0
      %vm1447 = vcmp.ge.f32.partialorder %v1107, 0.0
      %vm1448 = vcmp.ge.f32.partialorder %v1112, 0.0
      %vm1449 = vcmp.ge.f32.partialorder %v1115, 0.0
      %vm1450 = vcmp.ge.f32.partialorder %v1120, 0.0
      %vm1451 = vcmp.ge.f32.partialorder %v1123, 0.0
      %vm1452 = vcmp.ge.f32.partialorder %v1128, 0.0
      %vm1453 = vcmp.ge.f32.partialorder %v1131, 0.0
      %vm1454 = vcmp.ge.f32.partialorder %v1136, 0.0
      %vm1455 = vcmp.ge.f32.partialorder %v1139, 0.0
      %vm1456 = vcmp.ge.f32.partialorder %v1144, 0.0
      %vm1457 = vcmp.ge.f32.partialorder %v1147, 0.0
      %vm1458 = vcmp.ge.f32.partialorder %v1152, 0.0
      %vm1459 = vcmp.ge.f32.partialorder %v1155, 0.0
      %vm1460 = vcmp.ge.f32.partialorder %v1160, 0.0
      %vm1461 = vcmp.ge.f32.partialorder %v1163, 0.0
      %vm1462 = vcmp.ge.f32.partialorder %v1168, 0.0
      %vm1463 = vcmp.ge.f32.partialorder %v1171, 0.0
      %vm1464 = vcmp.ge.f32.partialorder %v1176, 0.0
      %vm1465 = vcmp.ge.f32.partialorder %v1179, 0.0
      %vm1466 = vcmp.ge.f32.partialorder %v1184, 0.0
      %vm1467 = vcmp.ge.f32.partialorder %v1187, 0.0
      %vm1468 = vcmp.ge.f32.partialorder %v1192, 0.0
      %vm1469 = vcmp.ge.f32.partialorder %v1195, 0.0
      %vm1470 = vcmp.ge.f32.partialorder %v1200, 0.0
      %vm1471 = vcmp.ge.f32.partialorder %v1203, 0.0
      %vm1472 = vcmp.ge.f32.partialorder %v1208, 0.0
      %vm1473 = vcmp.ge.f32.partialorder %v1211, 0.0
      %vm1474 = vcmp.ge.f32.partialorder %v1216, 0.0
      %vm1475 = vcmp.ge.f32.partialorder %v1219, 0.0
      %vm1476 = vcmp.ge.f32.partialorder %v1224, 0.0
      %vm1477 = vcmp.ge.f32.partialorder %v1227, 0.0
      %vm1478 = vcmp.ge.f32.partialorder %v1232, 0.0
      %vm1479 = vcmp.ge.f32.partialorder %v1235, 0.0
      %vm1480 = vcmp.ge.f32.partialorder %v1240, 0.0
      %vm1481 = vcmp.ge.f32.partialorder %v1243, 0.0
      %vm1482 = vcmp.ge.f32.partialorder %v1248, 0.0
      %vm1483 = vcmp.ge.f32.partialorder %v1251, 0.0
      %vm1484 = vcmp.ge.f32.partialorder %v1256, 0.0
      %vm1485 = vcmp.ge.f32.partialorder %v1259, 0.0
      %vm1486 = vcmp.ge.f32.partialorder %v1264, 0.0
      %vm1487 = vcmp.ge.f32.partialorder %v1267, 0.0
      %vm1488 = vcmp.ge.f32.partialorder %v1272, 0.0
      %vm1489 = vcmp.ge.f32.partialorder %v1275, 0.0
      %vm1490 = vcmp.ge.f32.partialorder %v1280, 0.0
      %vm1491 = vcmp.ge.f32.partialorder %v1283, 0.0
      %vm1492 = vcmp.ge.f32.partialorder %v1288, 0.0
      %vm1493 = vcmp.ge.f32.partialorder %v1291, 0.0
      %vm1494 = vcmp.ge.f32.partialorder %v1296, 0.0
      %vm1495 = vcmp.ge.f32.partialorder %v1299, 0.0
      %vm1496 = vcmp.ge.f32.partialorder %v1304, 0.0
      %vm1497 = vcmp.ge.f32.partialorder %v1307, 0.0
      %vm1498 = vcmp.ge.f32.partialorder %v1312, 0.0
      %vm1499 = vcmp.ge.f32.partialorder %v1315, 0.0
      %vm1500 = vcmp.ge.f32.partialorder %v1320, 0.0
      %vm1501 = vcmp.ge.f32.partialorder %v1323, 0.0
      %vm1502 = vcmp.ge.f32.partialorder %v1328, 0.0
      %vm1503 = vcmp.ge.f32.partialorder %v1331, 0.0
      %vm1504 = vcmp.ge.f32.partialorder %v1336, 0.0
      %vm1505 = vcmp.ge.f32.partialorder %v1339, 0.0
      %vm1506 = vcmp.ge.f32.partialorder %v1344, 0.0
      %vm1507 = vcmp.ge.f32.partialorder %v1347, 0.0
      %vm1508 = vcmp.ge.f32.partialorder %v1352, 0.0
      %vm1509 = vcmp.ge.f32.partialorder %v1355, 0.0
      %vm1510 = vcmp.ge.f32.partialorder %v1360, 0.0
      %vm1511 = vcmp.ge.f32.partialorder %v1363, 0.0
      %vm1512 = vcmp.ge.f32.partialorder %v1368, 0.0
      %vm1513 = vcmp.ge.f32.partialorder %v1371, 0.0
      %vm1514 = vcmp.ge.f32.partialorder %v1376, 0.0
      %vm1515 = vcmp.ge.f32.partialorder %v1379, 0.0
      %vm1516 = vcmp.ge.f32.partialorder %v1384, 0.0
      %vm1517 = vcmp.ge.f32.partialorder %v1387, 0.0
      %v1518 = vmul.f32 %v880, 0.01
      %v1519 = vmul.f32 %v883, 0.01
      %v1520 = vmul.f32 %v888, 0.01
      %v1521 = vmul.f32 %v891, 0.01
      %v1522 = vmul.f32 %v896, 0.01
      %v1523 = vmul.f32 %v899, 0.01
      %v1524 = vmul.f32 %v904, 0.01
      %v1525 = vmul.f32 %v907, 0.01
      %v1526 = vmul.f32 %v912, 0.01
      %v1527 = vmul.f32 %v915, 0.01
      %v1528 = vmul.f32 %v920, 0.01
      %v1529 = vmul.f32 %v923, 0.01
      %v1530 = vmul.f32 %v928, 0.01
      %v1531 = vmul.f32 %v931, 0.01
      %v1532 = vmul.f32 %v936, 0.01
      %v1533 = vmul.f32 %v939, 0.01
      %v1534 = vmul.f32 %v944, 0.01
      %v1535 = vmul.f32 %v947, 0.01
      %v1536 = vmul.f32 %v952, 0.01
      %v1537 = vmul.f32 %v955, 0.01
      %v1538 = vmul.f32 %v960, 0.01
      %v1539 = vmul.f32 %v963, 0.01
      %v1540 = vmul.f32 %v968, 0.01
      %v1541 = vmul.f32 %v971, 0.01
      %v1542 = vmul.f32 %v976, 0.01
      %v1543 = vmul.f32 %v979, 0.01
      %v1544 = vmul.f32 %v984, 0.01
      %v1545 = vmul.f32 %v987, 0.01
      %v1546 = vmul.f32 %v992, 0.01
      %v1547 = vmul.f32 %v995, 0.01
      %v1548 = vmul.f32 %v1000, 0.01
      %v1549 = vmul.f32 %v1003, 0.01
      %v1550 = vmul.f32 %v1008, 0.01
      %v1551 = vmul.f32 %v1011, 0.01
      %v1552 = vmul.f32 %v1016, 0.01
      %v1553 = vmul.f32 %v1019, 0.01
      %v1554 = vmul.f32 %v1024, 0.01
      %v1555 = vmul.f32 %v1027, 0.01
      %v1556 = vmul.f32 %v1032, 0.01
      %v1557 = vmul.f32 %v1035, 0.01
      %v1558 = vmul.f32 %v1040, 0.01
      %v1559 = vmul.f32 %v1043, 0.01
      %v1560 = vmul.f32 %v1048, 0.01
      %v1561 = vmul.f32 %v1051, 0.01
      %v1562 = vmul.f32 %v1056, 0.01
      %v1563 = vmul.f32 %v1059, 0.01
      %v1564 = vmul.f32 %v1064, 0.01
      %v1565 = vmul.f32 %v1067, 0.01
      %v1566 = vmul.f32 %v1072, 0.01
      %v1567 = vmul.f32 %v1075, 0.01
      %v1568 = vmul.f32 %v1080, 0.01
      %v1569 = vmul.f32 %v1083, 0.01
      %v1570 = vmul.f32 %v1088, 0.01
      %v1571 = vmul.f32 %v1091, 0.01
      %v1572 = vmul.f32 %v1096, 0.01
      %v1573 = vmul.f32 %v1099, 0.01
      %v1574 = vmul.f32 %v1104, 0.01
      %v1575 = vmul.f32 %v1107, 0.01
      %v1576 = vmul.f32 %v1112, 0.01
      %v1577 = vmul.f32 %v1115, 0.01
      %v1578 = vmul.f32 %v1120, 0.01
      %v1579 = vmul.f32 %v1123, 0.01
      %v1580 = vmul.f32 %v1128, 0.01
      %v1581 = vmul.f32 %v1131, 0.01
      %v1582 = vmul.f32 %v1136, 0.01
      %v1583 = vmul.f32 %v1139, 0.01
      %v1584 = vmul.f32 %v1144, 0.01
      %v1585 = vmul.f32 %v1147, 0.01
      %v1586 = vmul.f32 %v1152, 0.01
      %v1587 = vmul.f32 %v1155, 0.01
      %v1588 = vmul.f32 %v1160, 0.01
      %v1589 = vmul.f32 %v1163, 0.01
      %v1590 = vmul.f32 %v1168, 0.01
      %v1591 = vmul.f32 %v1171, 0.01
      %v1592 = vmul.f32 %v1176, 0.01
      %v1593 = vmul.f32 %v1179, 0.01
      %v1594 = vmul.f32 %v1184, 0.01
      %v1595 = vmul.f32 %v1187, 0.01
      %v1596 = vmul.f32 %v1192, 0.01
      %v1597 = vmul.f32 %v1195, 0.01
      %v1598 = vmul.f32 %v1200, 0.01
      %v1599 = vmul.f32 %v1203, 0.01
      %v1600 = vmul.f32 %v1208, 0.01
      %v1601 = vmul.f32 %v1211, 0.01
      %v1602 = vmul.f32 %v1216, 0.01
      %v1603 = vmul.f32 %v1219, 0.01
      %v1604 = vmul.f32 %v1224, 0.01
      %v1605 = vmul.f32 %v1227, 0.01
      %v1606 = vmul.f32 %v1232, 0.01
      %v1607 = vmul.f32 %v1235, 0.01
      %v1608 = vmul.f32 %v1240, 0.01
      %v1609 = vmul.f32 %v1243, 0.01
      %v1610 = vmul.f32 %v1248, 0.01
      %v1611 = vmul.f32 %v1251, 0.01
      %v1612 = vmul.f32 %v1256, 0.01
      %v1613 = vmul.f32 %v1259, 0.01
      %v1614 = vmul.f32 %v1264, 0.01
      %v1615 = vmul.f32 %v1267, 0.01
      %v1616 = vmul.f32 %v1272, 0.01
      %v1617 = vmul.f32 %v1275, 0.01
      %v1618 = vmul.f32 %v1280, 0.01
      %v1619 = vmul.f32 %v1283, 0.01
      %v1620 = vmul.f32 %v1288, 0.01
      %v1621 = vmul.f32 %v1291, 0.01
      %v1622 = vmul.f32 %v1296, 0.01
      %v1623 = vmul.f32 %v1299, 0.01
      %v1624 = vmul.f32 %v1304, 0.01
      %v1625 = vmul.f32 %v1307, 0.01
      %v1626 = vmul.f32 %v1312, 0.01
      %v1627 = vmul.f32 %v1315, 0.01
      %v1628 = vmul.f32 %v1320, 0.01
      %v1629 = vmul.f32 %v1323, 0.01
      %v1630 = vmul.f32 %v1328, 0.01
      %v1631 = vmul.f32 %v1331, 0.01
      %v1632 = vmul.f32 %v1336, 0.01
      %v1633 = vmul.f32 %v1339, 0.01
      %v1634 = vmul.f32 %v1344, 0.01
      %v1635 = vmul.f32 %v1347, 0.01
      %v1636 = vmul.f32 %v1352, 0.01
      %v1637 = vmul.f32 %v1355, 0.01
      %v1638 = vmul.f32 %v1360, 0.01
      %v1639 = vmul.f32 %v1363, 0.01
      %v1640 = vmul.f32 %v1368, 0.01
      %v1641 = vmul.f32 %v1371, 0.01
      %v1642 = vmul.f32 %v1376, 0.01
      %v1643 = vmul.f32 %v1379, 0.01
      %v1644 = vmul.f32 %v1384, 0.01
      %v1645 = vmul.f32 %v1387, 0.01
      %v1646 = vsel %vm1390, %v880, %v1518
      %v1647 = vsel %vm1391, %v883, %v1519
      %v1648 = vsel %vm1392, %v888, %v1520
      %v1649 = vsel %vm1393, %v891, %v1521
      %v1650 = vsel %vm1394, %v896, %v1522
      %v1651 = vsel %vm1395, %v899, %v1523
      %v1652 = vsel %vm1396, %v904, %v1524
      %v1653 = vsel %vm1397, %v907, %v1525
      %v1654 = vsel %vm1398, %v912, %v1526
      %v1655 = vsel %vm1399, %v915, %v1527
      %v1656 = vsel %vm1400, %v920, %v1528
      %v1657 = vsel %vm1401, %v923, %v1529
      %v1658 = vsel %vm1402, %v928, %v1530
      %v1659 = vsel %vm1403, %v931, %v1531
      %v1660 = vsel %vm1404, %v936, %v1532
      %v1661 = vsel %vm1405, %v939, %v1533
      %v1662 = vsel %vm1406, %v944, %v1534
      %v1663 = vsel %vm1407, %v947, %v1535
      %v1664 = vsel %vm1408, %v952, %v1536
      %v1665 = vsel %vm1409, %v955, %v1537
      %v1666 = vsel %vm1410, %v960, %v1538
      %v1667 = vsel %vm1411, %v963, %v1539
      %v1668 = vsel %vm1412, %v968, %v1540
      %v1669 = vsel %vm1413, %v971, %v1541
      %v1670 = vsel %vm1414, %v976, %v1542
      %v1671 = vsel %vm1415, %v979, %v1543
      %v1672 = vsel %vm1416, %v984, %v1544
      %v1673 = vsel %vm1417, %v987, %v1545
      %v1674 = vsel %vm1418, %v992, %v1546
      %v1675 = vsel %vm1419, %v995, %v1547
      %v1676 = vsel %vm1420, %v1000, %v1548
      %v1677 = vsel %vm1421, %v1003, %v1549
      %v1678 = vsel %vm1422, %v1008, %v1550
      %v1679 = vsel %vm1423, %v1011, %v1551
      %v1680 = vsel %vm1424, %v1016, %v1552
      %v1681 = vsel %vm1425, %v1019, %v1553
      %v1682 = vsel %vm1426, %v1024, %v1554
      %v1683 = vsel %vm1427, %v1027, %v1555
      %v1684 = vsel %vm1428, %v1032, %v1556
      %v1685 = vsel %vm1429, %v1035, %v1557
      %v1686 = vsel %vm1430, %v1040, %v1558
      %v1687 = vsel %vm1431, %v1043, %v1559
      %v1688 = vsel %vm1432, %v1048, %v1560
      %v1689 = vsel %vm1433, %v1051, %v1561
      %v1690 = vsel %vm1434, %v1056, %v1562
      %v1691 = vsel %vm1435, %v1059, %v1563
      %v1692 = vsel %vm1436, %v1064, %v1564
      %v1693 = vsel %vm1437, %v1067, %v1565
      %v1694 = vsel %vm1438, %v1072, %v1566
      %v1695 = vsel %vm1439, %v1075, %v1567
      %v1696 = vsel %vm1440, %v1080, %v1568
      %v1697 = vsel %vm1441, %v1083, %v1569
      %v1698 = vsel %vm1442, %v1088, %v1570
      %v1699 = vsel %vm1443, %v1091, %v1571
      %v1700 = vsel %vm1444, %v1096, %v1572
      %v1701 = vsel %vm1445, %v1099, %v1573
      %v1702 = vsel %vm1446, %v1104, %v1574
      %v1703 = vsel %vm1447, %v1107, %v1575
      %v1704 = vsel %vm1448, %v1112, %v1576
      %v1705 = vsel %vm1449, %v1115, %v1577
      %v1706 = vsel %vm1450, %v1120, %v1578
      %v1707 = vsel %vm1451, %v1123, %v1579
      %v1708 = vsel %vm1452, %v1128, %v1580
      %v1709 = vsel %vm1453, %v1131, %v1581
      %v1710 = vsel %vm1454, %v1136, %v1582
      %v1711 = vsel %vm1455, %v1139, %v1583
      %v1712 = vsel %vm1456, %v1144, %v1584
      %v1713 = vsel %vm1457, %v1147, %v1585
      %v1714 = vsel %vm1458, %v1152, %v1586
      %v1715 = vsel %vm1459, %v1155, %v1587
      %v1716 = vsel %vm1460, %v1160, %v1588
      %v1717 = vsel %vm1461, %v1163, %v1589
      %v1718 = vsel %vm1462, %v1168, %v1590
      %v1719 = vsel %vm1463, %v1171, %v1591
      %v1720 = vsel %vm1464, %v1176, %v1592
      %v1721 = vsel %vm1465, %v1179, %v1593
      %v1722 = vsel %vm1466, %v1184, %v1594
      %v1723 = vsel %vm1467, %v1187, %v1595
      %v1724 = vsel %vm1468, %v1192, %v1596
      %v1725 = vsel %vm1469, %v1195, %v1597
      %v1726 = vsel %vm1470, %v1200, %v1598
      %v1727 = vsel %vm1471, %v1203, %v1599
      %v1728 = vsel %vm1472, %v1208, %v1600
      %v1729 = vsel %vm1473, %v1211, %v1601
      %v1730 = vsel %vm1474, %v1216, %v1602
      %v1731 = vsel %vm1475, %v1219, %v1603
      %v1732 = vsel %vm1476, %v1224, %v1604
      %v1733 = vsel %vm1477, %v1227, %v1605
      %v1734 = vsel %vm1478, %v1232, %v1606
      %v1735 = vsel %vm1479, %v1235, %v1607
      %v1736 = vsel %vm1480, %v1240, %v1608
      %v1737 = vsel %vm1481, %v1243, %v1609
      %v1738 = vsel %vm1482, %v1248, %v1610
      %v1739 = vsel %vm1483, %v1251, %v1611
      %v1740 = vsel %vm1484, %v1256, %v1612
      %v1741 = vsel %vm1485, %v1259, %v1613
      %v1742 = vsel %vm1486, %v1264, %v1614
      %v1743 = vsel %vm1487, %v1267, %v1615
      %v1744 = vsel %vm1488, %v1272, %v1616
      %v1745 = vsel %vm1489, %v1275, %v1617
      %v1746 = vsel %vm1490, %v1280, %v1618
      %v1747 = vsel %vm1491, %v1283, %v1619
      %v1748 = vsel %vm1492, %v1288, %v1620
      %v1749 = vsel %vm1493, %v1291, %v1621
      %v1750 = vsel %vm1494, %v1296, %v1622
      %v1751 = vsel %vm1495, %v1299, %v1623
      %v1752 = vsel %vm1496, %v1304, %v1624
      %v1753 = vsel %vm1497, %v1307, %v1625
      %v1754 = vsel %vm1498, %v1312, %v1626
      %v1755 = vsel %vm1499, %v1315, %v1627
      %v1756 = vsel %vm1500, %v1320, %v1628
      %v1757 = vsel %vm1501, %v1323, %v1629
      %v1758 = vsel %vm1502, %v1328, %v1630
      %v1759 = vsel %vm1503, %v1331, %v1631
      %v1760 = vsel %vm1504, %v1336, %v1632
      %v1761 = vsel %vm1505, %v1339, %v1633
      %v1762 = vsel %vm1506, %v1344, %v1634
      %v1763 = vsel %vm1507, %v1347, %v1635
      %v1764 = vsel %vm1508, %v1352, %v1636
      %v1765 = vsel %vm1509, %v1355, %v1637
      %v1766 = vsel %vm1510, %v1360, %v1638
      %v1767 = vsel %vm1511, %v1363, %v1639
      %v1768 = vsel %vm1512, %v1368, %v1640
      %v1769 = vsel %vm1513, %v1371, %v1641
      %v1770 = vsel %vm1514, %v1376, %v1642
      %v1771 = vsel %vm1515, %v1379, %v1643
      %v1772 = vsel %vm1516, %v1384, %v1644
      %v1773 = vsel %vm1517, %v1387, %v1645
      %v1774 = vpack.c.bf16 %v1647, %v1646
      %v1775 = vpack.c.bf16 %v1649, %v1648
      %v1776 = vpack.c.bf16 %v1651, %v1650
      %v1777 = vpack.c.bf16 %v1653, %v1652
      %v1778 = vpack.c.bf16 %v1655, %v1654
      %v1779 = vpack.c.bf16 %v1657, %v1656
      %v1780 = vpack.c.bf16 %v1659, %v1658
      %v1781 = vpack.c.bf16 %v1661, %v1660
      %v1782 = vpack.c.bf16 %v1663, %v1662
      %v1783 = vpack.c.bf16 %v1665, %v1664
      %v1784 = vpack.c.bf16 %v1667, %v1666
      %v1785 = vpack.c.bf16 %v1669, %v1668
      %v1786 = vpack.c.bf16 %v1671, %v1670
      %v1787 = vpack.c.bf16 %v1673, %v1672
      %v1788 = vpack.c.bf16 %v1675, %v1674
      %v1789 = vpack.c.bf16 %v1677, %v1676
      %v1790 = vpack.c.bf16 %v1679, %v1678
      %v1791 = vpack.c.bf16 %v1681, %v1680
      %v1792 = vpack.c.bf16 %v1683, %v1682
      %v1793 = vpack.c.bf16 %v1685, %v1684
      %v1794 = vpack.c.bf16 %v1687, %v1686
      %v1795 = vpack.c.bf16 %v1689, %v1688
      %v1796 = vpack.c.bf16 %v1691, %v1690
      %v1797 = vpack.c.bf16 %v1693, %v1692
      %v1798 = vpack.c.bf16 %v1695, %v1694
      %v1799 = vpack.c.bf16 %v1697, %v1696
      %v1800 = vpack.c.bf16 %v1699, %v1698
      %v1801 = vpack.c.bf16 %v1701, %v1700
      %v1802 = vpack.c.bf16 %v1703, %v1702
      %v1803 = vpack.c.bf16 %v1705, %v1704
      %v1804 = vpack.c.bf16 %v1707, %v1706
      %v1805 = vpack.c.bf16 %v1709, %v1708
      %v1806 = vpack.c.bf16 %v1711, %v1710
      %v1807 = vpack.c.bf16 %v1713, %v1712
      %v1808 = vpack.c.bf16 %v1715, %v1714
      %v1809 = vpack.c.bf16 %v1717, %v1716
      %v1810 = vpack.c.bf16 %v1719, %v1718
      %v1811 = vpack.c.bf16 %v1721, %v1720
      %v1812 = vpack.c.bf16 %v1723, %v1722
      %v1813 = vpack.c.bf16 %v1725, %v1724
      %v1814 = vpack.c.bf16 %v1727, %v1726
      %v1815 = vpack.c.bf16 %v1729, %v1728
      %v1816 = vpack.c.bf16 %v1731, %v1730
      %v1817 = vpack.c.bf16 %v1733, %v1732
      %v1818 = vpack.c.bf16 %v1735, %v1734
      %v1819 = vpack.c.bf16 %v1737, %v1736
      %v1820 = vpack.c.bf16 %v1739, %v1738
      %v1821 = vpack.c.bf16 %v1741, %v1740
      %v1822 = vpack.c.bf16 %v1743, %v1742
      %v1823 = vpack.c.bf16 %v1745, %v1744
      %v1824 = vpack.c.bf16 %v1747, %v1746
      %v1825 = vpack.c.bf16 %v1749, %v1748
      %v1826 = vpack.c.bf16 %v1751, %v1750
      %v1827 = vpack.c.bf16 %v1753, %v1752
      %v1828 = vpack.c.bf16 %v1755, %v1754
      %v1829 = vpack.c.bf16 %v1757, %v1756
      %v1830 = vpack.c.bf16 %v1759, %v1758
      %v1831 = vpack.c.bf16 %v1761, %v1760
      %v1832 = vpack.c.bf16 %v1763, %v1762
      %v1833 = vpack.c.bf16 %v1765, %v1764
      %v1834 = vpack.c.bf16 %v1767, %v1766
      %v1835 = vpack.c.bf16 %v1769, %v1768
      %v1836 = vpack.c.bf16 %v1771, %v1770
      %v1837 = vpack.c.bf16 %v1773, %v1772
      %v1902 = vunpack.c.l.b16 %v1774
      %v1903 = vunpack.c.h.b16 %v1774
      %v1904 = vunpack.c.l.b16 %v1775
      %v1905 = vunpack.c.h.b16 %v1775
      %v1906 = vunpack.c.l.b16 %v1776
      %v1907 = vunpack.c.h.b16 %v1776
      %v1908 = vunpack.c.l.b16 %v1777
      %v1909 = vunpack.c.h.b16 %v1777
      %v1910 = vunpack.c.l.b16 %v1778
      %v1911 = vunpack.c.h.b16 %v1778
      %v1912 = vunpack.c.l.b16 %v1779
      %v1913 = vunpack.c.h.b16 %v1779
      %v1914 = vunpack.c.l.b16 %v1780
      %v1915 = vunpack.c.h.b16 %v1780
      %v1916 = vunpack.c.l.b16 %v1781
      %v1917 = vunpack.c.h.b16 %v1781
      %v1918 = vunpack.c.l.b16 %v1782
      %v1919 = vunpack.c.h.b16 %v1782
      %v1920 = vunpack.c.l.b16 %v1783
      %v1921 = vunpack.c.h.b16 %v1783
      %v1922 = vunpack.c.l.b16 %v1784
      %v1923 = vunpack.c.h.b16 %v1784
      %v1924 = vunpack.c.l.b16 %v1785
      %v1925 = vunpack.c.h.b16 %v1785
      %v1926 = vunpack.c.l.b16 %v1786
      %v1927 = vunpack.c.h.b16 %v1786
      %v1928 = vunpack.c.l.b16 %v1787
      %v1929 = vunpack.c.h.b16 %v1787
      %v1930 = vunpack.c.l.b16 %v1788
      %v1931 = vunpack.c.h.b16 %v1788
      %v1932 = vunpack.c.l.b16 %v1789
      %v1933 = vunpack.c.h.b16 %v1789
      %v1934 = vunpack.c.l.b16 %v1790
      %v1935 = vunpack.c.h.b16 %v1790
      %v1936 = vunpack.c.l.b16 %v1791
      %v1937 = vunpack.c.h.b16 %v1791
      %v1938 = vunpack.c.l.b16 %v1792
      %v1939 = vunpack.c.h.b16 %v1792
      %v1940 = vunpack.c.l.b16 %v1793
      %v1941 = vunpack.c.h.b16 %v1793
      %v1942 = vunpack.c.l.b16 %v1794
      %v1943 = vunpack.c.h.b16 %v1794
      %v1944 = vunpack.c.l.b16 %v1795
      %v1945 = vunpack.c.h.b16 %v1795
      %v1946 = vunpack.c.l.b16 %v1796
      %v1947 = vunpack.c.h.b16 %v1796
      %v1948 = vunpack.c.l.b16 %v1797
      %v1949 = vunpack.c.h.b16 %v1797
      %v1950 = vunpack.c.l.b16 %v1798
      %v1951 = vunpack.c.h.b16 %v1798
      %v1952 = vunpack.c.l.b16 %v1799
      %v1953 = vunpack.c.h.b16 %v1799
      %v1954 = vunpack.c.l.b16 %v1800
      %v1955 = vunpack.c.h.b16 %v1800
      %v1956 = vunpack.c.l.b16 %v1801
      %v1957 = vunpack.c.h.b16 %v1801
      %v1958 = vunpack.c.l.b16 %v1802
      %v1959 = vunpack.c.h.b16 %v1802
      %v1960 = vunpack.c.l.b16 %v1803
      %v1961 = vunpack.c.h.b16 %v1803
      %v1962 = vunpack.c.l.b16 %v1804
      %v1963 = vunpack.c.h.b16 %v1804
      %v1964 = vunpack.c.l.b16 %v1805
      %v1965 = vunpack.c.h.b16 %v1805
      %v1966 = vunpack.c.l.b16 %v1806
      %v1967 = vunpack.c.h.b16 %v1806
      %v1968 = vunpack.c.l.b16 %v1807
      %v1969 = vunpack.c.h.b16 %v1807
      %v1970 = vunpack.c.l.b16 %v1808
      %v1971 = vunpack.c.h.b16 %v1808
      %v1972 = vunpack.c.l.b16 %v1809
      %v1973 = vunpack.c.h.b16 %v1809
      %v1974 = vunpack.c.l.b16 %v1810
      %v1975 = vunpack.c.h.b16 %v1810
      %v1976 = vunpack.c.l.b16 %v1811
      %v1977 = vunpack.c.h.b16 %v1811
      %v1978 = vunpack.c.l.b16 %v1812
      %v1979 = vunpack.c.h.b16 %v1812
      %v1980 = vunpack.c.l.b16 %v1813
      %v1981 = vunpack.c.h.b16 %v1813
      %v1982 = vunpack.c.l.b16 %v1814
      %v1983 = vunpack.c.h.b16 %v1814
      %v1984 = vunpack.c.l.b16 %v1815
      %v1985 = vunpack.c.h.b16 %v1815
      %v1986 = vunpack.c.l.b16 %v1816
      %v1987 = vunpack.c.h.b16 %v1816
      %v1988 = vunpack.c.l.b16 %v1817
      %v1989 = vunpack.c.h.b16 %v1817
      %v1990 = vunpack.c.l.b16 %v1818
      %v1991 = vunpack.c.h.b16 %v1818
      %v1992 = vunpack.c.l.b16 %v1819
      %v1993 = vunpack.c.h.b16 %v1819
      %v1994 = vunpack.c.l.b16 %v1820
      %v1995 = vunpack.c.h.b16 %v1820
      %v1996 = vunpack.c.l.b16 %v1821
      %v1997 = vunpack.c.h.b16 %v1821
      %v1998 = vunpack.c.l.b16 %v1822
      %v1999 = vunpack.c.h.b16 %v1822
      %v2000 = vunpack.c.l.b16 %v1823
      %v2001 = vunpack.c.h.b16 %v1823
      %v2002 = vunpack.c.l.b16 %v1824
      %v2003 = vunpack.c.h.b16 %v1824
      %v2004 = vunpack.c.l.b16 %v1825
      %v2005 = vunpack.c.h.b16 %v1825
      %v2006 = vunpack.c.l.b16 %v1826
      %v2007 = vunpack.c.h.b16 %v1826
      %v2008 = vunpack.c.l.b16 %v1827
      %v2009 = vunpack.c.h.b16 %v1827
      %v2010 = vunpack.c.l.b16 %v1828
      %v2011 = vunpack.c.h.b16 %v1828
      %v2012 = vunpack.c.l.b16 %v1829
      %v2013 = vunpack.c.h.b16 %v1829
      %v2014 = vunpack.c.l.b16 %v1830
      %v2015 = vunpack.c.h.b16 %v1830
      %v2016 = vunpack.c.l.b16 %v1831
      %v2017 = vunpack.c.h.b16 %v1831
      %v2018 = vunpack.c.l.b16 %v1832
      %v2019 = vunpack.c.h.b16 %v1832
      %v2020 = vunpack.c.l.b16 %v1833
      %v2021 = vunpack.c.h.b16 %v1833
      %v2022 = vunpack.c.l.b16 %v1834
      %v2023 = vunpack.c.h.b16 %v1834
      %v2024 = vunpack.c.l.b16 %v1835
      %v2025 = vunpack.c.h.b16 %v1835
      %v2026 = vunpack.c.l.b16 %v1836
      %v2027 = vunpack.c.h.b16 %v1836
      %v2028 = vunpack.c.l.b16 %v1837
      %v2029 = vunpack.c.h.b16 %v1837
      %v2030 = vpack.c.b16 %v1902, %v1902
      %v2031 = vpack.c.b16 %v1903, %v1903
      %v2032 = vpack.c.b16 %v1904, %v1904
      %v2033 = vpack.c.b16 %v1905, %v1905
      %v2034 = vpack.c.b16 %v1906, %v1906
      %v2035 = vpack.c.b16 %v1907, %v1907
      %v2036 = vpack.c.b16 %v1908, %v1908
      %v2037 = vpack.c.b16 %v1909, %v1909
      %v2038 = vpack.c.b16 %v1910, %v1910
      %v2039 = vpack.c.b16 %v1911, %v1911
      %v2040 = vpack.c.b16 %v1912, %v1912
      %v2041 = vpack.c.b16 %v1913, %v1913
      %v2042 = vpack.c.b16 %v1914, %v1914
      %v2043 = vpack.c.b16 %v1915, %v1915
      %v2044 = vpack.c.b16 %v1916, %v1916
      %v2045 = vpack.c.b16 %v1917, %v1917
      %v2046 = vpack.c.b16 %v1918, %v1918
      %v2047 = vpack.c.b16 %v1919, %v1919
      %v2048 = vpack.c.b16 %v1920, %v1920
      %v2049 = vpack.c.b16 %v1921, %v1921
      %v2050 = vpack.c.b16 %v1922, %v1922
      %v2051 = vpack.c.b16 %v1923, %v1923
      %v2052 = vpack.c.b16 %v1924, %v1924
      %v2053 = vpack.c.b16 %v1925, %v1925
      %v2054 = vpack.c.b16 %v1926, %v1926
      %v2055 = vpack.c.b16 %v1927, %v1927
      %v2056 = vpack.c.b16 %v1928, %v1928
      %v2057 = vpack.c.b16 %v1929, %v1929
      %v2058 = vpack.c.b16 %v1930, %v1930
      %v2059 = vpack.c.b16 %v1931, %v1931
      %v2060 = vpack.c.b16 %v1932, %v1932
      %v2061 = vpack.c.b16 %v1933, %v1933
      %v2062 = vpack.c.b16 %v1934, %v1934
      %v2063 = vpack.c.b16 %v1935, %v1935
      %v2064 = vpack.c.b16 %v1936, %v1936
      %v2065 = vpack.c.b16 %v1937, %v1937
      %v2066 = vpack.c.b16 %v1938, %v1938
      %v2067 = vpack.c.b16 %v1939, %v1939
      %v2068 = vpack.c.b16 %v1940, %v1940
      %v2069 = vpack.c.b16 %v1941, %v1941
      %v2070 = vpack.c.b16 %v1942, %v1942
      %v2071 = vpack.c.b16 %v1943, %v1943
      %v2072 = vpack.c.b16 %v1944, %v1944
      %v2073 = vpack.c.b16 %v1945, %v1945
      %v2074 = vpack.c.b16 %v1946, %v1946
      %v2075 = vpack.c.b16 %v1947, %v1947
      %v2076 = vpack.c.b16 %v1948, %v1948
      %v2077 = vpack.c.b16 %v1949, %v1949
      %v2078 = vpack.c.b16 %v1950, %v1950
      %v2079 = vpack.c.b16 %v1951, %v1951
      %v2080 = vpack.c.b16 %v1952, %v1952
      %v2081 = vpack.c.b16 %v1953, %v1953
      %v2082 = vpack.c.b16 %v1954, %v1954
      %v2083 = vpack.c.b16 %v1955, %v1955
      %v2084 = vpack.c.b16 %v1956, %v1956
      %v2085 = vpack.c.b16 %v1957, %v1957
      %v2086 = vpack.c.b16 %v1958, %v1958
      %v2087 = vpack.c.b16 %v1959, %v1959
      %v2088 = vpack.c.b16 %v1960, %v1960
      %v2089 = vpack.c.b16 %v1961, %v1961
      %v2090 = vpack.c.b16 %v1962, %v1962
      %v2091 = vpack.c.b16 %v1963, %v1963
      %v2092 = vpack.c.b16 %v1964, %v1964
      %v2093 = vpack.c.b16 %v1965, %v1965
      %v2094 = vpack.c.b16 %v1966, %v1966
      %v2095 = vpack.c.b16 %v1967, %v1967
      %v2096 = vpack.c.b16 %v1968, %v1968
      %v2097 = vpack.c.b16 %v1969, %v1969
      %v2098 = vpack.c.b16 %v1970, %v1970
      %v2099 = vpack.c.b16 %v1971, %v1971
      %v2100 = vpack.c.b16 %v1972, %v1972
      %v2101 = vpack.c.b16 %v1973, %v1973
      %v2102 = vpack.c.b16 %v1974, %v1974
      %v2103 = vpack.c.b16 %v1975, %v1975
      %v2104 = vpack.c.b16 %v1976, %v1976
      %v2105 = vpack.c.b16 %v1977, %v1977
      %v2106 = vpack.c.b16 %v1978, %v1978
      %v2107 = vpack.c.b16 %v1979, %v1979
      %v2108 = vpack.c.b16 %v1980, %v1980
      %v2109 = vpack.c.b16 %v1981, %v1981
      %v2110 = vpack.c.b16 %v1982, %v1982
      %v2111 = vpack.c.b16 %v1983, %v1983
      %v2112 = vpack.c.b16 %v1984, %v1984
      %v2113 = vpack.c.b16 %v1985, %v1985
      %v2114 = vpack.c.b16 %v1986, %v1986
      %v2115 = vpack.c.b16 %v1987, %v1987
      %v2116 = vpack.c.b16 %v1988, %v1988
      %v2117 = vpack.c.b16 %v1989, %v1989
      %v2118 = vpack.c.b16 %v1990, %v1990
      %v2119 = vpack.c.b16 %v1991, %v1991
      %v2120 = vpack.c.b16 %v1992, %v1992
      %v2121 = vpack.c.b16 %v1993, %v1993
      %v2122 = vpack.c.b16 %v1994, %v1994
      %v2123 = vpack.c.b16 %v1995, %v1995
      %v2124 = vpack.c.b16 %v1996, %v1996
      %v2125 = vpack.c.b16 %v1997, %v1997
      %v2126 = vpack.c.b16 %v1998, %v1998
      %v2127 = vpack.c.b16 %v1999, %v1999
      %v2128 = vpack.c.b16 %v2000, %v2000
      %v2129 = vpack.c.b16 %v2001, %v2001
      %v2130 = vpack.c.b16 %v2002, %v2002
      %v2131 = vpack.c.b16 %v2003, %v2003
      %v2132 = vpack.c.b16 %v2004, %v2004
      %v2133 = vpack.c.b16 %v2005, %v2005
      %v2134 = vpack.c.b16 %v2006, %v2006
      %v2135 = vpack.c.b16 %v2007, %v2007
      %v2136 = vpack.c.b16 %v2008, %v2008
      %v2137 = vpack.c.b16 %v2009, %v2009
      %v2138 = vpack.c.b16 %v2010, %v2010
      %v2139 = vpack.c.b16 %v2011, %v2011
      %v2140 = vpack.c.b16 %v2012, %v2012
      %v2141 = vpack.c.b16 %v2013, %v2013
      %v2142 = vpack.c.b16 %v2014, %v2014
      %v2143 = vpack.c.b16 %v2015, %v2015
      %v2144 = vpack.c.b16 %v2016, %v2016
      %v2145 = vpack.c.b16 %v2017, %v2017
      %v2146 = vpack.c.b16 %v2018, %v2018
      %v2147 = vpack.c.b16 %v2019, %v2019
      %v2148 = vpack.c.b16 %v2020, %v2020
      %v2149 = vpack.c.b16 %v2021, %v2021
      %v2150 = vpack.c.b16 %v2022, %v2022
      %v2151 = vpack.c.b16 %v2023, %v2023
      %v2152 = vpack.c.b16 %v2024, %v2024
      %v2153 = vpack.c.b16 %v2025, %v2025
      %v2154 = vpack.c.b16 %v2026, %v2026
      %v2155 = vpack.c.b16 %v2027, %v2027
      %v2156 = vpack.c.b16 %v2028, %v2028
      %v2157 = vpack.c.b16 %v2029, %v2029
      %2286 = vst [vmem:[%s172] sm:$0xf] %v2030
      %2287 = vst [vmem:[%s172 + $0x4] sm:$0xf] %v2031
      %2288 = vst [vmem:[%s172 + $0x8] sm:$0xf] %v2032
      %2289 = vst [vmem:[%s172 + $0xc] sm:$0xf] %v2033
      %2290 = vst [vmem:[%s172 + $0x10] sm:$0xf] %v2034
      %2291 = vst [vmem:[%s172 + $0x14] sm:$0xf] %v2035
      %2292 = vst [vmem:[%s172 + $0x18] sm:$0xf] %v2036
      %2293 = vst [vmem:[%s172 + $0x1c] sm:$0xf] %v2037
      %2294 = vst [vmem:[%s172 + $0x20] sm:$0xf] %v2038
      %2295 = vst [vmem:[%s172 + $0x24] sm:$0xf] %v2039
      %2296 = vst [vmem:[%s172 + $0x28] sm:$0xf] %v2040
      %2297 = vst [vmem:[%s172 + $0x2c] sm:$0xf] %v2041
      %2298 = vst [vmem:[%s172 + $0x30] sm:$0xf] %v2042
      %2299 = vst [vmem:[%s172 + $0x34] sm:$0xf] %v2043
      %2300 = vst [vmem:[%s172 + $0x38] sm:$0xf] %v2044
      %2301 = vst [vmem:[%s172 + $0x3c] sm:$0xf] %v2045
      %2302 = vst [vmem:[%s172 + $0x40] sm:$0xf] %v2046
      %2303 = vst [vmem:[%s172 + $0x44] sm:$0xf] %v2047
      %2304 = vst [vmem:[%s172 + $0x48] sm:$0xf] %v2048
      %2305 = vst [vmem:[%s172 + $0x4c] sm:$0xf] %v2049
      %2306 = vst [vmem:[%s172 + $0x50] sm:$0xf] %v2050
      %2307 = vst [vmem:[%s172 + $0x54] sm:$0xf] %v2051
      %2308 = vst [vmem:[%s172 + $0x58] sm:$0xf] %v2052
      %2309 = vst [vmem:[%s172 + $0x5c] sm:$0xf] %v2053
      %2310 = vst [vmem:[%s172 + $0x60] sm:$0xf] %v2054
      %2311 = vst [vmem:[%s172 + $0x64] sm:$0xf] %v2055
      %2312 = vst [vmem:[%s172 + $0x68] sm:$0xf] %v2056
      %2313 = vst [vmem:[%s172 + $0x6c] sm:$0xf] %v2057
      %2314 = vst [vmem:[%s172 + $0x70] sm:$0xf] %v2058
      %2315 = vst [vmem:[%s172 + $0x74] sm:$0xf] %v2059
      %2316 = vst [vmem:[%s172 + $0x78] sm:$0xf] %v2060
      %2317 = vst [vmem:[%s172 + $0x7c] sm:$0xf] %v2061
      %2318 = vst [vmem:[%s172 + $0x80] sm:$0xf] %v2062
      %2319 = vst [vmem:[%s172 + $0x84] sm:$0xf] %v2063
      %2320 = vst [vmem:[%s172 + $0x88] sm:$0xf] %v2064
      %2321 = vst [vmem:[%s172 + $0x8c] sm:$0xf] %v2065
      %2322 = vst [vmem:[%s172 + $0x90] sm:$0xf] %v2066
      %2323 = vst [vmem:[%s172 + $0x94] sm:$0xf] %v2067
      %2324 = vst [vmem:[%s172 + $0x98] sm:$0xf] %v2068
      %2325 = vst [vmem:[%s172 + $0x9c] sm:$0xf] %v2069
      %2326 = vst [vmem:[%s172 + $0xa0] sm:$0xf] %v2070
      %2327 = vst [vmem:[%s172 + $0xa4] sm:$0xf] %v2071
      %2328 = vst [vmem:[%s172 + $0xa8] sm:$0xf] %v2072
      %2329 = vst [vmem:[%s172 + $0xac] sm:$0xf] %v2073
      %2330 = vst [vmem:[%s172 + $0xb0] sm:$0xf] %v2074
      %2331 = vst [vmem:[%s172 + $0xb4] sm:$0xf] %v2075
      %2332 = vst [vmem:[%s172 + $0xb8] sm:$0xf] %v2076
      %2333 = vst [vmem:[%s172 + $0xbc] sm:$0xf] %v2077
      %2334 = vst [vmem:[%s172 + $0xc0] sm:$0xf] %v2078
      %2335 = vst [vmem:[%s172 + $0xc4] sm:$0xf] %v2079
      %2336 = vst [vmem:[%s172 + $0xc8] sm:$0xf] %v2080
      %2337 = vst [vmem:[%s172 + $0xcc] sm:$0xf] %v2081
      %2338 = vst [vmem:[%s172 + $0xd0] sm:$0xf] %v2082
      %2339 = vst [vmem:[%s172 + $0xd4] sm:$0xf] %v2083
      %2340 = vst [vmem:[%s172 + $0xd8] sm:$0xf] %v2084
      %2341 = vst [vmem:[%s172 + $0xdc] sm:$0xf] %v2085
      %2342 = vst [vmem:[%s172 + $0xe0] sm:$0xf] %v2086
      %2343 = vst [vmem:[%s172 + $0xe4] sm:$0xf] %v2087
      %2344 = vst [vmem:[%s172 + $0xe8] sm:$0xf] %v2088
      %2345 = vst [vmem:[%s172 + $0xec] sm:$0xf] %v2089
      %2346 = vst [vmem:[%s172 + $0xf0] sm:$0xf] %v2090
      %2347 = vst [vmem:[%s172 + $0xf4] sm:$0xf] %v2091
      %2348 = vst [vmem:[%s172 + $0xf8] sm:$0xf] %v2092
      %2349 = vst [vmem:[%s172 + $0xfc] sm:$0xf] %v2093
      %2350 = vst [vmem:[%s172 + $0x100] sm:$0xf] %v2094
      %2351 = vst [vmem:[%s172 + $0x104] sm:$0xf] %v2095
      %2352 = vst [vmem:[%s172 + $0x108] sm:$0xf] %v2096
      %2353 = vst [vmem:[%s172 + $0x10c] sm:$0xf] %v2097
      %2354 = vst [vmem:[%s172 + $0x110] sm:$0xf] %v2098
      %2355 = vst [vmem:[%s172 + $0x114] sm:$0xf] %v2099
      %2356 = vst [vmem:[%s172 + $0x118] sm:$0xf] %v2100
      %2357 = vst [vmem:[%s172 + $0x11c] sm:$0xf] %v2101
      %2358 = vst [vmem:[%s172 + $0x120] sm:$0xf] %v2102
      %2359 = vst [vmem:[%s172 + $0x124] sm:$0xf] %v2103
      %2360 = vst [vmem:[%s172 + $0x128] sm:$0xf] %v2104
      %2361 = vst [vmem:[%s172 + $0x12c] sm:$0xf] %v2105
      %2362 = vst [vmem:[%s172 + $0x130] sm:$0xf] %v2106
      %2363 = vst [vmem:[%s172 + $0x134] sm:$0xf] %v2107
      %2364 = vst [vmem:[%s172 + $0x138] sm:$0xf] %v2108
      %2365 = vst [vmem:[%s172 + $0x13c] sm:$0xf] %v2109
      %2366 = vst [vmem:[%s172 + $0x140] sm:$0xf] %v2110
      %2367 = vst [vmem:[%s172 + $0x144] sm:$0xf] %v2111
      %2368 = vst [vmem:[%s172 + $0x148] sm:$0xf] %v2112
      %2369 = vst [vmem:[%s172 + $0x14c] sm:$0xf] %v2113
      %2370 = vst [vmem:[%s172 + $0x150] sm:$0xf] %v2114
      %2371 = vst [vmem:[%s172 + $0x154] sm:$0xf] %v2115
      %2372 = vst [vmem:[%s172 + $0x158] sm:$0xf] %v2116
      %2373 = vst [vmem:[%s172 + $0x15c] sm:$0xf] %v2117
      %2374 = vst [vmem:[%s172 + $0x160] sm:$0xf] %v2118
      %2375 = vst [vmem:[%s172 + $0x164] sm:$0xf] %v2119
      %2376 = vst [vmem:[%s172 + $0x168] sm:$0xf] %v2120
      %2377 = vst [vmem:[%s172 + $0x16c] sm:$0xf] %v2121
      %2378 = vst [vmem:[%s172 + $0x170] sm:$0xf] %v2122
      %2379 = vst [vmem:[%s172 + $0x174] sm:$0xf] %v2123
      %2380 = vst [vmem:[%s172 + $0x178] sm:$0xf] %v2124
      %2381 = vst [vmem:[%s172 + $0x17c] sm:$0xf] %v2125
      %2382 = vst [vmem:[%s172 + $0x180] sm:$0xf] %v2126
      %2383 = vst [vmem:[%s172 + $0x184] sm:$0xf] %v2127
      %2384 = vst [vmem:[%s172 + $0x188] sm:$0xf] %v2128
      %2385 = vst [vmem:[%s172 + $0x18c] sm:$0xf] %v2129
      %2386 = vst [vmem:[%s172 + $0x190] sm:$0xf] %v2130
      %2387 = vst [vmem:[%s172 + $0x194] sm:$0xf] %v2131
      %2388 = vst [vmem:[%s172 + $0x198] sm:$0xf] %v2132
      %2389 = vst [vmem:[%s172 + $0x19c] sm:$0xf] %v2133
      %2390 = vst [vmem:[%s172 + $0x1a0] sm:$0xf] %v2134
      %2391 = vst [vmem:[%s172 + $0x1a4] sm:$0xf] %v2135
      %2392 = vst [vmem:[%s172 + $0x1a8] sm:$0xf] %v2136
      %2393 = vst [vmem:[%s172 + $0x1ac] sm:$0xf] %v2137
      %2394 = vst [vmem:[%s172 + $0x1b0] sm:$0xf] %v2138
      %2395 = vst [vmem:[%s172 + $0x1b4] sm:$0xf] %v2139
      %2396 = vst [vmem:[%s172 + $0x1b8] sm:$0xf] %v2140
      %2397 = vst [vmem:[%s172 + $0x1bc] sm:$0xf] %v2141
      %2398 = vst [vmem:[%s172 + $0x1c0] sm:$0xf] %v2142
      %2399 = vst [vmem:[%s172 + $0x1c4] sm:$0xf] %v2143
      %2400 = vst [vmem:[%s172 + $0x1c8] sm:$0xf] %v2144
      %2401 = vst [vmem:[%s172 + $0x1cc] sm:$0xf] %v2145
      %2402 = vst [vmem:[%s172 + $0x1d0] sm:$0xf] %v2146
      %2403 = vst [vmem:[%s172 + $0x1d4] sm:$0xf] %v2147
      %2404 = vst [vmem:[%s172 + $0x1d8] sm:$0xf] %v2148
      %2405 = vst [vmem:[%s172 + $0x1dc] sm:$0xf] %v2149
      %2406 = vst [vmem:[%s172 + $0x1e0] sm:$0xf] %v2150
      %2407 = vst [vmem:[%s172 + $0x1e4] sm:$0xf] %v2151
      %2408 = vst [vmem:[%s172 + $0x1e8] sm:$0xf] %v2152
      %2409 = vst [vmem:[%s172 + $0x1ec] sm:$0xf] %v2153
      %2410 = vst [vmem:[%s172 + $0x1f0] sm:$0xf] %v2154
      %2411 = vst [vmem:[%s172 + $0x1f4] sm:$0xf] %v2155
      %2412 = vst [vmem:[%s172 + $0x1f8] sm:$0xf] %v2156
      %2413 = vst [vmem:[%s172 + $0x1fc] sm:$0xf] %v2157
      %s2414 = smul.u32 128, %s14
      %p2415 = scmp.lt.s32.totalorder %s2414, 255
      %s2416 = scalar_select %p2415, %s2414, 255
      %s2417 = smul.addr %s2416, 4
      %s2418 = scalar_lea.vmem %s3, %s2417
      // Predicated region
      $region33: #{custom_cnn_forward.4} parent=31 // pred_check
        %p2419 = pneg %p100
      $region34: #{custom_cnn_forward.4} parent=31 // pred_check_branch
        %2421 = sbr.rel (%p2419) target = $region36
      $region35: #{custom_cnn_forward.4} parent=31 // pred_region
        %s2422 = smul.u32 128, %s14
      $region36: #{custom_cnn_forward.4} parent=31 // pred_fallthru
        _
    $region32: #{custom_cnn_forward.4} parent=5 // pred_fallthru
      _
    %p2423 = scmp.le.s32.totalorder 2, %s9
    // Predicated region
    $region37: #{custom_cnn_forward.4} parent=5 // pred_check
      %p2424 = pneg %p2423
    $region38: #{custom_cnn_forward.4} parent=5 // pred_check_branch
      %2426 = sbr.rel (%p2424) target = $region40
    $region39: #{custom_cnn_forward.4} parent=5 // pred_region
      %s2427 = ssub.s32 %s9, 2
      // Predicated region
      $region41: #{custom_cnn_forward.4} parent=39 // pred_check
        %p2428 = pneg %p106
      $region42: #{custom_cnn_forward.4} parent=39 // pred_check_branch
        %2430 = sbr.rel (%p2428) target = $region44
      $region43: #{custom_cnn_forward.4} parent=39 // pred_region
        %s2431 = smul.u32 128, %s15
        %p2432 = scmp.lt.s32.totalorder %s2431, 255
        %s2433 = scalar_select %p2432, %s2431, 255
        %s2434 = smul.addr %s2433, 4
        %s2435 = scalar_lea.vmem %s3, %s2434
      $region44: #{custom_cnn_forward.4} parent=39 // pred_fallthru
        _
    $region40: #{custom_cnn_forward.4} parent=5 // pred_fallthru
      _
  $region6: #{custom_cnn_forward.4} parent=0 // loop_footer
    %s13 = sadd.s32 1, %s9
  $region7: #{custom_cnn_forward.4} parent=0 // loop_footer_branch
    %8 = sbr.rel target = $region3
  $region8: #{custom_cnn_forward.4} parent=0 // loop_exit
    _

// kernel: custom_cnn_forward.5
$region0: #{custom_cnn_forward.5}
  #allocation0 [shape = 'u32[]', space=smem, size = 0x4, offset = 0x4, fixed_abs, tag = 'smem constant byte address 0x4 - core index']
  #allocation1 [shape = 'u32[144,128]{1,0:T(1,128)}', space=vmem, size = 0x12000, scoped, tag = 'internal scratch']
  %s0 = inlined_call_operand.vmem [shape: bf16[512,180], index: 0, kind: input, shape index: {}]
  %s1 = inlined_call_operand.vmem [shape: bf16[180,128], index: 1, kind: input, shape index: {}]
  %s2 = inlined_call_operand.vmem [shape: f32[1,128], index: 2, kind: input, shape index: {}]
  %s3 = inlined_call_operand.vmem [shape: bf16[512,128], index: 3, kind: output, shape index: {}]
  %s4 = sld [smem:[#allocation0]]
  $region45: #{custom_cnn_forward.5} parent=0
    _
  %s6 = ssub.s32 1, %s4
  %s7 = scalar_select 0, %s6, %s4
  loop: start=0, step=1, limit=4
  $region2: #{custom_cnn_forward.5} parent=0 // loop_pre_header
    _
  $region3: #{custom_cnn_forward.5} parent=0 // loop_header
    %s9 = sphi 0, %s13
    %p10 = scmp.ge.s32.totalorder %s9, 4
    %s19 = sphi 0, %s21
    %s22 = sphi 0, %s19
    %s23 = sphi 0, %s22
    %s39 = sphi 0, %s23
    %s43 = sphi 0, %s43
    %s45 = sphi 0, %s43
    %s46 = sphi 0, %s45
    %s60 = sphi 0, %s46
    %s64 = sphi 0, %s64
    %s66 = sphi 0, %s64
    %s67 = sphi 0, %s66
    %s81 = sphi 0, %s67
    %s87 = sphi 0, %s89
    %s90 = sphi 0, %s87
    %s91 = sphi 0, %s90
    %s107 = sphi 0, %s91
  $region4: #{custom_cnn_forward.5} parent=0 // loop_header_branch
    %12 = sbr.rel (%p10) target = $region8
  $region5: #{custom_cnn_forward.5} parent=0 // loop_body
    %s14 = ssub.s32 %s9, 1
    %s15 = ssub.s32 %s9, 2
    %s16 = sadd.s32 %s9, 1
    %s17 = ssub.s32 %s9, %s16
    %p18 = scmp.eq.s32.totalorder %s17, 0
    %s20 = sadd.s32 %s19, 1
    %s21 = scalar_select %p18, %s19, %s20
    %p24 = pneg %p18
    %p25 = scmp.eq.s32.totalorder %s9, 1
    %p26 = por %p24, %p25
    %p27 = scmp.ne.s32.totalorder %s19, %s22
    %p28 = scmp.eq.s32.totalorder %s9, 0
    %p29 = por %p27, %p28
    %p30 = scmp.ne.s32.totalorder %s19, %s22
    %p31 = scmp.eq.s32.totalorder %s14, 1
    %p32 = por %p30, %p31
    %p33 = scmp.ne.s32.totalorder %s22, %s23
    %p34 = scmp.eq.s32.totalorder %s14, 0
    %p35 = por %p33, %p34
    %p36 = scmp.ne.s32.totalorder %s22, %s23
    %p37 = scmp.eq.s32.totalorder %s15, 1
    %p38 = por %p36, %p37
    %p40 = scmp.ne.s32.totalorder %s23, %s39
    %p41 = scmp.eq.s32.totalorder %s15, 0
    %p42 = por %p40, %p41
    %s44 = sadd.s32 %s43, 1
    %p47 = scmp.eq.s32.totalorder %s9, 1
    %p48 = scmp.ne.s32.totalorder %s43, %s45
    %p49 = scmp.eq.s32.totalorder %s9, 0
    %p50 = por %p48, %p49
    %p51 = scmp.ne.s32.totalorder %s43, %s45
    %p52 = scmp.eq.s32.totalorder %s14, 1
    %p53 = por %p51, %p52
    %p54 = scmp.ne.s32.totalorder %s45, %s46
    %p55 = scmp.eq.s32.totalorder %s14, 0
    %p56 = por %p54, %p55
    %p57 = scmp.ne.s32.totalorder %s45, %s46
    %p58 = scmp.eq.s32.totalorder %s15, 1
    %p59 = por %p57, %p58
    %p61 = scmp.ne.s32.totalorder %s46, %s60
    %p62 = scmp.eq.s32.totalorder %s15, 0
    %p63 = por %p61, %p62
    %s65 = sadd.s32 %s64, 1
    %p68 = scmp.eq.s32.totalorder %s9, 1
    %p69 = scmp.ne.s32.totalorder %s64, %s66
    %p70 = scmp.eq.s32.totalorder %s9, 0
    %p71 = por %p69, %p70
    %p72 = scmp.ne.s32.totalorder %s64, %s66
    %p73 = scmp.eq.s32.totalorder %s14, 1
    %p74 = por %p72, %p73
    %p75 = scmp.ne.s32.totalorder %s66, %s67
    %p76 = scmp.eq.s32.totalorder %s14, 0
    %p77 = por %p75, %p76
    %p78 = scmp.ne.s32.totalorder %s66, %s67
    %p79 = scmp.eq.s32.totalorder %s15, 1
    %p80 = por %p78, %p79
    %p82 = scmp.ne.s32.totalorder %s67, %s81
    %p83 = scmp.eq.s32.totalorder %s15, 0
    %p84 = por %p82, %p83
    %s85 = ssub.s32 %s9, %s16
    %p86 = scmp.eq.s32.totalorder %s85, 0
    %s88 = sadd.s32 %s87, 1
    %s89 = scalar_select %p86, %s87, %s88
    %p92 = pneg %p86
    %p93 = scmp.eq.s32.totalorder %s9, 1
    %p94 = por %p92, %p93
    %p95 = scmp.ne.s32.totalorder %s87, %s90
    %p96 = scmp.eq.s32.totalorder %s9, 0
    %p97 = por %p95, %p96
    %p98 = scmp.ne.s32.totalorder %s87, %s90
    %p99 = scmp.eq.s32.totalorder %s14, 1
    %p100 = por %p98, %p99
    %p101 = scmp.ne.s32.totalorder %s90, %s91
    %p102 = scmp.eq.s32.totalorder %s14, 0
    %p103 = por %p101, %p102
    %p104 = scmp.ne.s32.totalorder %s90, %s91
    %p105 = scmp.eq.s32.totalorder %s15, 1
    %p106 = por %p104, %p105
    %p108 = scmp.ne.s32.totalorder %s91, %s107
    %p109 = scmp.eq.s32.totalorder %s15, 0
    %p110 = por %p108, %p109
    %p111 = scmp.le.s32.totalorder 1, %s9
    %p112 = scmp.lt.s32.totalorder %s9, 3
    %p113 = pnand %p111, %p112
    %p114 = pneg %p113
    // Predicated region
    $region9: #{custom_cnn_forward.5} parent=5 // pred_check
      _
    $region10: #{custom_cnn_forward.5} parent=5 // pred_check_branch
      %116 = sbr.rel (%p113) target = $region12
    $region11: #{custom_cnn_forward.5} parent=5 // pred_region
      %s117 = ssub.s32 %s9, 1
      // Predicated region
      $region13: #{custom_cnn_forward.5} parent=11 // pred_check
        %p118 = pneg %p56
      $region14: #{custom_cnn_forward.5} parent=11 // pred_check_branch
        %120 = sbr.rel (%p118) target = $region16
      $region15: #{custom_cnn_forward.5} parent=11 // pred_region
        _
      $region16: #{custom_cnn_forward.5} parent=11 // pred_fallthru
        _
      // Predicated region
      $region17: #{custom_cnn_forward.5} parent=11 // pred_check
        %p121 = pneg %p77
      $region18: #{custom_cnn_forward.5} parent=11 // pred_check_branch
        %123 = sbr.rel (%p121) target = $region20
      $region19: #{custom_cnn_forward.5} parent=11 // pred_region
        _
      $region20: #{custom_cnn_forward.5} parent=11 // pred_fallthru
        _
    $region12: #{custom_cnn_forward.5} parent=5 // pred_fallthru
      _
    %p124 = scmp.lt.s32.totalorder %s9, 2
    // Predicated region
    $region21: #{custom_cnn_forward.5} parent=5 // pred_check
      %p125 = pneg %p124
    $region22: #{custom_cnn_forward.5} parent=5 // pred_check_branch
      %127 = sbr.rel (%p125) target = $region24
    $region23: #{custom_cnn_forward.5} parent=5 // pred_region
      // Predicated region
      $region25: #{custom_cnn_forward.5} parent=23 // pred_check
        %p128 = pneg %p29
      $region26: #{custom_cnn_forward.5} parent=23 // pred_check_branch
        %130 = sbr.rel (%p128) target = $region28
      $region27: #{custom_cnn_forward.5} parent=23 // pred_region
        %s131 = smul.u32 32, %s9
        %p132 = scmp.lt.s32.totalorder %s131, 63
        %s133 = scalar_select %p132, %s131, 63
        %s134 = smul.addr %s133, 2
        %s135 = smul.addr %s134, 4
        %s136 = scalar_lea.vmem %s0, %s135
        %s137 = smul.u32 32, %s9
      $region28: #{custom_cnn_forward.5} parent=23 // pred_fallthru
        _
    $region24: #{custom_cnn_forward.5} parent=5 // pred_fallthru
      _
    %p138 = scmp.le.s32.totalorder 1, %s9
    %p139 = scmp.lt.s32.totalorder %s9, 3
    %p140 = pnand %p138, %p139
    %p141 = pneg %p140
    // Predicated region
    $region29: #{custom_cnn_forward.5} parent=5 // pred_check
      _
    $region30: #{custom_cnn_forward.5} parent=5 // pred_check_branch
      %143 = sbr.rel (%p140) target = $region32
    $region31: #{custom_cnn_forward.5} parent=5 // pred_region
      %s144 = ssub.s32 %s9, 1
      %s145 = smul.u32 32, %s14
      %p146 = scmp.lt.s32.totalorder %s145, 63
      %s147 = scalar_select %p146, %s145, 63
      %s148 = smul.addr %s147, 2
      %s149 = smul.addr %s148, 4
      %s150 = scalar_lea.vmem %s0, %s149
      %p151 = pneg %p35
      %p152 = pneg %p32
      %p153 = pneg %p56
      %p154 = pneg %p53
      %p155 = pneg %p77
      %p156 = pneg %p74
      %p157 = pneg %p103
      %p158 = pneg %p100
      %s159 = smul.u32 32, %s14
      %p160 = scmp.lt.s32.totalorder %s159, 63
      %s161 = scalar_select %p160, %s159, 63
      %s162 = smul.addr %s161, 4
      %s163 = scalar_lea.vmem %s3, %s162
      %s164 = smul.u32 32, %s14
      %p165 = scmp.lt.s32.totalorder %s164, 63
      %s166 = scalar_select %p165, %s164, 63
      %s167 = smul.addr %s166, 2
      %s168 = smul.addr %s167, 4
      %s169 = scalar_lea.vmem %s0, %s168
      %s170 = smul.u32 32, %s14
      %s171 = smul.u32 32, %s14
      %p172 = scmp.lt.s32.totalorder %s171, 63
      %s173 = scalar_select %p172, %s171, 63
      %s174 = smul.addr %s173, 4
      %s175 = scalar_lea.vmem %s3, %s174
      %s176 = smul.u32 32, %s14
      %v178 = vld [vmem:[%s169] sm:$0xff]
      %v179 = vld [vmem:[%s169 + $0x8] sm:$0xff]
      %v180 = vld [vmem:[%s169 + $0x10] sm:$0xff]
      %v181 = vld [vmem:[%s169 + $0x18] sm:$0xff]
      %v182 = vld [vmem:[%s169 + $0x20] sm:$0xff]
      %v183 = vld [vmem:[%s169 + $0x28] sm:$0xff]
      %v184 = vld [vmem:[%s169 + $0x30] sm:$0xff]
      %v185 = vld [vmem:[%s169 + $0x38] sm:$0xff]
      %v186 = vld [vmem:[%s169 + $0x40] sm:$0xff]
      %v187 = vld [vmem:[%s169 + $0x48] sm:$0xff]
      %v188 = vld [vmem:[%s169 + $0x50] sm:$0xff]
      %v189 = vld [vmem:[%s169 + $0x58] sm:$0xff]
      %v190 = vld [vmem:[%s169 + $0x60] sm:$0xff]
      %v191 = vld [vmem:[%s169 + $0x68] sm:$0xff]
      %v192 = vld [vmem:[%s169 + $0x70] sm:$0xff]
      %v193 = vld [vmem:[%s169 + $0x78] sm:$0xff]
      %v194 = vld [vmem:[%s169 + $0x80] sm:$0xff]
      %v195 = vld [vmem:[%s169 + $0x88] sm:$0xff]
      %v196 = vld [vmem:[%s169 + $0x90] sm:$0xff]
      %v197 = vld [vmem:[%s169 + $0x98] sm:$0xff]
      %v198 = vld [vmem:[%s169 + $0xa0] sm:$0xff]
      %v199 = vld [vmem:[%s169 + $0xa8] sm:$0xff]
      %v200 = vld [vmem:[%s169 + $0xb0] sm:$0xff]
      %v201 = vld [vmem:[%s169 + $0xb8] sm:$0xff]
      %v202 = vld [vmem:[%s169 + $0xc0] sm:$0xff]
      %v203 = vld [vmem:[%s169 + $0xc8] sm:$0xff]
      %v204 = vld [vmem:[%s169 + $0xd0] sm:$0xff]
      %v205 = vld [vmem:[%s169 + $0xd8] sm:$0xff]
      %v206 = vld [vmem:[%s169 + $0xe0] sm:$0xff]
      %v207 = vld [vmem:[%s169 + $0xe8] sm:$0xff]
      %v208 = vld [vmem:[%s169 + $0xf0] sm:$0xff]
      %v209 = vld [vmem:[%s169 + $0xf8] sm:$0xff]
      %v210 = vld [vmem:[%s1] sm:$0xf]
      %v211 = vld [vmem:[%s1 + $0x4] sm:$0xf]
      %v212 = vld [vmem:[%s1 + $0x8] sm:$0xf]
      %v213 = vld [vmem:[%s1 + $0xc] sm:$0xf]
      %v214 = vld [vmem:[%s1 + $0x10] sm:$0xf]
      %v215 = vld [vmem:[%s1 + $0x14] sm:$0xf]
      %v216 = vld [vmem:[%s1 + $0x18] sm:$0xf]
      %v217 = vld [vmem:[%s1 + $0x1c] sm:$0xf]
      %v218 = vld [vmem:[%s1 + $0x20] sm:$0xf]
      %v219 = vld [vmem:[%s1 + $0x24] sm:$0xf]
      %v220 = vld [vmem:[%s1 + $0x28] sm:$0xf]
      %v221 = vld [vmem:[%s1 + $0x2c] sm:$0xf]
      %v222 = vld [vmem:[%s1 + $0x30] sm:$0xf]
      %v223 = vld [vmem:[%s1 + $0x34] sm:$0xf]
      %v224 = vld [vmem:[%s1 + $0x38] sm:$0xf]
      %v225 = vld [vmem:[%s1 + $0x3c] sm:$0xf]
      %v226 = vld [vmem:[%s1 + $0x40] sm:$0xf]
      %v227 = vld [vmem:[%s1 + $0x44] sm:$0xf]
      %v228 = vld [vmem:[%s1 + $0x48] sm:$0xf]
      %v229 = vld [vmem:[%s1 + $0x4c] sm:$0xf]
      %v230 = vld [vmem:[%s1 + $0x50] sm:$0xf]
      %v231 = vld [vmem:[%s1 + $0x54] sm:$0xf]
      %v232 = vld [vmem:[%s1 + $0x58] sm:$0x3]
      %v233 = vld [vmem:[%s2] sm:$0x1]
      %v235 = vlaneseq
      %v236 = vshrl.u32 %v235, 7
      %v237 = vsub.s32 0, %v236
      %v238 = vrot.slane %v233, %v237
      %v272 = vunpack.c.l.b16 %v178
      %v273 = vunpack.c.h.b16 %v178
      %v274 = vunpack.c.l.b16 %v179
      %v275 = vunpack.c.h.b16 %v179
      %v276 = vunpack.c.l.b16 %v180
      %v277 = vunpack.c.h.b16 %v180
      %v278 = vunpack.c.l.b16 %v181
      %v279 = vunpack.c.h.b16 %v181
      %v280 = vunpack.c.l.b16 %v182
      %v281 = vunpack.c.h.b16 %v182
      %v282 = vunpack.c.l.b16 %v183
      %v283 = vunpack.c.h.b16 %v183
      %v284 = vunpack.c.l.b16 %v184
      %v285 = vunpack.c.h.b16 %v184
      %v286 = vunpack.c.l.b16 %v185
      %v287 = vunpack.c.h.b16 %v185
      %v288 = vunpack.c.l.b16 %v186
      %v289 = vunpack.c.h.b16 %v186
      %v290 = vunpack.c.l.b16 %v187
      %v291 = vunpack.c.h.b16 %v187
      %v292 = vunpack.c.l.b16 %v188
      %v293 = vunpack.c.h.b16 %v188
      %v294 = vunpack.c.l.b16 %v189
      %v295 = vunpack.c.h.b16 %v189
      %v296 = vunpack.c.l.b16 %v190
      %v297 = vunpack.c.h.b16 %v190
      %v298 = vunpack.c.l.b16 %v191
      %v299 = vunpack.c.h.b16 %v191
      %v300 = vunpack.c.l.b16 %v192
      %v301 = vunpack.c.h.b16 %v192
      %v302 = vunpack.c.l.b16 %v193
      %v303 = vunpack.c.h.b16 %v193
      %v304 = vunpack.c.l.b16 %v194
      %v305 = vunpack.c.h.b16 %v194
      %v306 = vunpack.c.l.b16 %v195
      %v307 = vunpack.c.h.b16 %v195
      %v308 = vunpack.c.l.b16 %v196
      %v309 = vunpack.c.h.b16 %v196
      %v310 = vunpack.c.l.b16 %v197
      %v311 = vunpack.c.h.b16 %v197
      %v312 = vunpack.c.l.b16 %v198
      %v313 = vunpack.c.h.b16 %v198
      %v314 = vunpack.c.l.b16 %v199
      %v315 = vunpack.c.h.b16 %v199
      %v316 = vunpack.c.l.b16 %v200
      %v317 = vunpack.c.h.b16 %v200
      %v318 = vunpack.c.l.b16 %v201
      %v319 = vunpack.c.h.b16 %v201
      %v320 = vunpack.c.l.b16 %v202
      %v321 = vunpack.c.h.b16 %v202
      %v322 = vunpack.c.l.b16 %v203
      %v323 = vunpack.c.h.b16 %v203
      %v324 = vunpack.c.l.b16 %v204
      %v325 = vunpack.c.h.b16 %v204
      %v326 = vunpack.c.l.b16 %v205
      %v327 = vunpack.c.h.b16 %v205
      %v328 = vunpack.c.l.b16 %v206
      %v329 = vunpack.c.h.b16 %v206
      %v330 = vunpack.c.l.b16 %v207
      %v331 = vunpack.c.h.b16 %v207
      %v332 = vunpack.c.l.b16 %v208
      %v333 = vunpack.c.h.b16 %v208
      %v334 = vunpack.c.l.b16 %v209
      %v335 = vunpack.c.h.b16 %v209
      %v336 = vpack.c.b16 %v274, %v272
      %v337 = vpack.c.b16 %v275, %v273
      %v338 = vpack.c.b16 %v278, %v276
      %v339 = vpack.c.b16 %v279, %v277
      %v340 = vpack.c.b16 %v282, %v280
      %v341 = vpack.c.b16 %v283, %v281
      %v342 = vpack.c.b16 %v286, %v284
      %v343 = vpack.c.b16 %v287, %v285
      %v344 = vpack.c.b16 %v290, %v288
      %v345 = vpack.c.b16 %v291, %v289
      %v346 = vpack.c.b16 %v294, %v292
      %v347 = vpack.c.b16 %v295, %v293
      %v348 = vpack.c.b16 %v298, %v296
      %v349 = vpack.c.b16 %v299, %v297
      %v350 = vpack.c.b16 %v302, %v300
      %v351 = vpack.c.b16 %v303, %v301
      %v352 = vpack.c.b16 %v306, %v304
      %v353 = vpack.c.b16 %v307, %v305
      %v354 = vpack.c.b16 %v310, %v308
      %v355 = vpack.c.b16 %v311, %v309
      %v356 = vpack.c.b16 %v314, %v312
      %v357 = vpack.c.b16 %v315, %v313
      %v358 = vpack.c.b16 %v318, %v316
      %v359 = vpack.c.b16 %v319, %v317
      %v360 = vpack.c.b16 %v322, %v320
      %v361 = vpack.c.b16 %v323, %v321
      %v362 = vpack.c.b16 %v326, %v324
      %v363 = vpack.c.b16 %v327, %v325
      %v364 = vpack.c.b16 %v330, %v328
      %v365 = vpack.c.b16 %v331, %v329
      %v366 = vpack.c.b16 %v334, %v332
      %v367 = vpack.c.b16 %v335, %v333
      %v407 = vunpack.c.l.b16 %v210
      %v408 = vunpack.c.l.b16 %v211
      %v409 = vunpack.c.l.b16 %v212
      %v410 = vunpack.c.l.b16 %v213
      %v411 = vunpack.c.l.b16 %v214
      %v412 = vunpack.c.l.b16 %v215
      %v413 = vunpack.c.l.b16 %v216
      %v414 = vunpack.c.l.b16 %v217
      %v415 = vunpack.c.l.b16 %v218
      %v416 = vunpack.c.l.b16 %v219
      %v417 = vunpack.c.l.b16 %v220
      %v418 = vunpack.c.l.b16 %v221
      %v419 = vunpack.c.l.b16 %v222
      %v420 = vunpack.c.l.b16 %v223
      %v421 = vunpack.c.l.b16 %v224
      %v422 = vunpack.c.l.b16 %v225
      %v423 = vunpack.c.l.b16 %v226
      %v424 = vunpack.c.l.b16 %v227
      %v425 = vunpack.c.l.b16 %v228
      %v426 = vunpack.c.l.b16 %v229
      %v427 = vunpack.c.l.b16 %v230
      %v428 = vunpack.c.l.b16 %v231
      %v429 = vunpack.c.l.b16 %v232
      %v430 = vpack.c.b16 %v408, %v407
      %v431 = vpack.c.b16 %v410, %v409
      %v432 = vpack.c.b16 %v412, %v411
      %v433 = vpack.c.b16 %v414, %v413
      %v434 = vpack.c.b16 %v416, %v415
      %v435 = vpack.c.b16 %v418, %v417
      %v436 = vpack.c.b16 %v420, %v419
      %v437 = vpack.c.b16 %v422, %v421
      %v438 = vpack.c.b16 %v424, %v423
      %v439 = vpack.c.b16 %v426, %v425
      %v440 = vpack.c.b16 %v428, %v427
      %v441 = vpack.c.b16 %v429, %v429
      %vm453 = vcmask 424960
      %v455 = vsel %vm453, %v337, 0
      %v458 = vsel %vm453, %v339, 0
      %v461 = vsel %vm453, %v341, 0
      %v464 = vsel %vm453, %v343, 0
      %v467 = vsel %vm453, %v345, 0
      %v470 = vsel %vm453, %v347, 0
      %v473 = vsel %vm453, %v349, 0
      %v476 = vsel %vm453, %v351, 0
      %v479 = vsel %vm453, %v353, 0
      %v482 = vsel %vm453, %v355, 0
      %v485 = vsel %vm453, %v357, 0
      %v488 = vsel %vm453, %v359, 0
      %v491 = vsel %vm453, %v361, 0
      %v494 = vsel %vm453, %v363, 0
      %v497 = vsel %vm453, %v365, 0
      %v500 = vsel %vm453, %v367, 0
      %vm502 = vcmask 1041408
      %v504 = vsel %vm502, %v441, 0
      %506 = vmatprep.subr.bf16.mxu0 0
      %507 = vmatpush1.bf16.msra.mxu0 %v430
      %508 = vmatprep.subr.bf16.mxu0 0
      %509 = vmatpush1.bf16.msra.mxu0 %v431
      %510 = vmatprep.subr.bf16.mxu0 0
      %511 = vmatpush1.bf16.msra.mxu0 %v432
      %512 = vmatprep.subr.bf16.mxu0 0
      %513 = vmatpush1.bf16.msra.mxu0 %v433
      %514 = vmatprep.subr.bf16.mxu0 0
      %515 = vmatpush1.bf16.msra.mxu0 %v434
      %516 = vmatprep.subr.bf16.mxu0 0
      %517 = vmatpush1.bf16.msra.mxu0 %v435
      %518 = vmatprep.subr.bf16.mxu0 0
      %519 = vmatpush1.bf16.msra.mxu0 %v436
      %520 = vmatprep.subr.bf16.mxu0 0
      %521 = vmatpush1.bf16.msra.mxu0 %v437
      %522 = vmatprep.subr.bf16.mxu0 0
      %523 = vmatpush1.bf16.msra.mxu0 %v438
      %524 = vmatprep.subr.bf16.mxu0 0
      %525 = vmatpush1.bf16.msra.mxu0 %v439
      %526 = vmatprep.subr.bf16.mxu0 0
      %527 = vmatpush1.bf16.msra.mxu0 %v440
      %528 = vmatprep.subr.bf16.mxu0 0
      %529 = vmatpush1.bf16.msra.mxu0 %v504
      %530 = vmatprep.subr.bf16.mxu0 0
      %531 = vmatpush1.bf16.msra.mxu0 0
      %532 = vmatprep.subr.bf16.mxu0 0
      %533 = vmatpush1.bf16.msra.mxu0 0
      %534 = vmatprep.subr.bf16.mxu0 0
      %535 = vmatpush1.bf16.msra.mxu0 0
      %536 = vmatprep.subr.bf16.mxu0 0
      %537 = vmatpush1.bf16.msra.mxu0 0
      %538 = vmatprep.mubr.bf16.mxu0 %v455
      %539 = vmatmul.mubr.bf16.gmra.mrb[0].mxu0 %v336
      %v540 = vpop.f32.mrb[0].mxu0
      %v541 = vadd.f32 %v238, %v540
      %v542 = vpop.f32.mrb[0].mxu0
      %v543 = vpop.f32.mrb[0].mxu0
      %v544 = vadd.f32 %v238, %v543
      %v545 = vpop.f32.mrb[0].mxu0
      %546 = vmatprep.mubr.bf16.mxu0 %v458
      %547 = vmatmul.mubr.bf16.gmra.mrb[0].mxu0 %v338
      %v548 = vpop.f32.mrb[0].mxu0
      %v549 = vadd.f32 %v238, %v548
      %v550 = vpop.f32.mrb[0].mxu0
      %v551 = vpop.f32.mrb[0].mxu0
      %v552 = vadd.f32 %v238, %v551
      %v553 = vpop.f32.mrb[0].mxu0
      %554 = vmatprep.mubr.bf16.mxu0 %v461
      %555 = vmatmul.mubr.bf16.gmra.mrb[0].mxu0 %v340
      %v556 = vpop.f32.mrb[0].mxu0
      %v557 = vadd.f32 %v238, %v556
      %v558 = vpop.f32.mrb[0].mxu0
      %v559 = vpop.f32.mrb[0].mxu0
      %v560 = vadd.f32 %v238, %v559
      %v561 = vpop.f32.mrb[0].mxu0
      %562 = vmatprep.mubr.bf16.mxu0 %v464
      %563 = vmatmul.mubr.bf16.gmra.mrb[0].mxu0 %v342
      %v564 = vpop.f32.mrb[0].mxu0
      %v565 = vadd.f32 %v238, %v564
      %v566 = vpop.f32.mrb[0].mxu0
      %v567 = vpop.f32.mrb[0].mxu0
      %v568 = vadd.f32 %v238, %v567
      %v569 = vpop.f32.mrb[0].mxu0
      %570 = vmatprep.mubr.bf16.mxu0 %v467
      %571 = vmatmul.mubr.bf16.gmra.mrb[0].mxu0 %v344
      %v572 = vpop.f32.mrb[0].mxu0
      %v573 = vadd.f32 %v238, %v572
      %v574 = vpop.f32.mrb[0].mxu0
      %v575 = vpop.f32.mrb[0].mxu0
      %v576 = vadd.f32 %v238, %v575
      %v577 = vpop.f32.mrb[0].mxu0
      %578 = vmatprep.mubr.bf16.mxu0 %v470
      %579 = vmatmul.mubr.bf16.gmra.mrb[0].mxu0 %v346
      %v580 = vpop.f32.mrb[0].mxu0
      %v581 = vadd.f32 %v238, %v580
      %v582 = vpop.f32.mrb[0].mxu0
      %v583 = vpop.f32.mrb[0].mxu0
      %v584 = vadd.f32 %v238, %v583
      %v585 = vpop.f32.mrb[0].mxu0
      %586 = vmatprep.mubr.bf16.mxu0 %v473
      %587 = vmatmul.mubr.bf16.gmra.mrb[0].mxu0 %v348
      %v588 = vpop.f32.mrb[0].mxu0
      %v589 = vadd.f32 %v238, %v588
      %v590 = vpop.f32.mrb[0].mxu0
      %v591 = vpop.f32.mrb[0].mxu0
      %v592 = vadd.f32 %v238, %v591
      %v593 = vpop.f32.mrb[0].mxu0
      %594 = vmatprep.mubr.bf16.mxu0 %v476
      %595 = vmatmul.mubr.bf16.gmra.mrb[0].mxu0 %v350
      %v596 = vpop.f32.mrb[0].mxu0
      %v597 = vadd.f32 %v238, %v596
      %v598 = vpop.f32.mrb[0].mxu0
      %v599 = vpop.f32.mrb[0].mxu0
      %v600 = vadd.f32 %v238, %v599
      %v601 = vpop.f32.mrb[0].mxu0
      %602 = vmatprep.mubr.bf16.mxu0 %v479
      %603 = vmatmul.mubr.bf16.gmra.mrb[0].mxu0 %v352
      %v604 = vpop.f32.mrb[0].mxu0
      %v605 = vadd.f32 %v238, %v604
      %v606 = vpop.f32.mrb[0].mxu0
      %v607 = vpop.f32.mrb[0].mxu0
      %v608 = vadd.f32 %v238, %v607
      %v609 = vpop.f32.mrb[0].mxu0
      %610 = vmatprep.mubr.bf16.mxu0 %v482
      %611 = vmatmul.mubr.bf16.gmra.mrb[0].mxu0 %v354
      %v612 = vpop.f32.mrb[0].mxu0
      %v613 = vadd.f32 %v238, %v612
      %v614 = vpop.f32.mrb[0].mxu0
      %v615 = vpop.f32.mrb[0].mxu0
      %v616 = vadd.f32 %v238, %v615
      %v617 = vpop.f32.mrb[0].mxu0
      %618 = vmatprep.mubr.bf16.mxu0 %v485
      %619 = vmatmul.mubr.bf16.gmra.mrb[0].mxu0 %v356
      %v620 = vpop.f32.mrb[0].mxu0
      %v621 = vadd.f32 %v238, %v620
      %v622 = vpop.f32.mrb[0].mxu0
      %v623 = vpop.f32.mrb[0].mxu0
      %v624 = vadd.f32 %v238, %v623
      %v625 = vpop.f32.mrb[0].mxu0
      %626 = vmatprep.mubr.bf16.mxu0 %v488
      %627 = vmatmul.mubr.bf16.gmra.mrb[0].mxu0 %v358
      %v628 = vpop.f32.mrb[0].mxu0
      %v629 = vadd.f32 %v238, %v628
      %v630 = vpop.f32.mrb[0].mxu0
      %v631 = vpop.f32.mrb[0].mxu0
      %v632 = vadd.f32 %v238, %v631
      %v633 = vpop.f32.mrb[0].mxu0
      %634 = vmatprep.mubr.bf16.mxu0 %v491
      %635 = vmatmul.mubr.bf16.gmra.mrb[0].mxu0 %v360
      %v636 = vpop.f32.mrb[0].mxu0
      %v637 = vadd.f32 %v238, %v636
      %v638 = vpop.f32.mrb[0].mxu0
      %v639 = vpop.f32.mrb[0].mxu0
      %v640 = vadd.f32 %v238, %v639
      %v641 = vpop.f32.mrb[0].mxu0
      %642 = vmatprep.mubr.bf16.mxu0 %v494
      %643 = vmatmul.mubr.bf16.gmra.mrb[0].mxu0 %v362
      %v644 = vpop.f32.mrb[0].mxu0
      %v645 = vadd.f32 %v238, %v644
      %v646 = vpop.f32.mrb[0].mxu0
      %v647 = vpop.f32.mrb[0].mxu0
      %v648 = vadd.f32 %v238, %v647
      %v649 = vpop.f32.mrb[0].mxu0
      %650 = vmatprep.mubr.bf16.mxu0 %v497
      %651 = vmatmul.mubr.bf16.gmra.mrb[0].mxu0 %v364
      %v652 = vpop.f32.mrb[0].mxu0
      %v653 = vadd.f32 %v238, %v652
      %v654 = vpop.f32.mrb[0].mxu0
      %v655 = vpop.f32.mrb[0].mxu0
      %v656 = vadd.f32 %v238, %v655
      %v657 = vpop.f32.mrb[0].mxu0
      %658 = vmatprep.mubr.bf16.mxu0 %v500
      %659 = vmatmul.mubr.bf16.gmra.mrb[0].mxu0 %v366
      %v660 = vpop.f32.mrb[0].mxu0
      %v661 = vadd.f32 %v238, %v660
      %v662 = vpop.f32.mrb[0].mxu0
      %v663 = vpop.f32.mrb[0].mxu0
      %v664 = vadd.f32 %v238, %v663
      %v665 = vpop.f32.mrb[0].mxu0
      %666 = vdwg.mxu0
      %vm667 = vcmp.ge.f32.partialorder %v541, 0.0
      %vm668 = vcmp.ge.f32.partialorder %v544, 0.0
      %vm669 = vcmp.ge.f32.partialorder %v549, 0.0
      %vm670 = vcmp.ge.f32.partialorder %v552, 0.0
      %vm671 = vcmp.ge.f32.partialorder %v557, 0.0
      %vm672 = vcmp.ge.f32.partialorder %v560, 0.0
      %vm673 = vcmp.ge.f32.partialorder %v565, 0.0
      %vm674 = vcmp.ge.f32.partialorder %v568, 0.0
      %vm675 = vcmp.ge.f32.partialorder %v573, 0.0
      %vm676 = vcmp.ge.f32.partialorder %v576, 0.0
      %vm677 = vcmp.ge.f32.partialorder %v581, 0.0
      %vm678 = vcmp.ge.f32.partialorder %v584, 0.0
      %vm679 = vcmp.ge.f32.partialorder %v589, 0.0
      %vm680 = vcmp.ge.f32.partialorder %v592, 0.0
      %vm681 = vcmp.ge.f32.partialorder %v597, 0.0
      %vm682 = vcmp.ge.f32.partialorder %v600, 0.0
      %vm683 = vcmp.ge.f32.partialorder %v605, 0.0
      %vm684 = vcmp.ge.f32.partialorder %v608, 0.0
      %vm685 = vcmp.ge.f32.partialorder %v613, 0.0
      %vm686 = vcmp.ge.f32.partialorder %v616, 0.0
      %vm687 = vcmp.ge.f32.partialorder %v621, 0.0
      %vm688 = vcmp.ge.f32.partialorder %v624, 0.0
      %vm689 = vcmp.ge.f32.partialorder %v629, 0.0
      %vm690 = vcmp.ge.f32.partialorder %v632, 0.0
      %vm691 = vcmp.ge.f32.partialorder %v637, 0.0
      %vm692 = vcmp.ge.f32.partialorder %v640, 0.0
      %vm693 = vcmp.ge.f32.partialorder %v645, 0.0
      %vm694 = vcmp.ge.f32.partialorder %v648, 0.0
      %vm695 = vcmp.ge.f32.partialorder %v653, 0.0
      %vm696 = vcmp.ge.f32.partialorder %v656, 0.0
      %vm697 = vcmp.ge.f32.partialorder %v661, 0.0
      %vm698 = vcmp.ge.f32.partialorder %v664, 0.0
      %v699 = vmul.f32 %v541, 0.01
      %v700 = vmul.f32 %v544, 0.01
      %v701 = vmul.f32 %v549, 0.01
      %v702 = vmul.f32 %v552, 0.01
      %v703 = vmul.f32 %v557, 0.01
      %v704 = vmul.f32 %v560, 0.01
      %v705 = vmul.f32 %v565, 0.01
      %v706 = vmul.f32 %v568, 0.01
      %v707 = vmul.f32 %v573, 0.01
      %v708 = vmul.f32 %v576, 0.01
      %v709 = vmul.f32 %v581, 0.01
      %v710 = vmul.f32 %v584, 0.01
      %v711 = vmul.f32 %v589, 0.01
      %v712 = vmul.f32 %v592, 0.01
      %v713 = vmul.f32 %v597, 0.01
      %v714 = vmul.f32 %v600, 0.01
      %v715 = vmul.f32 %v605, 0.01
      %v716 = vmul.f32 %v608, 0.01
      %v717 = vmul.f32 %v613, 0.01
      %v718 = vmul.f32 %v616, 0.01
      %v719 = vmul.f32 %v621, 0.01
      %v720 = vmul.f32 %v624, 0.01
      %v721 = vmul.f32 %v629, 0.01
      %v722 = vmul.f32 %v632, 0.01
      %v723 = vmul.f32 %v637, 0.01
      %v724 = vmul.f32 %v640, 0.01
      %v725 = vmul.f32 %v645, 0.01
      %v726 = vmul.f32 %v648, 0.01
      %v727 = vmul.f32 %v653, 0.01
      %v728 = vmul.f32 %v656, 0.01
      %v729 = vmul.f32 %v661, 0.01
      %v730 = vmul.f32 %v664, 0.01
      %v731 = vsel %vm667, %v541, %v699
      %v732 = vsel %vm668, %v544, %v700
      %v733 = vsel %vm669, %v549, %v701
      %v734 = vsel %vm670, %v552, %v702
      %v735 = vsel %vm671, %v557, %v703
      %v736 = vsel %vm672, %v560, %v704
      %v737 = vsel %vm673, %v565, %v705
      %v738 = vsel %vm674, %v568, %v706
      %v739 = vsel %vm675, %v573, %v707
      %v740 = vsel %vm676, %v576, %v708
      %v741 = vsel %vm677, %v581, %v709
      %v742 = vsel %vm678, %v584, %v710
      %v743 = vsel %vm679, %v589, %v711
      %v744 = vsel %vm680, %v592, %v712
      %v745 = vsel %vm681, %v597, %v713
      %v746 = vsel %vm682, %v600, %v714
      %v747 = vsel %vm683, %v605, %v715
      %v748 = vsel %vm684, %v608, %v716
      %v749 = vsel %vm685, %v613, %v717
      %v750 = vsel %vm686, %v616, %v718
      %v751 = vsel %vm687, %v621, %v719
      %v752 = vsel %vm688, %v624, %v720
      %v753 = vsel %vm689, %v629, %v721
      %v754 = vsel %vm690, %v632, %v722
      %v755 = vsel %vm691, %v637, %v723
      %v756 = vsel %vm692, %v640, %v724
      %v757 = vsel %vm693, %v645, %v725
      %v758 = vsel %vm694, %v648, %v726
      %v759 = vsel %vm695, %v653, %v727
      %v760 = vsel %vm696, %v656, %v728
      %v761 = vsel %vm697, %v661, %v729
      %v762 = vsel %vm698, %v664, %v730
      %v763 = vpack.c.bf16 %v732, %v731
      %v764 = vpack.c.bf16 %v734, %v733
      %v765 = vpack.c.bf16 %v736, %v735
      %v766 = vpack.c.bf16 %v738, %v737
      %v767 = vpack.c.bf16 %v740, %v739
      %v768 = vpack.c.bf16 %v742, %v741
      %v769 = vpack.c.bf16 %v744, %v743
      %v770 = vpack.c.bf16 %v746, %v745
      %v771 = vpack.c.bf16 %v748, %v747
      %v772 = vpack.c.bf16 %v750, %v749
      %v773 = vpack.c.bf16 %v752, %v751
      %v774 = vpack.c.bf16 %v754, %v753
      %v775 = vpack.c.bf16 %v756, %v755
      %v776 = vpack.c.bf16 %v758, %v757
      %v777 = vpack.c.bf16 %v760, %v759
      %v778 = vpack.c.bf16 %v762, %v761
      %v795 = vunpack.c.l.b16 %v763
      %v796 = vunpack.c.h.b16 %v763
      %v797 = vunpack.c.l.b16 %v764
      %v798 = vunpack.c.h.b16 %v764
      %v799 = vunpack.c.l.b16 %v765
      %v800 = vunpack.c.h.b16 %v765
      %v801 = vunpack.c.l.b16 %v766
      %v802 = vunpack.c.h.b16 %v766
      %v803 = vunpack.c.l.b16 %v767
      %v804 = vunpack.c.h.b16 %v767
      %v805 = vunpack.c.l.b16 %v768
      %v806 = vunpack.c.h.b16 %v768
      %v807 = vunpack.c.l.b16 %v769
      %v808 = vunpack.c.h.b16 %v769
      %v809 = vunpack.c.l.b16 %v770
      %v810 = vunpack.c.h.b16 %v770
      %v811 = vunpack.c.l.b16 %v771
      %v812 = vunpack.c.h.b16 %v771
      %v813 = vunpack.c.l.b16 %v772
      %v814 = vunpack.c.h.b16 %v772
      %v815 = vunpack.c.l.b16 %v773
      %v816 = vunpack.c.h.b16 %v773
      %v817 = vunpack.c.l.b16 %v774
      %v818 = vunpack.c.h.b16 %v774
      %v819 = vunpack.c.l.b16 %v775
      %v820 = vunpack.c.h.b16 %v775
      %v821 = vunpack.c.l.b16 %v776
      %v822 = vunpack.c.h.b16 %v776
      %v823 = vunpack.c.l.b16 %v777
      %v824 = vunpack.c.h.b16 %v777
      %v825 = vunpack.c.l.b16 %v778
      %v826 = vunpack.c.h.b16 %v778
      %v827 = vpack.c.b16 %v795, %v795
      %v828 = vpack.c.b16 %v796, %v796
      %v829 = vpack.c.b16 %v797, %v797
      %v830 = vpack.c.b16 %v798, %v798
      %v831 = vpack.c.b16 %v799, %v799
      %v832 = vpack.c.b16 %v800, %v800
      %v833 = vpack.c.b16 %v801, %v801
      %v834 = vpack.c.b16 %v802, %v802
      %v835 = vpack.c.b16 %v803, %v803
      %v836 = vpack.c.b16 %v804, %v804
      %v837 = vpack.c.b16 %v805, %v805
      %v838 = vpack.c.b16 %v806, %v806
      %v839 = vpack.c.b16 %v807, %v807
      %v840 = vpack.c.b16 %v808, %v808
      %v841 = vpack.c.b16 %v809, %v809
      %v842 = vpack.c.b16 %v810, %v810
      %v843 = vpack.c.b16 %v811, %v811
      %v844 = vpack.c.b16 %v812, %v812
      %v845 = vpack.c.b16 %v813, %v813
      %v846 = vpack.c.b16 %v814, %v814
      %v847 = vpack.c.b16 %v815, %v815
      %v848 = vpack.c.b16 %v816, %v816
      %v849 = vpack.c.b16 %v817, %v817
      %v850 = vpack.c.b16 %v818, %v818
      %v851 = vpack.c.b16 %v819, %v819
      %v852 = vpack.c.b16 %v820, %v820
      %v853 = vpack.c.b16 %v821, %v821
      %v854 = vpack.c.b16 %v822, %v822
      %v855 = vpack.c.b16 %v823, %v823
      %v856 = vpack.c.b16 %v824, %v824
      %v857 = vpack.c.b16 %v825, %v825
      %v858 = vpack.c.b16 %v826, %v826
      %891 = vst [vmem:[%s175] sm:$0xf] %v827
      %892 = vst [vmem:[%s175 + $0x4] sm:$0xf] %v828
      %893 = vst [vmem:[%s175 + $0x8] sm:$0xf] %v829
      %894 = vst [vmem:[%s175 + $0xc] sm:$0xf] %v830
      %895 = vst [vmem:[%s175 + $0x10] sm:$0xf] %v831
      %896 = vst [vmem:[%s175 + $0x14] sm:$0xf] %v832
      %897 = vst [vmem:[%s175 + $0x18] sm:$0xf] %v833
      %898 = vst [vmem:[%s175 + $0x1c] sm:$0xf] %v834
      %899 = vst [vmem:[%s175 + $0x20] sm:$0xf] %v835
      %900 = vst [vmem:[%s175 + $0x24] sm:$0xf] %v836
      %901 = vst [vmem:[%s175 + $0x28] sm:$0xf] %v837
      %902 = vst [vmem:[%s175 + $0x2c] sm:$0xf] %v838
      %903 = vst [vmem:[%s175 + $0x30] sm:$0xf] %v839
      %904 = vst [vmem:[%s175 + $0x34] sm:$0xf] %v840
      %905 = vst [vmem:[%s175 + $0x38] sm:$0xf] %v841
      %906 = vst [vmem:[%s175 + $0x3c] sm:$0xf] %v842
      %907 = vst [vmem:[%s175 + $0x40] sm:$0xf] %v843
      %908 = vst [vmem:[%s175 + $0x44] sm:$0xf] %v844
      %909 = vst [vmem:[%s175 + $0x48] sm:$0xf] %v845
      %910 = vst [vmem:[%s175 + $0x4c] sm:$0xf] %v846
      %911 = vst [vmem:[%s175 + $0x50] sm:$0xf] %v847
      %912 = vst [vmem:[%s175 + $0x54] sm:$0xf] %v848
      %913 = vst [vmem:[%s175 + $0x58] sm:$0xf] %v849
      %914 = vst [vmem:[%s175 + $0x5c] sm:$0xf] %v850
      %915 = vst [vmem:[%s175 + $0x60] sm:$0xf] %v851
      %916 = vst [vmem:[%s175 + $0x64] sm:$0xf] %v852
      %917 = vst [vmem:[%s175 + $0x68] sm:$0xf] %v853
      %918 = vst [vmem:[%s175 + $0x6c] sm:$0xf] %v854
      %919 = vst [vmem:[%s175 + $0x70] sm:$0xf] %v855
      %920 = vst [vmem:[%s175 + $0x74] sm:$0xf] %v856
      %921 = vst [vmem:[%s175 + $0x78] sm:$0xf] %v857
      %922 = vst [vmem:[%s175 + $0x7c] sm:$0xf] %v858
      %s923 = smul.u32 32, %s14
      %p924 = scmp.lt.s32.totalorder %s923, 63
      %s925 = scalar_select %p924, %s923, 63
      %s926 = smul.addr %s925, 4
      %s927 = scalar_lea.vmem %s3, %s926
      // Predicated region
      $region33: #{custom_cnn_forward.5} parent=31 // pred_check
        %p928 = pneg %p100
      $region34: #{custom_cnn_forward.5} parent=31 // pred_check_branch
        %930 = sbr.rel (%p928) target = $region36
      $region35: #{custom_cnn_forward.5} parent=31 // pred_region
        %s931 = smul.u32 32, %s14
      $region36: #{custom_cnn_forward.5} parent=31 // pred_fallthru
        _
    $region32: #{custom_cnn_forward.5} parent=5 // pred_fallthru
      _
    %p932 = scmp.le.s32.totalorder 2, %s9
    // Predicated region
    $region37: #{custom_cnn_forward.5} parent=5 // pred_check
      %p933 = pneg %p932
    $region38: #{custom_cnn_forward.5} parent=5 // pred_check_branch
      %935 = sbr.rel (%p933) target = $region40
    $region39: #{custom_cnn_forward.5} parent=5 // pred_region
      %s936 = ssub.s32 %s9, 2
      // Predicated region
      $region41: #{custom_cnn_forward.5} parent=39 // pred_check
        %p937 = pneg %p106
      $region42: #{custom_cnn_forward.5} parent=39 // pred_check_branch
        %939 = sbr.rel (%p937) target = $region44
      $region43: #{custom_cnn_forward.5} parent=39 // pred_region
        %s940 = smul.u32 32, %s15
        %p941 = scmp.lt.s32.totalorder %s940, 63
        %s942 = scalar_select %p941, %s940, 63
        %s943 = smul.addr %s942, 4
        %s944 = scalar_lea.vmem %s3, %s943
      $region44: #{custom_cnn_forward.5} parent=39 // pred_fallthru
        _
    $region40: #{custom_cnn_forward.5} parent=5 // pred_fallthru
      _
  $region6: #{custom_cnn_forward.5} parent=0 // loop_footer
    %s13 = sadd.s32 1, %s9
  $region7: #{custom_cnn_forward.5} parent=0 // loop_footer_branch
    %8 = sbr.rel target = $region3
  $region8: #{custom_cnn_forward.5} parent=0 // loop_exit
    _

// kernel: custom_cnn_forward.6
$region0: #{custom_cnn_forward.6}
  #allocation0 [shape = 'u32[]', space=smem, size = 0x4, offset = 0x4, fixed_abs, tag = 'smem constant byte address 0x4 - core index']
  #allocation1 [shape = 'u32[144,128]{1,0:T(1,128)}', space=vmem, size = 0x12000, scoped, tag = 'internal scratch']
  %s0 = inlined_call_operand.vmem [shape: bf16[128,360], index: 0, kind: input, shape index: {}]
  %s1 = inlined_call_operand.vmem [shape: bf16[360,128], index: 1, kind: input, shape index: {}]
  %s2 = inlined_call_operand.vmem [shape: f32[1,128], index: 2, kind: input, shape index: {}]
  %s3 = inlined_call_operand.vmem [shape: bf16[128,128], index: 3, kind: output, shape index: {}]
  %s4 = sld [smem:[#allocation0]]
  $region45: #{custom_cnn_forward.6} parent=0
    _
  %s6 = ssub.s32 1, %s4
  %s7 = scalar_select 0, %s6, %s4
  loop: start=0, step=1, limit=4
  $region2: #{custom_cnn_forward.6} parent=0 // loop_pre_header
    _
  $region3: #{custom_cnn_forward.6} parent=0 // loop_header
    %s9 = sphi 0, %s13
    %p10 = scmp.ge.s32.totalorder %s9, 4
    %s19 = sphi 0, %s21
    %s22 = sphi 0, %s19
    %s23 = sphi 0, %s22
    %s39 = sphi 0, %s23
    %s43 = sphi 0, %s43
    %s45 = sphi 0, %s43
    %s46 = sphi 0, %s45
    %s60 = sphi 0, %s46
    %s64 = sphi 0, %s64
    %s66 = sphi 0, %s64
    %s67 = sphi 0, %s66
    %s81 = sphi 0, %s67
    %s87 = sphi 0, %s89
    %s90 = sphi 0, %s87
    %s91 = sphi 0, %s90
    %s107 = sphi 0, %s91
  $region4: #{custom_cnn_forward.6} parent=0 // loop_header_branch
    %12 = sbr.rel (%p10) target = $region8
  $region5: #{custom_cnn_forward.6} parent=0 // loop_body
    %s14 = ssub.s32 %s9, 1
    %s15 = ssub.s32 %s9, 2
    %s16 = sadd.s32 %s9, 1
    %s17 = ssub.s32 %s9, %s16
    %p18 = scmp.eq.s32.totalorder %s17, 0
    %s20 = sadd.s32 %s19, 1
    %s21 = scalar_select %p18, %s19, %s20
    %p24 = pneg %p18
    %p25 = scmp.eq.s32.totalorder %s9, 1
    %p26 = por %p24, %p25
    %p27 = scmp.ne.s32.totalorder %s19, %s22
    %p28 = scmp.eq.s32.totalorder %s9, 0
    %p29 = por %p27, %p28
    %p30 = scmp.ne.s32.totalorder %s19, %s22
    %p31 = scmp.eq.s32.totalorder %s14, 1
    %p32 = por %p30, %p31
    %p33 = scmp.ne.s32.totalorder %s22, %s23
    %p34 = scmp.eq.s32.totalorder %s14, 0
    %p35 = por %p33, %p34
    %p36 = scmp.ne.s32.totalorder %s22, %s23
    %p37 = scmp.eq.s32.totalorder %s15, 1
    %p38 = por %p36, %p37
    %p40 = scmp.ne.s32.totalorder %s23, %s39
    %p41 = scmp.eq.s32.totalorder %s15, 0
    %p42 = por %p40, %p41
    %s44 = sadd.s32 %s43, 1
    %p47 = scmp.eq.s32.totalorder %s9, 1
    %p48 = scmp.ne.s32.totalorder %s43, %s45
    %p49 = scmp.eq.s32.totalorder %s9, 0
    %p50 = por %p48, %p49
    %p51 = scmp.ne.s32.totalorder %s43, %s45
    %p52 = scmp.eq.s32.totalorder %s14, 1
    %p53 = por %p51, %p52
    %p54 = scmp.ne.s32.totalorder %s45, %s46
    %p55 = scmp.eq.s32.totalorder %s14, 0
    %p56 = por %p54, %p55
    %p57 = scmp.ne.s32.totalorder %s45, %s46
    %p58 = scmp.eq.s32.totalorder %s15, 1
    %p59 = por %p57, %p58
    %p61 = scmp.ne.s32.totalorder %s46, %s60
    %p62 = scmp.eq.s32.totalorder %s15, 0
    %p63 = por %p61, %p62
    %s65 = sadd.s32 %s64, 1
    %p68 = scmp.eq.s32.totalorder %s9, 1
    %p69 = scmp.ne.s32.totalorder %s64, %s66
    %p70 = scmp.eq.s32.totalorder %s9, 0
    %p71 = por %p69, %p70
    %p72 = scmp.ne.s32.totalorder %s64, %s66
    %p73 = scmp.eq.s32.totalorder %s14, 1
    %p74 = por %p72, %p73
    %p75 = scmp.ne.s32.totalorder %s66, %s67
    %p76 = scmp.eq.s32.totalorder %s14, 0
    %p77 = por %p75, %p76
    %p78 = scmp.ne.s32.totalorder %s66, %s67
    %p79 = scmp.eq.s32.totalorder %s15, 1
    %p80 = por %p78, %p79
    %p82 = scmp.ne.s32.totalorder %s67, %s81
    %p83 = scmp.eq.s32.totalorder %s15, 0
    %p84 = por %p82, %p83
    %s85 = ssub.s32 %s9, %s16
    %p86 = scmp.eq.s32.totalorder %s85, 0
    %s88 = sadd.s32 %s87, 1
    %s89 = scalar_select %p86, %s87, %s88
    %p92 = pneg %p86
    %p93 = scmp.eq.s32.totalorder %s9, 1
    %p94 = por %p92, %p93
    %p95 = scmp.ne.s32.totalorder %s87, %s90
    %p96 = scmp.eq.s32.totalorder %s9, 0
    %p97 = por %p95, %p96
    %p98 = scmp.ne.s32.totalorder %s87, %s90
    %p99 = scmp.eq.s32.totalorder %s14, 1
    %p100 = por %p98, %p99
    %p101 = scmp.ne.s32.totalorder %s90, %s91
    %p102 = scmp.eq.s32.totalorder %s14, 0
    %p103 = por %p101, %p102
    %p104 = scmp.ne.s32.totalorder %s90, %s91
    %p105 = scmp.eq.s32.totalorder %s15, 1
    %p106 = por %p104, %p105
    %p108 = scmp.ne.s32.totalorder %s91, %s107
    %p109 = scmp.eq.s32.totalorder %s15, 0
    %p110 = por %p108, %p109
    %p111 = scmp.le.s32.totalorder 1, %s9
    %p112 = scmp.lt.s32.totalorder %s9, 3
    %p113 = pnand %p111, %p112
    %p114 = pneg %p113
    // Predicated region
    $region9: #{custom_cnn_forward.6} parent=5 // pred_check
      _
    $region10: #{custom_cnn_forward.6} parent=5 // pred_check_branch
      %116 = sbr.rel (%p113) target = $region12
    $region11: #{custom_cnn_forward.6} parent=5 // pred_region
      %s117 = ssub.s32 %s9, 1
      // Predicated region
      $region13: #{custom_cnn_forward.6} parent=11 // pred_check
        %p118 = pneg %p56
      $region14: #{custom_cnn_forward.6} parent=11 // pred_check_branch
        %120 = sbr.rel (%p118) target = $region16
      $region15: #{custom_cnn_forward.6} parent=11 // pred_region
        _
      $region16: #{custom_cnn_forward.6} parent=11 // pred_fallthru
        _
      // Predicated region
      $region17: #{custom_cnn_forward.6} parent=11 // pred_check
        %p121 = pneg %p77
      $region18: #{custom_cnn_forward.6} parent=11 // pred_check_branch
        %123 = sbr.rel (%p121) target = $region20
      $region19: #{custom_cnn_forward.6} parent=11 // pred_region
        _
      $region20: #{custom_cnn_forward.6} parent=11 // pred_fallthru
        _
    $region12: #{custom_cnn_forward.6} parent=5 // pred_fallthru
      _
    %p124 = scmp.lt.s32.totalorder %s9, 2
    // Predicated region
    $region21: #{custom_cnn_forward.6} parent=5 // pred_check
      %p125 = pneg %p124
    $region22: #{custom_cnn_forward.6} parent=5 // pred_check_branch
      %127 = sbr.rel (%p125) target = $region24
    $region23: #{custom_cnn_forward.6} parent=5 // pred_region
      // Predicated region
      $region25: #{custom_cnn_forward.6} parent=23 // pred_check
        %p128 = pneg %p29
      $region26: #{custom_cnn_forward.6} parent=23 // pred_check_branch
        %130 = sbr.rel (%p128) target = $region28
      $region27: #{custom_cnn_forward.6} parent=23 // pred_region
        %s131 = smul.u32 8, %s9
        %p132 = scmp.lt.s32.totalorder %s131, 15
        %s133 = scalar_select %p132, %s131, 15
        %s134 = smul.addr %s133, 3
        %s135 = smul.addr %s134, 4
        %s136 = scalar_lea.vmem %s0, %s135
        %s137 = smul.u32 8, %s9
      $region28: #{custom_cnn_forward.6} parent=23 // pred_fallthru
        _
    $region24: #{custom_cnn_forward.6} parent=5 // pred_fallthru
      _
    %p138 = scmp.le.s32.totalorder 1, %s9
    %p139 = scmp.lt.s32.totalorder %s9, 3
    %p140 = pnand %p138, %p139
    %p141 = pneg %p140
    // Predicated region
    $region29: #{custom_cnn_forward.6} parent=5 // pred_check
      _
    $region30: #{custom_cnn_forward.6} parent=5 // pred_check_branch
      %143 = sbr.rel (%p140) target = $region32
    $region31: #{custom_cnn_forward.6} parent=5 // pred_region
      %s144 = ssub.s32 %s9, 1
      %s145 = smul.u32 8, %s14
      %p146 = scmp.lt.s32.totalorder %s145, 15
      %s147 = scalar_select %p146, %s145, 15
      %s148 = smul.addr %s147, 3
      %s149 = smul.addr %s148, 4
      %s150 = scalar_lea.vmem %s0, %s149
      %p151 = pneg %p35
      %p152 = pneg %p32
      %p153 = pneg %p56
      %p154 = pneg %p53
      %p155 = pneg %p77
      %p156 = pneg %p74
      %p157 = pneg %p103
      %p158 = pneg %p100
      %s159 = smul.u32 8, %s14
      %p160 = scmp.lt.s32.totalorder %s159, 15
      %s161 = scalar_select %p160, %s159, 15
      %s162 = smul.addr %s161, 4
      %s163 = scalar_lea.vmem %s3, %s162
      %s164 = smul.u32 8, %s14
      %p165 = scmp.lt.s32.totalorder %s164, 15
      %s166 = scalar_select %p165, %s164, 15
      %s167 = smul.addr %s166, 3
      %s168 = smul.addr %s167, 4
      %s169 = scalar_lea.vmem %s0, %s168
      %s170 = smul.u32 8, %s14
      %s171 = smul.u32 8, %s14
      %p172 = scmp.lt.s32.totalorder %s171, 15
      %s173 = scalar_select %p172, %s171, 15
      %s174 = smul.addr %s173, 4
      %s175 = scalar_lea.vmem %s3, %s174
      %s176 = smul.u32 8, %s14
      %v178 = vld [vmem:[%s169] sm:$0xff]
      %v179 = vld [vmem:[%s169 + $0x8] sm:$0xf]
      %v180 = vld [vmem:[%s169 + $0xc] sm:$0xff]
      %v181 = vld [vmem:[%s169 + $0x14] sm:$0xf]
      %v182 = vld [vmem:[%s169 + $0x18] sm:$0xff]
      %v183 = vld [vmem:[%s169 + $0x20] sm:$0xf]
      %v184 = vld [vmem:[%s169 + $0x24] sm:$0xff]
      %v185 = vld [vmem:[%s169 + $0x2c] sm:$0xf]
      %v186 = vld [vmem:[%s169 + $0x30] sm:$0xff]
      %v187 = vld [vmem:[%s169 + $0x38] sm:$0xf]
      %v188 = vld [vmem:[%s169 + $0x3c] sm:$0xff]
      %v189 = vld [vmem:[%s169 + $0x44] sm:$0xf]
      %v190 = vld [vmem:[%s169 + $0x48] sm:$0xff]
      %v191 = vld [vmem:[%s169 + $0x50] sm:$0xf]
      %v192 = vld [vmem:[%s169 + $0x54] sm:$0xff]
      %v193 = vld [vmem:[%s169 + $0x5c] sm:$0xf]
      %v194 = vld [vmem:[%s1] sm:$0xf]
      %v195 = vld [vmem:[%s1 + $0x4] sm:$0xf]
      %v196 = vld [vmem:[%s1 + $0x8] sm:$0xf]
      %v197 = vld [vmem:[%s1 + $0xc] sm:$0xf]
      %v198 = vld [vmem:[%s1 + $0x10] sm:$0xf]
      %v199 = vld [vmem:[%s1 + $0x14] sm:$0xf]
      %v200 = vld [vmem:[%s1 + $0x18] sm:$0xf]
      %v201 = vld [vmem:[%s1 + $0x1c] sm:$0xf]
      %v202 = vld [vmem:[%s1 + $0x20] sm:$0xf]
      %v203 = vld [vmem:[%s1 + $0x24] sm:$0xf]
      %v204 = vld [vmem:[%s1 + $0x28] sm:$0xf]
      %v205 = vld [vmem:[%s1 + $0x2c] sm:$0xf]
      %v206 = vld [vmem:[%s1 + $0x30] sm:$0xf]
      %v207 = vld [vmem:[%s1 + $0x34] sm:$0xf]
      %v208 = vld [vmem:[%s1 + $0x38] sm:$0xf]
      %v209 = vld [vmem:[%s1 + $0x3c] sm:$0xf]
      %v210 = vld [vmem:[%s1 + $0x40] sm:$0xf]
      %v211 = vld [vmem:[%s1 + $0x44] sm:$0xf]
      %v212 = vld [vmem:[%s1 + $0x48] sm:$0xf]
      %v213 = vld [vmem:[%s1 + $0x4c] sm:$0xf]
      %v214 = vld [vmem:[%s1 + $0x50] sm:$0xf]
      %v215 = vld [vmem:[%s1 + $0x54] sm:$0xf]
      %v216 = vld [vmem:[%s1 + $0x58] sm:$0xf]
      %v217 = vld [vmem:[%s1 + $0x5c] sm:$0xf]
      %v218 = vld [vmem:[%s1 + $0x60] sm:$0xf]
      %v219 = vld [vmem:[%s1 + $0x64] sm:$0xf]
      %v220 = vld [vmem:[%s1 + $0x68] sm:$0xf]
      %v221 = vld [vmem:[%s1 + $0x6c] sm:$0xf]
      %v222 = vld [vmem:[%s1 + $0x70] sm:$0xf]
      %v223 = vld [vmem:[%s1 + $0x74] sm:$0xf]
      %v224 = vld [vmem:[%s1 + $0x78] sm:$0xf]
      %v225 = vld [vmem:[%s1 + $0x7c] sm:$0xf]
      %v226 = vld [vmem:[%s1 + $0x80] sm:$0xf]
      %v227 = vld [vmem:[%s1 + $0x84] sm:$0xf]
      %v228 = vld [vmem:[%s1 + $0x88] sm:$0xf]
      %v229 = vld [vmem:[%s1 + $0x8c] sm:$0xf]
      %v230 = vld [vmem:[%s1 + $0x90] sm:$0xf]
      %v231 = vld [vmem:[%s1 + $0x94] sm:$0xf]
      %v232 = vld [vmem:[%s1 + $0x98] sm:$0xf]
      %v233 = vld [vmem:[%s1 + $0x9c] sm:$0xf]
      %v234 = vld [vmem:[%s1 + $0xa0] sm:$0xf]
      %v235 = vld [vmem:[%s1 + $0xa4] sm:$0xf]
      %v236 = vld [vmem:[%s1 + $0xa8] sm:$0xf]
      %v237 = vld [vmem:[%s1 + $0xac] sm:$0xf]
      %v238 = vld [vmem:[%s1 + $0xb0] sm:$0xf]
      %v239 = vld [vmem:[%s2] sm:$0x1]
      %v241 = vlaneseq
      %v242 = vshrl.u32 %v241, 7
      %v243 = vsub.s32 0, %v242
      %v244 = vrot.slane %v239, %v243
      %v262 = vunpack.c.l.b16 %v178
      %v263 = vunpack.c.h.b16 %v178
      %v264 = vunpack.c.l.b16 %v179
      %v265 = vunpack.c.l.b16 %v180
      %v266 = vunpack.c.h.b16 %v180
      %v267 = vunpack.c.l.b16 %v181
      %v268 = vunpack.c.l.b16 %v182
      %v269 = vunpack.c.h.b16 %v182
      %v270 = vunpack.c.l.b16 %v183
      %v271 = vunpack.c.l.b16 %v184
      %v272 = vunpack.c.h.b16 %v184
      %v273 = vunpack.c.l.b16 %v185
      %v274 = vunpack.c.l.b16 %v186
      %v275 = vunpack.c.h.b16 %v186
      %v276 = vunpack.c.l.b16 %v187
      %v277 = vunpack.c.l.b16 %v188
      %v278 = vunpack.c.h.b16 %v188
      %v279 = vunpack.c.l.b16 %v189
      %v280 = vunpack.c.l.b16 %v190
      %v281 = vunpack.c.h.b16 %v190
      %v282 = vunpack.c.l.b16 %v191
      %v283 = vunpack.c.l.b16 %v192
      %v284 = vunpack.c.h.b16 %v192
      %v285 = vunpack.c.l.b16 %v193
      %v286 = vpack.c.b16 %v265, %v262
      %v287 = vpack.c.b16 %v266, %v263
      %v288 = vpack.c.b16 %v267, %v264
      %v289 = vpack.c.b16 %v271, %v268
      %v290 = vpack.c.b16 %v272, %v269
      %v291 = vpack.c.b16 %v273, %v270
      %v292 = vpack.c.b16 %v277, %v274
      %v293 = vpack.c.b16 %v278, %v275
      %v294 = vpack.c.b16 %v279, %v276
      %v295 = vpack.c.b16 %v283, %v280
      %v296 = vpack.c.b16 %v284, %v281
      %v297 = vpack.c.b16 %v285, %v282
      %v351 = vunpack.c.l.b16 %v194
      %v352 = vunpack.c.l.b16 %v195
      %v353 = vunpack.c.l.b16 %v196
      %v354 = vunpack.c.l.b16 %v197
      %v355 = vunpack.c.l.b16 %v198
      %v356 = vunpack.c.l.b16 %v199
      %v357 = vunpack.c.l.b16 %v200
      %v358 = vunpack.c.l.b16 %v201
      %v359 = vunpack.c.l.b16 %v202
      %v360 = vunpack.c.l.b16 %v203
      %v361 = vunpack.c.l.b16 %v204
      %v362 = vunpack.c.l.b16 %v205
      %v363 = vunpack.c.l.b16 %v206
      %v364 = vunpack.c.l.b16 %v207
      %v365 = vunpack.c.l.b16 %v208
      %v366 = vunpack.c.l.b16 %v209
      %v367 = vunpack.c.l.b16 %v210
      %v368 = vunpack.c.l.b16 %v211
      %v369 = vunpack.c.l.b16 %v212
      %v370 = vunpack.c.l.b16 %v213
      %v371 = vunpack.c.l.b16 %v214
      %v372 = vunpack.c.l.b16 %v215
      %v373 = vunpack.c.l.b16 %v216
      %v374 = vunpack.c.l.b16 %v217
      %v375 = vunpack.c.l.b16 %v218
      %v376 = vunpack.c.l.b16 %v219
      %v377 = vunpack.c.l.b16 %v220
      %v378 = vunpack.c.l.b16 %v221
      %v379 = vunpack.c.l.b16 %v222
      %v380 = vunpack.c.l.b16 %v223
      %v381 = vunpack.c.l.b16 %v224
      %v382 = vunpack.c.l.b16 %v225
      %v383 = vunpack.c.l.b16 %v226
      %v384 = vunpack.c.l.b16 %v227
      %v385 = vunpack.c.l.b16 %v228
      %v386 = vunpack.c.l.b16 %v229
      %v387 = vunpack.c.l.b16 %v230
      %v388 = vunpack.c.l.b16 %v231
      %v389 = vunpack.c.l.b16 %v232
      %v390 = vunpack.c.l.b16 %v233
      %v391 = vunpack.c.l.b16 %v234
      %v392 = vunpack.c.l.b16 %v235
      %v393 = vunpack.c.l.b16 %v236
      %v394 = vunpack.c.l.b16 %v237
      %v395 = vunpack.c.l.b16 %v238
      %v396 = vpack.c.b16 %v352, %v351
      %v397 = vpack.c.b16 %v354, %v353
      %v398 = vpack.c.b16 %v356, %v355
      %v399 = vpack.c.b16 %v358, %v357
      %v400 = vpack.c.b16 %v360, %v359
      %v401 = vpack.c.b16 %v362, %v361
      %v402 = vpack.c.b16 %v364, %v363
      %v403 = vpack.c.b16 %v366, %v365
      %v404 = vpack.c.b16 %v368, %v367
      %v405 = vpack.c.b16 %v370, %v369
      %v406 = vpack.c.b16 %v372, %v371
      %v407 = vpack.c.b16 %v374, %v373
      %v408 = vpack.c.b16 %v376, %v375
      %v409 = vpack.c.b16 %v378, %v377
      %v410 = vpack.c.b16 %v380, %v379
      %v411 = vpack.c.b16 %v382, %v381
      %v412 = vpack.c.b16 %v384, %v383
      %v413 = vpack.c.b16 %v386, %v385
      %v414 = vpack.c.b16 %v388, %v387
      %v415 = vpack.c.b16 %v390, %v389
      %v416 = vpack.c.b16 %v392, %v391
      %v417 = vpack.c.b16 %v394, %v393
      %v418 = vpack.c.b16 %v395, %v395
      %vm441 = vcmask 850944
      %v443 = vsel %vm441, %v288, 0
      %v446 = vsel %vm441, %v291, 0
      %v449 = vsel %vm441, %v294, 0
      %v452 = vsel %vm441, %v297, 0
      %vm454 = vcmask 1043456
      %v456 = vsel %vm454, %v418, 0
      %458 = vmatprep.subr.bf16.mxu0 0
      %459 = vmatpush1.bf16.msra.mxu0 %v396
      %460 = vmatprep.subr.bf16.mxu0 0
      %461 = vmatpush1.bf16.msra.mxu0 %v397
      %462 = vmatprep.subr.bf16.mxu0 0
      %463 = vmatpush1.bf16.msra.mxu0 %v398
      %464 = vmatprep.subr.bf16.mxu0 0
      %465 = vmatpush1.bf16.msra.mxu0 %v399
      %466 = vmatprep.subr.bf16.mxu0 0
      %467 = vmatpush1.bf16.msra.mxu0 %v400
      %468 = vmatprep.subr.bf16.mxu0 0
      %469 = vmatpush1.bf16.msra.mxu0 %v401
      %470 = vmatprep.subr.bf16.mxu0 0
      %471 = vmatpush1.bf16.msra.mxu0 %v402
      %472 = vmatprep.subr.bf16.mxu0 0
      %473 = vmatpush1.bf16.msra.mxu0 %v403
      %474 = vmatprep.subr.bf16.mxu0 0
      %475 = vmatpush1.bf16.msra.mxu0 %v404
      %476 = vmatprep.subr.bf16.mxu0 0
      %477 = vmatpush1.bf16.msra.mxu0 %v405
      %478 = vmatprep.subr.bf16.mxu0 0
      %479 = vmatpush1.bf16.msra.mxu0 %v406
      %480 = vmatprep.subr.bf16.mxu0 0
      %481 = vmatpush1.bf16.msra.mxu0 %v407
      %482 = vmatprep.subr.bf16.mxu0 0
      %483 = vmatpush1.bf16.msra.mxu0 %v408
      %484 = vmatprep.subr.bf16.mxu0 0
      %485 = vmatpush1.bf16.msra.mxu0 %v409
      %486 = vmatprep.subr.bf16.mxu0 0
      %487 = vmatpush1.bf16.msra.mxu0 %v410
      %488 = vmatprep.subr.bf16.mxu0 0
      %489 = vmatpush1.bf16.msra.mxu0 %v411
      %490 = vmatprep.mubr.bf16.mxu0 %v287
      %491 = vmatmul.mubr.bf16.gmra.mrb[0].mxu0 %v286
      %v492 = vpop.f32.mrb[0].mxu0
      %v493 = vadd.f32 %v244, %v492
      %v494 = vpop.f32.mrb[0].mxu0
      %v495 = vpop.f32.mrb[0].mxu0
      %v496 = vadd.f32 %v244, %v495
      %v497 = vpop.f32.mrb[0].mxu0
      %498 = vmatprep.mubr.bf16.mxu0 %v290
      %499 = vmatmul.mubr.bf16.gmra.mrb[0].mxu0 %v289
      %v500 = vpop.f32.mrb[0].mxu0
      %v501 = vadd.f32 %v244, %v500
      %v502 = vpop.f32.mrb[0].mxu0
      %v503 = vpop.f32.mrb[0].mxu0
      %v504 = vadd.f32 %v244, %v503
      %v505 = vpop.f32.mrb[0].mxu0
      %506 = vmatprep.mubr.bf16.mxu0 %v293
      %507 = vmatmul.mubr.bf16.gmra.mrb[0].mxu0 %v292
      %v508 = vpop.f32.mrb[0].mxu0
      %v509 = vadd.f32 %v244, %v508
      %v510 = vpop.f32.mrb[0].mxu0
      %v511 = vpop.f32.mrb[0].mxu0
      %v512 = vadd.f32 %v244, %v511
      %v513 = vpop.f32.mrb[0].mxu0
      %514 = vmatprep.mubr.bf16.mxu0 %v296
      %515 = vmatmul.mubr.bf16.gmra.mrb[0].mxu0 %v295
      %v516 = vpop.f32.mrb[0].mxu0
      %v517 = vadd.f32 %v244, %v516
      %v518 = vpop.f32.mrb[0].mxu0
      %v519 = vpop.f32.mrb[0].mxu0
      %v520 = vadd.f32 %v244, %v519
      %v521 = vpop.f32.mrb[0].mxu0
      %522 = vdwg.mxu0
      %523 = vmatprep.subr.bf16.mxu0 0
      %524 = vmatpush1.bf16.msra.mxu0 %v412
      %525 = vmatprep.subr.bf16.mxu0 0
      %526 = vmatpush1.bf16.msra.mxu0 %v413
      %527 = vmatprep.subr.bf16.mxu0 0
      %528 = vmatpush1.bf16.msra.mxu0 %v414
      %529 = vmatprep.subr.bf16.mxu0 0
      %530 = vmatpush1.bf16.msra.mxu0 %v415
      %531 = vmatprep.subr.bf16.mxu0 0
      %532 = vmatpush1.bf16.msra.mxu0 %v416
      %533 = vmatprep.subr.bf16.mxu0 0
      %534 = vmatpush1.bf16.msra.mxu0 %v417
      %535 = vmatprep.subr.bf16.mxu0 0
      %536 = vmatpush1.bf16.msra.mxu0 %v456
      %537 = vmatprep.subr.bf16.mxu0 0
      %538 = vmatpush1.bf16.msra.mxu0 0
      %539 = vmatprep.subr.bf16.mxu0 0
      %540 = vmatpush1.bf16.msra.mxu0 0
      %541 = vmatprep.subr.bf16.mxu0 0
      %542 = vmatpush1.bf16.msra.mxu0 0
      %543 = vmatprep.subr.bf16.mxu0 0
      %544 = vmatpush1.bf16.msra.mxu0 0
      %545 = vmatprep.subr.bf16.mxu0 0
      %546 = vmatpush1.bf16.msra.mxu0 0
      %547 = vmatprep.subr.bf16.mxu0 0
      %548 = vmatpush1.bf16.msra.mxu0 0
      %549 = vmatprep.subr.bf16.mxu0 0
      %550 = vmatpush1.bf16.msra.mxu0 0
      %551 = vmatprep.subr.bf16.mxu0 0
      %552 = vmatpush1.bf16.msra.mxu0 0
      %553 = vmatprep.subr.bf16.mxu0 0
      %554 = vmatpush1.bf16.msra.mxu0 0
      %555 = vmatprep.mubr.bf16.mxu0 0
      %556 = vmatmul.mubr.bf16.gmra.mrb[0].mxu0 %v443
      %v557 = vpop.f32.mrb[0].mxu0
      %v558 = vadd.f32 %v493, %v557
      %v559 = vpop.f32.mrb[0].mxu0
      %v560 = vpop.f32.mrb[0].mxu0
      %v561 = vadd.f32 %v496, %v560
      %v562 = vpop.f32.mrb[0].mxu0
      %563 = vmatprep.mubr.bf16.mxu0 0
      %564 = vmatmul.mubr.bf16.gmra.mrb[0].mxu0 %v446
      %v565 = vpop.f32.mrb[0].mxu0
      %v566 = vadd.f32 %v501, %v565
      %v567 = vpop.f32.mrb[0].mxu0
      %v568 = vpop.f32.mrb[0].mxu0
      %v569 = vadd.f32 %v504, %v568
      %v570 = vpop.f32.mrb[0].mxu0
      %571 = vmatprep.mubr.bf16.mxu0 0
      %572 = vmatmul.mubr.bf16.gmra.mrb[0].mxu0 %v449
      %v573 = vpop.f32.mrb[0].mxu0
      %v574 = vadd.f32 %v509, %v573
      %v575 = vpop.f32.mrb[0].mxu0
      %v576 = vpop.f32.mrb[0].mxu0
      %v577 = vadd.f32 %v512, %v576
      %v578 = vpop.f32.mrb[0].mxu0
      %579 = vmatprep.mubr.bf16.mxu0 0
      %580 = vmatmul.mubr.bf16.gmra.mrb[0].mxu0 %v452
      %v581 = vpop.f32.mrb[0].mxu0
      %v582 = vadd.f32 %v517, %v581
      %v583 = vpop.f32.mrb[0].mxu0
      %v584 = vpop.f32.mrb[0].mxu0
      %v585 = vadd.f32 %v520, %v584
      %v586 = vpop.f32.mrb[0].mxu0
      %587 = vdwg.mxu0
      %vm588 = vcmp.ge.f32.partialorder %v558, 0.0
      %vm589 = vcmp.ge.f32.partialorder %v561, 0.0
      %vm590 = vcmp.ge.f32.partialorder %v566, 0.0
      %vm591 = vcmp.ge.f32.partialorder %v569, 0.0
      %vm592 = vcmp.ge.f32.partialorder %v574, 0.0
      %vm593 = vcmp.ge.f32.partialorder %v577, 0.0
      %vm594 = vcmp.ge.f32.partialorder %v582, 0.0
      %vm595 = vcmp.ge.f32.partialorder %v585, 0.0
      %v596 = vmul.f32 %v558, 0.01
      %v597 = vmul.f32 %v561, 0.01
      %v598 = vmul.f32 %v566, 0.01
      %v599 = vmul.f32 %v569, 0.01
      %v600 = vmul.f32 %v574, 0.01
      %v601 = vmul.f32 %v577, 0.01
      %v602 = vmul.f32 %v582, 0.01
      %v603 = vmul.f32 %v585, 0.01
      %v604 = vsel %vm588, %v558, %v596
      %v605 = vsel %vm589, %v561, %v597
      %v606 = vsel %vm590, %v566, %v598
      %v607 = vsel %vm591, %v569, %v599
      %v608 = vsel %vm592, %v574, %v600
      %v609 = vsel %vm593, %v577, %v601
      %v610 = vsel %vm594, %v582, %v602
      %v611 = vsel %vm595, %v585, %v603
      %v612 = vpack.c.bf16 %v605, %v604
      %v613 = vpack.c.bf16 %v607, %v606
      %v614 = vpack.c.bf16 %v609, %v608
      %v615 = vpack.c.bf16 %v611, %v610
      %v620 = vunpack.c.l.b16 %v612
      %v621 = vunpack.c.h.b16 %v612
      %v622 = vunpack.c.l.b16 %v613
      %v623 = vunpack.c.h.b16 %v613
      %v624 = vunpack.c.l.b16 %v614
      %v625 = vunpack.c.h.b16 %v614
      %v626 = vunpack.c.l.b16 %v615
      %v627 = vunpack.c.h.b16 %v615
      %v628 = vpack.c.b16 %v620, %v620
      %v629 = vpack.c.b16 %v621, %v621
      %v630 = vpack.c.b16 %v622, %v622
      %v631 = vpack.c.b16 %v623, %v623
      %v632 = vpack.c.b16 %v624, %v624
      %v633 = vpack.c.b16 %v625, %v625
      %v634 = vpack.c.b16 %v626, %v626
      %v635 = vpack.c.b16 %v627, %v627
      %644 = vst [vmem:[%s175] sm:$0xf] %v628
      %645 = vst [vmem:[%s175 + $0x4] sm:$0xf] %v629
      %646 = vst [vmem:[%s175 + $0x8] sm:$0xf] %v630
      %647 = vst [vmem:[%s175 + $0xc] sm:$0xf] %v631
      %648 = vst [vmem:[%s175 + $0x10] sm:$0xf] %v632
      %649 = vst [vmem:[%s175 + $0x14] sm:$0xf] %v633
      %650 = vst [vmem:[%s175 + $0x18] sm:$0xf] %v634
      %651 = vst [vmem:[%s175 + $0x1c] sm:$0xf] %v635
      %s652 = smul.u32 8, %s14
      %p653 = scmp.lt.s32.totalorder %s652, 15
      %s654 = scalar_select %p653, %s652, 15
      %s655 = smul.addr %s654, 4
      %s656 = scalar_lea.vmem %s3, %s655
      // Predicated region
      $region33: #{custom_cnn_forward.6} parent=31 // pred_check
        %p657 = pneg %p100
      $region34: #{custom_cnn_forward.6} parent=31 // pred_check_branch
        %659 = sbr.rel (%p657) target = $region36
      $region35: #{custom_cnn_forward.6} parent=31 // pred_region
        %s660 = smul.u32 8, %s14
      $region36: #{custom_cnn_forward.6} parent=31 // pred_fallthru
        _
    $region32: #{custom_cnn_forward.6} parent=5 // pred_fallthru
      _
    %p661 = scmp.le.s32.totalorder 2, %s9
    // Predicated region
    $region37: #{custom_cnn_forward.6} parent=5 // pred_check
      %p662 = pneg %p661
    $region38: #{custom_cnn_forward.6} parent=5 // pred_check_branch
      %664 = sbr.rel (%p662) target = $region40
    $region39: #{custom_cnn_forward.6} parent=5 // pred_region
      %s665 = ssub.s32 %s9, 2
      // Predicated region
      $region41: #{custom_cnn_forward.6} parent=39 // pred_check
        %p666 = pneg %p106
      $region42: #{custom_cnn_forward.6} parent=39 // pred_check_branch
        %668 = sbr.rel (%p666) target = $region44
      $region43: #{custom_cnn_forward.6} parent=39 // pred_region
        %s669 = smul.u32 8, %s15
        %p670 = scmp.lt.s32.totalorder %s669, 15
        %s671 = scalar_select %p670, %s669, 15
        %s672 = smul.addr %s671, 4
        %s673 = scalar_lea.vmem %s3, %s672
      $region44: #{custom_cnn_forward.6} parent=39 // pred_fallthru
        _
    $region40: #{custom_cnn_forward.6} parent=5 // pred_fallthru
      _
  $region6: #{custom_cnn_forward.6} parent=0 // loop_footer
    %s13 = sadd.s32 1, %s9
  $region7: #{custom_cnn_forward.6} parent=0 // loop_footer_branch
    %8 = sbr.rel target = $region3
  $region8: #{custom_cnn_forward.6} parent=0 // loop_exit
    _

// kernel: custom_cnn_forward.7
$region0: #{custom_cnn_forward.7}
  #allocation0 [shape = 'u32[]', space=smem, size = 0x4, offset = 0x4, fixed_abs, tag = 'smem constant byte address 0x4 - core index']
  #allocation1 [shape = 'u32[144,128]{1,0:T(1,128)}', space=vmem, size = 0x12000, scoped, tag = 'internal scratch']
  %s0 = inlined_call_operand.vmem [shape: bf16[2,1280], index: 0, kind: input, shape index: {}]
  %s1 = inlined_call_operand.vmem [shape: bf16[1280,128], index: 1, kind: input, shape index: {}]
  %s2 = inlined_call_operand.vmem [shape: f32[1,128], index: 2, kind: input, shape index: {}]
  %s3 = inlined_call_operand.vmem [shape: f32[128,128], index: 3, kind: input, shape index: {}]
  %s4 = inlined_call_operand.vmem [shape: f32[1,128], index: 4, kind: input, shape index: {}]
  %s5 = inlined_call_operand.hbm [shape: f32[2,128], index: 5, kind: output, shape index: {}]
  %s6 = sld [smem:[#allocation0]]
  $region30: #{custom_cnn_forward.7} parent=0
    _
  %s8 = ssub.s32 1, %s6
  %s9 = scalar_select 0, %s8, %s6
  $region1: #{custom_cnn_forward.7} parent=0
    #allocation2 [shape = 'u8[1024]{0}', space=vmem, size = 0x400, scoped, tag = 'output window, operand 0, single buffered']
    #allocation3 [shape = 's32[1]{0}', space=sflag, size = 0x4, scoped, tag = 'scoped memory for custom_cnn_forward.7']
    %10 = vsyncpa [#allocation3], 0
    // Predicated region
    $region2: #{custom_cnn_forward.7} parent=1 // pred_check
      _
    $region3: #{custom_cnn_forward.7} parent=1 // pred_check_branch
      %12 = sbr.rel (0) target = $region5
    $region4: #{custom_cnn_forward.7} parent=1 // pred_region
      _
    $region5: #{custom_cnn_forward.7} parent=1 // pred_fallthru
      _
    // Predicated region
    $region6: #{custom_cnn_forward.7} parent=1 // pred_check
      _
    $region7: #{custom_cnn_forward.7} parent=1 // pred_check_branch
      %14 = sbr.rel (0) target = $region9
    $region8: #{custom_cnn_forward.7} parent=1 // pred_region
      _
    $region9: #{custom_cnn_forward.7} parent=1 // pred_fallthru
      _
    // Predicated region
    $region10: #{custom_cnn_forward.7} parent=1 // pred_check
      _
    $region11: #{custom_cnn_forward.7} parent=1 // pred_check_branch
      %16 = sbr.rel (0) target = $region13
    $region12: #{custom_cnn_forward.7} parent=1 // pred_region
      _
    $region13: #{custom_cnn_forward.7} parent=1 // pred_fallthru
      _
    // Predicated region
    $region14: #{custom_cnn_forward.7} parent=1 // pred_check
      _
    $region15: #{custom_cnn_forward.7} parent=1 // pred_check_branch
      %18 = sbr.rel (0) target = $region17
    $region16: #{custom_cnn_forward.7} parent=1 // pred_region
      _
    $region17: #{custom_cnn_forward.7} parent=1 // pred_fallthru
      _
    // Predicated region
    $region18: #{custom_cnn_forward.7} parent=1 // pred_check
      _
    $region19: #{custom_cnn_forward.7} parent=1 // pred_check_branch
      %20 = sbr.rel (0) target = $region21
    $region20: #{custom_cnn_forward.7} parent=1 // pred_region
      _
    $region21: #{custom_cnn_forward.7} parent=1 // pred_fallthru
      _
    %v22 = vld [vmem:[%s0] sm:$0xff]
    %v23 = vld [vmem:[%s0 + $0x8] sm:$0x3]
    %v24 = vld [vmem:[%s1] sm:$0xf]
    %v25 = vld [vmem:[%s1 + $0x4] sm:$0xf]
    %v26 = vld [vmem:[%s1 + $0x8] sm:$0xf]
    %v27 = vld [vmem:[%s1 + $0xc] sm:$0xf]
    %v28 = vld [vmem:[%s1 + $0x10] sm:$0xf]
    %v29 = vld [vmem:[%s1 + $0x14] sm:$0xf]
    %v30 = vld [vmem:[%s1 + $0x18] sm:$0xf]
    %v31 = vld [vmem:[%s1 + $0x1c] sm:$0xf]
    %v32 = vld [vmem:[%s1 + $0x20] sm:$0xf]
    %v33 = vld [vmem:[%s1 + $0x24] sm:$0xf]
    %v34 = vld [vmem:[%s1 + $0x28] sm:$0xf]
    %v35 = vld [vmem:[%s1 + $0x2c] sm:$0xf]
    %v36 = vld [vmem:[%s1 + $0x30] sm:$0xf]
    %v37 = vld [vmem:[%s1 + $0x34] sm:$0xf]
    %v38 = vld [vmem:[%s1 + $0x38] sm:$0xf]
    %v39 = vld [vmem:[%s1 + $0x3c] sm:$0xf]
    %v40 = vld [vmem:[%s1 + $0x40] sm:$0xf]
    %v41 = vld [vmem:[%s1 + $0x44] sm:$0xf]
    %v42 = vld [vmem:[%s1 + $0x48] sm:$0xf]
    %v43 = vld [vmem:[%s1 + $0x4c] sm:$0xf]
    %v44 = vld [vmem:[%s1 + $0x50] sm:$0xf]
    %v45 = vld [vmem:[%s1 + $0x54] sm:$0xf]
    %v46 = vld [vmem:[%s1 + $0x58] sm:$0xf]
    %v47 = vld [vmem:[%s1 + $0x5c] sm:$0xf]
    %v48 = vld [vmem:[%s1 + $0x60] sm:$0xf]
    %v49 = vld [vmem:[%s1 + $0x64] sm:$0xf]
    %v50 = vld [vmem:[%s1 + $0x68] sm:$0xf]
    %v51 = vld [vmem:[%s1 + $0x6c] sm:$0xf]
    %v52 = vld [vmem:[%s1 + $0x70] sm:$0xf]
    %v53 = vld [vmem:[%s1 + $0x74] sm:$0xf]
    %v54 = vld [vmem:[%s1 + $0x78] sm:$0xf]
    %v55 = vld [vmem:[%s1 + $0x7c] sm:$0xf]
    %v56 = vld [vmem:[%s1 + $0x80] sm:$0xf]
    %v57 = vld [vmem:[%s1 + $0x84] sm:$0xf]
    %v58 = vld [vmem:[%s1 + $0x88] sm:$0xf]
    %v59 = vld [vmem:[%s1 + $0x8c] sm:$0xf]
    %v60 = vld [vmem:[%s1 + $0x90] sm:$0xf]
    %v61 = vld [vmem:[%s1 + $0x94] sm:$0xf]
    %v62 = vld [vmem:[%s1 + $0x98] sm:$0xf]
    %v63 = vld [vmem:[%s1 + $0x9c] sm:$0xf]
    %v64 = vld [vmem:[%s1 + $0xa0] sm:$0xf]
    %v65 = vld [vmem:[%s1 + $0xa4] sm:$0xf]
    %v66 = vld [vmem:[%s1 + $0xa8] sm:$0xf]
    %v67 = vld [vmem:[%s1 + $0xac] sm:$0xf]
    %v68 = vld [vmem:[%s1 + $0xb0] sm:$0xf]
    %v69 = vld [vmem:[%s1 + $0xb4] sm:$0xf]
    %v70 = vld [vmem:[%s1 + $0xb8] sm:$0xf]
    %v71 = vld [vmem:[%s1 + $0xbc] sm:$0xf]
    %v72 = vld [vmem:[%s1 + $0xc0] sm:$0xf]
    %v73 = vld [vmem:[%s1 + $0xc4] sm:$0xf]
    %v74 = vld [vmem:[%s1 + $0xc8] sm:$0xf]
    %v75 = vld [vmem:[%s1 + $0xcc] sm:$0xf]
    %v76 = vld [vmem:[%s1 + $0xd0] sm:$0xf]
    %v77 = vld [vmem:[%s1 + $0xd4] sm:$0xf]
    %v78 = vld [vmem:[%s1 + $0xd8] sm:$0xf]
    %v79 = vld [vmem:[%s1 + $0xdc] sm:$0xf]
    %v80 = vld [vmem:[%s1 + $0xe0] sm:$0xf]
    %v81 = vld [vmem:[%s1 + $0xe4] sm:$0xf]
    %v82 = vld [vmem:[%s1 + $0xe8] sm:$0xf]
    %v83 = vld [vmem:[%s1 + $0xec] sm:$0xf]
    %v84 = vld [vmem:[%s1 + $0xf0] sm:$0xf]
    %v85 = vld [vmem:[%s1 + $0xf4] sm:$0xf]
    %v86 = vld [vmem:[%s1 + $0xf8] sm:$0xf]
    %v87 = vld [vmem:[%s1 + $0xfc] sm:$0xf]
    %v88 = vld [vmem:[%s1 + $0x100] sm:$0xf]
    %v89 = vld [vmem:[%s1 + $0x104] sm:$0xf]
    %v90 = vld [vmem:[%s1 + $0x108] sm:$0xf]
    %v91 = vld [vmem:[%s1 + $0x10c] sm:$0xf]
    %v92 = vld [vmem:[%s1 + $0x110] sm:$0xf]
    %v93 = vld [vmem:[%s1 + $0x114] sm:$0xf]
    %v94 = vld [vmem:[%s1 + $0x118] sm:$0xf]
    %v95 = vld [vmem:[%s1 + $0x11c] sm:$0xf]
    %v96 = vld [vmem:[%s1 + $0x120] sm:$0xf]
    %v97 = vld [vmem:[%s1 + $0x124] sm:$0xf]
    %v98 = vld [vmem:[%s1 + $0x128] sm:$0xf]
    %v99 = vld [vmem:[%s1 + $0x12c] sm:$0xf]
    %v100 = vld [vmem:[%s1 + $0x130] sm:$0xf]
    %v101 = vld [vmem:[%s1 + $0x134] sm:$0xf]
    %v102 = vld [vmem:[%s1 + $0x138] sm:$0xf]
    %v103 = vld [vmem:[%s1 + $0x13c] sm:$0xf]
    %v104 = vld [vmem:[%s1 + $0x140] sm:$0xf]
    %v105 = vld [vmem:[%s1 + $0x144] sm:$0xf]
    %v106 = vld [vmem:[%s1 + $0x148] sm:$0xf]
    %v107 = vld [vmem:[%s1 + $0x14c] sm:$0xf]
    %v108 = vld [vmem:[%s1 + $0x150] sm:$0xf]
    %v109 = vld [vmem:[%s1 + $0x154] sm:$0xf]
    %v110 = vld [vmem:[%s1 + $0x158] sm:$0xf]
    %v111 = vld [vmem:[%s1 + $0x15c] sm:$0xf]
    %v112 = vld [vmem:[%s1 + $0x160] sm:$0xf]
    %v113 = vld [vmem:[%s1 + $0x164] sm:$0xf]
    %v114 = vld [vmem:[%s1 + $0x168] sm:$0xf]
    %v115 = vld [vmem:[%s1 + $0x16c] sm:$0xf]
    %v116 = vld [vmem:[%s1 + $0x170] sm:$0xf]
    %v117 = vld [vmem:[%s1 + $0x174] sm:$0xf]
    %v118 = vld [vmem:[%s1 + $0x178] sm:$0xf]
    %v119 = vld [vmem:[%s1 + $0x17c] sm:$0xf]
    %v120 = vld [vmem:[%s1 + $0x180] sm:$0xf]
    %v121 = vld [vmem:[%s1 + $0x184] sm:$0xf]
    %v122 = vld [vmem:[%s1 + $0x188] sm:$0xf]
    %v123 = vld [vmem:[%s1 + $0x18c] sm:$0xf]
    %v124 = vld [vmem:[%s1 + $0x190] sm:$0xf]
    %v125 = vld [vmem:[%s1 + $0x194] sm:$0xf]
    %v126 = vld [vmem:[%s1 + $0x198] sm:$0xf]
    %v127 = vld [vmem:[%s1 + $0x19c] sm:$0xf]
    %v128 = vld [vmem:[%s1 + $0x1a0] sm:$0xf]
    %v129 = vld [vmem:[%s1 + $0x1a4] sm:$0xf]
    %v130 = vld [vmem:[%s1 + $0x1a8] sm:$0xf]
    %v131 = vld [vmem:[%s1 + $0x1ac] sm:$0xf]
    %v132 = vld [vmem:[%s1 + $0x1b0] sm:$0xf]
    %v133 = vld [vmem:[%s1 + $0x1b4] sm:$0xf]
    %v134 = vld [vmem:[%s1 + $0x1b8] sm:$0xf]
    %v135 = vld [vmem:[%s1 + $0x1bc] sm:$0xf]
    %v136 = vld [vmem:[%s1 + $0x1c0] sm:$0xf]
    %v137 = vld [vmem:[%s1 + $0x1c4] sm:$0xf]
    %v138 = vld [vmem:[%s1 + $0x1c8] sm:$0xf]
    %v139 = vld [vmem:[%s1 + $0x1cc] sm:$0xf]
    %v140 = vld [vmem:[%s1 + $0x1d0] sm:$0xf]
    %v141 = vld [vmem:[%s1 + $0x1d4] sm:$0xf]
    %v142 = vld [vmem:[%s1 + $0x1d8] sm:$0xf]
    %v143 = vld [vmem:[%s1 + $0x1dc] sm:$0xf]
    %v144 = vld [vmem:[%s1 + $0x1e0] sm:$0xf]
    %v145 = vld [vmem:[%s1 + $0x1e4] sm:$0xf]
    %v146 = vld [vmem:[%s1 + $0x1e8] sm:$0xf]
    %v147 = vld [vmem:[%s1 + $0x1ec] sm:$0xf]
    %v148 = vld [vmem:[%s1 + $0x1f0] sm:$0xf]
    %v149 = vld [vmem:[%s1 + $0x1f4] sm:$0xf]
    %v150 = vld [vmem:[%s1 + $0x1f8] sm:$0xf]
    %v151 = vld [vmem:[%s1 + $0x1fc] sm:$0xf]
    %v152 = vld [vmem:[%s1 + $0x200] sm:$0xf]
    %v153 = vld [vmem:[%s1 + $0x204] sm:$0xf]
    %v154 = vld [vmem:[%s1 + $0x208] sm:$0xf]
    %v155 = vld [vmem:[%s1 + $0x20c] sm:$0xf]
    %v156 = vld [vmem:[%s1 + $0x210] sm:$0xf]
    %v157 = vld [vmem:[%s1 + $0x214] sm:$0xf]
    %v158 = vld [vmem:[%s1 + $0x218] sm:$0xf]
    %v159 = vld [vmem:[%s1 + $0x21c] sm:$0xf]
    %v160 = vld [vmem:[%s1 + $0x220] sm:$0xf]
    %v161 = vld [vmem:[%s1 + $0x224] sm:$0xf]
    %v162 = vld [vmem:[%s1 + $0x228] sm:$0xf]
    %v163 = vld [vmem:[%s1 + $0x22c] sm:$0xf]
    %v164 = vld [vmem:[%s1 + $0x230] sm:$0xf]
    %v165 = vld [vmem:[%s1 + $0x234] sm:$0xf]
    %v166 = vld [vmem:[%s1 + $0x238] sm:$0xf]
    %v167 = vld [vmem:[%s1 + $0x23c] sm:$0xf]
    %v168 = vld [vmem:[%s1 + $0x240] sm:$0xf]
    %v169 = vld [vmem:[%s1 + $0x244] sm:$0xf]
    %v170 = vld [vmem:[%s1 + $0x248] sm:$0xf]
    %v171 = vld [vmem:[%s1 + $0x24c] sm:$0xf]
    %v172 = vld [vmem:[%s1 + $0x250] sm:$0xf]
    %v173 = vld [vmem:[%s1 + $0x254] sm:$0xf]
    %v174 = vld [vmem:[%s1 + $0x258] sm:$0xf]
    %v175 = vld [vmem:[%s1 + $0x25c] sm:$0xf]
    %v176 = vld [vmem:[%s1 + $0x260] sm:$0xf]
    %v177 = vld [vmem:[%s1 + $0x264] sm:$0xf]
    %v178 = vld [vmem:[%s1 + $0x268] sm:$0xf]
    %v179 = vld [vmem:[%s1 + $0x26c] sm:$0xf]
    %v180 = vld [vmem:[%s1 + $0x270] sm:$0xf]
    %v181 = vld [vmem:[%s1 + $0x274] sm:$0xf]
    %v182 = vld [vmem:[%s1 + $0x278] sm:$0xf]
    %v183 = vld [vmem:[%s1 + $0x27c] sm:$0xf]
    %v184 = vld [vmem:[%s2] sm:$0x1]
    %v186 = vlaneseq
    %v187 = vshrl.u32 %v186, 7
    %v188 = vsub.s32 0, %v187
    %v189 = vrot.slane %v184, %v188
    %v193 = vcombine.high %v22, %v22
    %v195 = vunpack.c.l.s4 1966171168
    %v196 = vunpack.c.0.s8 %v195
    %v197 = vlaneseq
    %v198 = vshrl.u32 %v197, 7
    %v199 = vsub.s32 %v196, %v198
    %v200 = vrot.slane %v22, %v199
    %v202 = vunpack.c.l.s4 1966171168
    %v203 = vunpack.c.0.s8 %v202
    %v204 = vlaneseq
    %v205 = vshrl.u32 %v204, 7
    %v206 = vsub.s32 %v203, %v205
    %v207 = vrot.slane %v193, %v206
    %v208 = vcombine.high %v200, %v200
    %v209 = vcombine.high %v207, %v207
    %v211 = vunpack.c.l.s4 1966171168
    %v212 = vunpack.c.0.s8 %v211
    %v213 = vlaneseq
    %v214 = vshrl.u32 %v213, 7
    %v215 = vsub.s32 %v212, %v214
    %v216 = vrot.slane %v200, %v215
    %v218 = vunpack.c.l.s4 1966171168
    %v219 = vunpack.c.0.s8 %v218
    %v220 = vlaneseq
    %v221 = vshrl.u32 %v220, 7
    %v222 = vsub.s32 %v219, %v221
    %v223 = vrot.slane %v207, %v222
    %v225 = vunpack.c.l.s4 1966171168
    %v226 = vunpack.c.0.s8 %v225
    %v227 = vlaneseq
    %v228 = vshrl.u32 %v227, 7
    %v229 = vsub.s32 %v226, %v228
    %v230 = vrot.slane %v208, %v229
    %v232 = vunpack.c.l.s4 1966171168
    %v233 = vunpack.c.0.s8 %v232
    %v234 = vlaneseq
    %v235 = vshrl.u32 %v234, 7
    %v236 = vsub.s32 %v233, %v235
    %v237 = vrot.slane %v209, %v236
    %v238 = vcombine.high %v216, %v216
    %v239 = vcombine.high %v223, %v223
    %v240 = vcombine.high %v230, %v230
    %v241 = vcombine.high %v237, %v237
    %v243 = vunpack.c.l.s4 1966171168
    %v244 = vunpack.c.0.s8 %v243
    %v245 = vlaneseq
    %v246 = vshrl.u32 %v245, 7
    %v247 = vsub.s32 %v244, %v246
    %v248 = vrot.slane %v23, %v247
    %v249 = vcombine.high %v248, %v248
    %v251 = vunpack.c.l.s4 1966171168
    %v252 = vunpack.c.0.s8 %v251
    %v253 = vlaneseq
    %v254 = vshrl.u32 %v253, 7
    %v255 = vsub.s32 %v252, %v254
    %v256 = vrot.slane %v248, %v255
    %v258 = vunpack.c.l.s4 1966171168
    %v259 = vunpack.c.0.s8 %v258
    %v260 = vlaneseq
    %v261 = vshrl.u32 %v260, 7
    %v262 = vsub.s32 %v259, %v261
    %v263 = vrot.slane %v249, %v262
    %v434 = vunpack.c.l.b16 %v24
    %v435 = vunpack.c.l.b16 %v25
    %v436 = vunpack.c.l.b16 %v26
    %v437 = vunpack.c.l.b16 %v27
    %v438 = vunpack.c.l.b16 %v28
    %v439 = vunpack.c.l.b16 %v29
    %v440 = vunpack.c.l.b16 %v30
    %v441 = vunpack.c.l.b16 %v31
    %v442 = vunpack.c.l.b16 %v32
    %v443 = vunpack.c.l.b16 %v33
    %v444 = vunpack.c.l.b16 %v34
    %v445 = vunpack.c.l.b16 %v35
    %v446 = vunpack.c.l.b16 %v36
    %v447 = vunpack.c.l.b16 %v37
    %v448 = vunpack.c.l.b16 %v38
    %v449 = vunpack.c.l.b16 %v39
    %v450 = vunpack.c.l.b16 %v40
    %v451 = vunpack.c.l.b16 %v41
    %v452 = vunpack.c.l.b16 %v42
    %v453 = vunpack.c.l.b16 %v43
    %v454 = vunpack.c.l.b16 %v44
    %v455 = vunpack.c.l.b16 %v45
    %v456 = vunpack.c.l.b16 %v46
    %v457 = vunpack.c.l.b16 %v47
    %v458 = vunpack.c.l.b16 %v48
    %v459 = vunpack.c.l.b16 %v49
    %v460 = vunpack.c.l.b16 %v50
    %v461 = vunpack.c.l.b16 %v51
    %v462 = vunpack.c.l.b16 %v52
    %v463 = vunpack.c.l.b16 %v53
    %v464 = vunpack.c.l.b16 %v54
    %v465 = vunpack.c.l.b16 %v55
    %v466 = vunpack.c.l.b16 %v56
    %v467 = vunpack.c.l.b16 %v57
    %v468 = vunpack.c.l.b16 %v58
    %v469 = vunpack.c.l.b16 %v59
    %v470 = vunpack.c.l.b16 %v60
    %v471 = vunpack.c.l.b16 %v61
    %v472 = vunpack.c.l.b16 %v62
    %v473 = vunpack.c.l.b16 %v63
    %v474 = vunpack.c.l.b16 %v64
    %v475 = vunpack.c.l.b16 %v65
    %v476 = vunpack.c.l.b16 %v66
    %v477 = vunpack.c.l.b16 %v67
    %v478 = vunpack.c.l.b16 %v68
    %v479 = vunpack.c.l.b16 %v69
    %v480 = vunpack.c.l.b16 %v70
    %v481 = vunpack.c.l.b16 %v71
    %v482 = vunpack.c.l.b16 %v72
    %v483 = vunpack.c.l.b16 %v73
    %v484 = vunpack.c.l.b16 %v74
    %v485 = vunpack.c.l.b16 %v75
    %v486 = vunpack.c.l.b16 %v76
    %v487 = vunpack.c.l.b16 %v77
    %v488 = vunpack.c.l.b16 %v78
    %v489 = vunpack.c.l.b16 %v79
    %v490 = vunpack.c.l.b16 %v80
    %v491 = vunpack.c.l.b16 %v81
    %v492 = vunpack.c.l.b16 %v82
    %v493 = vunpack.c.l.b16 %v83
    %v494 = vunpack.c.l.b16 %v84
    %v495 = vunpack.c.l.b16 %v85
    %v496 = vunpack.c.l.b16 %v86
    %v497 = vunpack.c.l.b16 %v87
    %v498 = vunpack.c.l.b16 %v88
    %v499 = vunpack.c.l.b16 %v89
    %v500 = vunpack.c.l.b16 %v90
    %v501 = vunpack.c.l.b16 %v91
    %v502 = vunpack.c.l.b16 %v92
    %v503 = vunpack.c.l.b16 %v93
    %v504 = vunpack.c.l.b16 %v94
    %v505 = vunpack.c.l.b16 %v95
    %v506 = vunpack.c.l.b16 %v96
    %v507 = vunpack.c.l.b16 %v97
    %v508 = vunpack.c.l.b16 %v98
    %v509 = vunpack.c.l.b16 %v99
    %v510 = vunpack.c.l.b16 %v100
    %v511 = vunpack.c.l.b16 %v101
    %v512 = vunpack.c.l.b16 %v102
    %v513 = vunpack.c.l.b16 %v103
    %v514 = vunpack.c.l.b16 %v104
    %v515 = vunpack.c.l.b16 %v105
    %v516 = vunpack.c.l.b16 %v106
    %v517 = vunpack.c.l.b16 %v107
    %v518 = vunpack.c.l.b16 %v108
    %v519 = vunpack.c.l.b16 %v109
    %v520 = vunpack.c.l.b16 %v110
    %v521 = vunpack.c.l.b16 %v111
    %v522 = vunpack.c.l.b16 %v112
    %v523 = vunpack.c.l.b16 %v113
    %v524 = vunpack.c.l.b16 %v114
    %v525 = vunpack.c.l.b16 %v115
    %v526 = vunpack.c.l.b16 %v116
    %v527 = vunpack.c.l.b16 %v117
    %v528 = vunpack.c.l.b16 %v118
    %v529 = vunpack.c.l.b16 %v119
    %v530 = vunpack.c.l.b16 %v120
    %v531 = vunpack.c.l.b16 %v121
    %v532 = vunpack.c.l.b16 %v122
    %v533 = vunpack.c.l.b16 %v123
    %v534 = vunpack.c.l.b16 %v124
    %v535 = vunpack.c.l.b16 %v125
    %v536 = vunpack.c.l.b16 %v126
    %v537 = vunpack.c.l.b16 %v127
    %v538 = vunpack.c.l.b16 %v128
    %v539 = vunpack.c.l.b16 %v129
    %v540 = vunpack.c.l.b16 %v130
    %v541 = vunpack.c.l.b16 %v131
    %v542 = vunpack.c.l.b16 %v132
    %v543 = vunpack.c.l.b16 %v133
    %v544 = vunpack.c.l.b16 %v134
    %v545 = vunpack.c.l.b16 %v135
    %v546 = vunpack.c.l.b16 %v136
    %v547 = vunpack.c.l.b16 %v137
    %v548 = vunpack.c.l.b16 %v138
    %v549 = vunpack.c.l.b16 %v139
    %v550 = vunpack.c.l.b16 %v140
    %v551 = vunpack.c.l.b16 %v141
    %v552 = vunpack.c.l.b16 %v142
    %v553 = vunpack.c.l.b16 %v143
    %v554 = vunpack.c.l.b16 %v144
    %v555 = vunpack.c.l.b16 %v145
    %v556 = vunpack.c.l.b16 %v146
    %v557 = vunpack.c.l.b16 %v147
    %v558 = vunpack.c.l.b16 %v148
    %v559 = vunpack.c.l.b16 %v149
    %v560 = vunpack.c.l.b16 %v150
    %v561 = vunpack.c.l.b16 %v151
    %v562 = vunpack.c.l.b16 %v152
    %v563 = vunpack.c.l.b16 %v153
    %v564 = vunpack.c.l.b16 %v154
    %v565 = vunpack.c.l.b16 %v155
    %v566 = vunpack.c.l.b16 %v156
    %v567 = vunpack.c.l.b16 %v157
    %v568 = vunpack.c.l.b16 %v158
    %v569 = vunpack.c.l.b16 %v159
    %v570 = vunpack.c.l.b16 %v160
    %v571 = vunpack.c.l.b16 %v161
    %v572 = vunpack.c.l.b16 %v162
    %v573 = vunpack.c.l.b16 %v163
    %v574 = vunpack.c.l.b16 %v164
    %v575 = vunpack.c.l.b16 %v165
    %v576 = vunpack.c.l.b16 %v166
    %v577 = vunpack.c.l.b16 %v167
    %v578 = vunpack.c.l.b16 %v168
    %v579 = vunpack.c.l.b16 %v169
    %v580 = vunpack.c.l.b16 %v170
    %v581 = vunpack.c.l.b16 %v171
    %v582 = vunpack.c.l.b16 %v172
    %v583 = vunpack.c.l.b16 %v173
    %v584 = vunpack.c.l.b16 %v174
    %v585 = vunpack.c.l.b16 %v175
    %v586 = vunpack.c.l.b16 %v176
    %v587 = vunpack.c.l.b16 %v177
    %v588 = vunpack.c.l.b16 %v178
    %v589 = vunpack.c.l.b16 %v179
    %v590 = vunpack.c.l.b16 %v180
    %v591 = vunpack.c.l.b16 %v181
    %v592 = vunpack.c.l.b16 %v182
    %v593 = vunpack.c.l.b16 %v183
    %v594 = vpack.c.b16 %v435, %v434
    %v595 = vpack.c.b16 %v437, %v436
    %v596 = vpack.c.b16 %v439, %v438
    %v597 = vpack.c.b16 %v441, %v440
    %v598 = vpack.c.b16 %v443, %v442
    %v599 = vpack.c.b16 %v445, %v444
    %v600 = vpack.c.b16 %v447, %v446
    %v601 = vpack.c.b16 %v449, %v448
    %v602 = vpack.c.b16 %v451, %v450
    %v603 = vpack.c.b16 %v453, %v452
    %v604 = vpack.c.b16 %v455, %v454
    %v605 = vpack.c.b16 %v457, %v456
    %v606 = vpack.c.b16 %v459, %v458
    %v607 = vpack.c.b16 %v461, %v460
    %v608 = vpack.c.b16 %v463, %v462
    %v609 = vpack.c.b16 %v465, %v464
    %v610 = vpack.c.b16 %v467, %v466
    %v611 = vpack.c.b16 %v469, %v468
    %v612 = vpack.c.b16 %v471, %v470
    %v613 = vpack.c.b16 %v473, %v472
    %v614 = vpack.c.b16 %v475, %v474
    %v615 = vpack.c.b16 %v477, %v476
    %v616 = vpack.c.b16 %v479, %v478
    %v617 = vpack.c.b16 %v481, %v480
    %v618 = vpack.c.b16 %v483, %v482
    %v619 = vpack.c.b16 %v485, %v484
    %v620 = vpack.c.b16 %v487, %v486
    %v621 = vpack.c.b16 %v489, %v488
    %v622 = vpack.c.b16 %v491, %v490
    %v623 = vpack.c.b16 %v493, %v492
    %v624 = vpack.c.b16 %v495, %v494
    %v625 = vpack.c.b16 %v497, %v496
    %v626 = vpack.c.b16 %v499, %v498
    %v627 = vpack.c.b16 %v501, %v500
    %v628 = vpack.c.b16 %v503, %v502
    %v629 = vpack.c.b16 %v505, %v504
    %v630 = vpack.c.b16 %v507, %v506
    %v631 = vpack.c.b16 %v509, %v508
    %v632 = vpack.c.b16 %v511, %v510
    %v633 = vpack.c.b16 %v513, %v512
    %v634 = vpack.c.b16 %v515, %v514
    %v635 = vpack.c.b16 %v517, %v516
    %v636 = vpack.c.b16 %v519, %v518
    %v637 = vpack.c.b16 %v521, %v520
    %v638 = vpack.c.b16 %v523, %v522
    %v639 = vpack.c.b16 %v525, %v524
    %v640 = vpack.c.b16 %v527, %v526
    %v641 = vpack.c.b16 %v529, %v528
    %v642 = vpack.c.b16 %v531, %v530
    %v643 = vpack.c.b16 %v533, %v532
    %v644 = vpack.c.b16 %v535, %v534
    %v645 = vpack.c.b16 %v537, %v536
    %v646 = vpack.c.b16 %v539, %v538
    %v647 = vpack.c.b16 %v541, %v540
    %v648 = vpack.c.b16 %v543, %v542
    %v649 = vpack.c.b16 %v545, %v544
    %v650 = vpack.c.b16 %v547, %v546
    %v651 = vpack.c.b16 %v549, %v548
    %v652 = vpack.c.b16 %v551, %v550
    %v653 = vpack.c.b16 %v553, %v552
    %v654 = vpack.c.b16 %v555, %v554
    %v655 = vpack.c.b16 %v557, %v556
    %v656 = vpack.c.b16 %v559, %v558
    %v657 = vpack.c.b16 %v561, %v560
    %v658 = vpack.c.b16 %v563, %v562
    %v659 = vpack.c.b16 %v565, %v564
    %v660 = vpack.c.b16 %v567, %v566
    %v661 = vpack.c.b16 %v569, %v568
    %v662 = vpack.c.b16 %v571, %v570
    %v663 = vpack.c.b16 %v573, %v572
    %v664 = vpack.c.b16 %v575, %v574
    %v665 = vpack.c.b16 %v577, %v576
    %v666 = vpack.c.b16 %v579, %v578
    %v667 = vpack.c.b16 %v581, %v580
    %v668 = vpack.c.b16 %v583, %v582
    %v669 = vpack.c.b16 %v585, %v584
    %v670 = vpack.c.b16 %v587, %v586
    %v671 = vpack.c.b16 %v589, %v588
    %v672 = vpack.c.b16 %v591, %v590
    %v673 = vpack.c.b16 %v593, %v592
    %754 = vmatprep.subr.bf16.mxu0 0
    %755 = vmatpush1.bf16.msra.mxu0 %v594
    %756 = vmatprep.subr.bf16.mxu0 0
    %757 = vmatpush1.bf16.msra.mxu0 %v595
    %758 = vmatprep.subr.bf16.mxu0 0
    %759 = vmatpush1.bf16.msra.mxu0 %v596
    %760 = vmatprep.subr.bf16.mxu0 0
    %761 = vmatpush1.bf16.msra.mxu0 %v597
    %762 = vmatprep.subr.bf16.mxu0 0
    %763 = vmatpush1.bf16.msra.mxu0 %v598
    %764 = vmatprep.subr.bf16.mxu0 0
    %765 = vmatpush1.bf16.msra.mxu0 %v599
    %766 = vmatprep.subr.bf16.mxu0 0
    %767 = vmatpush1.bf16.msra.mxu0 %v600
    %768 = vmatprep.subr.bf16.mxu0 0
    %769 = vmatpush1.bf16.msra.mxu0 %v601
    %770 = vmatprep.subr.bf16.mxu0 0
    %771 = vmatpush1.bf16.msra.mxu0 %v602
    %772 = vmatprep.subr.bf16.mxu0 0
    %773 = vmatpush1.bf16.msra.mxu0 %v603
    %774 = vmatprep.subr.bf16.mxu0 0
    %775 = vmatpush1.bf16.msra.mxu0 %v604
    %776 = vmatprep.subr.bf16.mxu0 0
    %777 = vmatpush1.bf16.msra.mxu0 %v605
    %778 = vmatprep.subr.bf16.mxu0 0
    %779 = vmatpush1.bf16.msra.mxu0 %v606
    %780 = vmatprep.subr.bf16.mxu0 0
    %781 = vmatpush1.bf16.msra.mxu0 %v607
    %782 = vmatprep.subr.bf16.mxu0 0
    %783 = vmatpush1.bf16.msra.mxu0 %v608
    %784 = vmatprep.subr.bf16.mxu0 0
    %785 = vmatpush1.bf16.msra.mxu0 %v609
    %786 = vmatprep.mubr.bf16.mxu0 %v230
    %787 = vmatmul.mubr.bf16.gmra.mrb[0].mxu0 %v216
    %v788 = vpop.f32.mrb[0].mxu0
    %v789 = vadd.f32 %v189, %v788
    %v790 = vpop.f32.mrb[0].mxu0
    %v791 = vpop.f32.mrb[0].mxu0
    %v792 = vpop.f32.mrb[0].mxu0
    %793 = vdwg.mxu0
    %794 = vmatprep.subr.bf16.mxu0 0
    %795 = vmatpush1.bf16.msra.mxu0 %v610
    %796 = vmatprep.subr.bf16.mxu0 0
    %797 = vmatpush1.bf16.msra.mxu0 %v611
    %798 = vmatprep.subr.bf16.mxu0 0
    %799 = vmatpush1.bf16.msra.mxu0 %v612
    %800 = vmatprep.subr.bf16.mxu0 0
    %801 = vmatpush1.bf16.msra.mxu0 %v613
    %802 = vmatprep.subr.bf16.mxu0 0
    %803 = vmatpush1.bf16.msra.mxu0 %v614
    %804 = vmatprep.subr.bf16.mxu0 0
    %805 = vmatpush1.bf16.msra.mxu0 %v615
    %806 = vmatprep.subr.bf16.mxu0 0
    %807 = vmatpush1.bf16.msra.mxu0 %v616
    %808 = vmatprep.subr.bf16.mxu0 0
    %809 = vmatpush1.bf16.msra.mxu0 %v617
    %810 = vmatprep.subr.bf16.mxu0 0
    %811 = vmatpush1.bf16.msra.mxu0 %v618
    %812 = vmatprep.subr.bf16.mxu0 0
    %813 = vmatpush1.bf16.msra.mxu0 %v619
    %814 = vmatprep.subr.bf16.mxu0 0
    %815 = vmatpush1.bf16.msra.mxu0 %v620
    %816 = vmatprep.subr.bf16.mxu0 0
    %817 = vmatpush1.bf16.msra.mxu0 %v621
    %818 = vmatprep.subr.bf16.mxu0 0
    %819 = vmatpush1.bf16.msra.mxu0 %v622
    %820 = vmatprep.subr.bf16.mxu0 0
    %821 = vmatpush1.bf16.msra.mxu0 %v623
    %822 = vmatprep.subr.bf16.mxu0 0
    %823 = vmatpush1.bf16.msra.mxu0 %v624
    %824 = vmatprep.subr.bf16.mxu0 0
    %825 = vmatpush1.bf16.msra.mxu0 %v625
    %826 = vmatprep.mubr.bf16.mxu0 %v240
    %827 = vmatmul.mubr.bf16.gmra.mrb[0].mxu0 %v238
    %v828 = vpop.f32.mrb[0].mxu0
    %v829 = vadd.f32 %v789, %v828
    %v830 = vpop.f32.mrb[0].mxu0
    %v831 = vpop.f32.mrb[0].mxu0
    %v832 = vpop.f32.mrb[0].mxu0
    %833 = vdwg.mxu0
    %834 = vmatprep.subr.bf16.mxu0 0
    %835 = vmatpush1.bf16.msra.mxu0 %v626
    %836 = vmatprep.subr.bf16.mxu0 0
    %837 = vmatpush1.bf16.msra.mxu0 %v627
    %838 = vmatprep.subr.bf16.mxu0 0
    %839 = vmatpush1.bf16.msra.mxu0 %v628
    %840 = vmatprep.subr.bf16.mxu0 0
    %841 = vmatpush1.bf16.msra.mxu0 %v629
    %842 = vmatprep.subr.bf16.mxu0 0
    %843 = vmatpush1.bf16.msra.mxu0 %v630
    %844 = vmatprep.subr.bf16.mxu0 0
    %845 = vmatpush1.bf16.msra.mxu0 %v631
    %846 = vmatprep.subr.bf16.mxu0 0
    %847 = vmatpush1.bf16.msra.mxu0 %v632
    %848 = vmatprep.subr.bf16.mxu0 0
    %849 = vmatpush1.bf16.msra.mxu0 %v633
    %850 = vmatprep.subr.bf16.mxu0 0
    %851 = vmatpush1.bf16.msra.mxu0 %v634
    %852 = vmatprep.subr.bf16.mxu0 0
    %853 = vmatpush1.bf16.msra.mxu0 %v635
    %854 = vmatprep.subr.bf16.mxu0 0
    %855 = vmatpush1.bf16.msra.mxu0 %v636
    %856 = vmatprep.subr.bf16.mxu0 0
    %857 = vmatpush1.bf16.msra.mxu0 %v637
    %858 = vmatprep.subr.bf16.mxu0 0
    %859 = vmatpush1.bf16.msra.mxu0 %v638
    %860 = vmatprep.subr.bf16.mxu0 0
    %861 = vmatpush1.bf16.msra.mxu0 %v639
    %862 = vmatprep.subr.bf16.mxu0 0
    %863 = vmatpush1.bf16.msra.mxu0 %v640
    %864 = vmatprep.subr.bf16.mxu0 0
    %865 = vmatpush1.bf16.msra.mxu0 %v641
    %866 = vmatprep.mubr.bf16.mxu0 %v237
    %867 = vmatmul.mubr.bf16.gmra.mrb[0].mxu0 %v223
    %v868 = vpop.f32.mrb[0].mxu0
    %v869 = vadd.f32 %v829, %v868
    %v870 = vpop.f32.mrb[0].mxu0
    %v871 = vpop.f32.mrb[0].mxu0
    %v872 = vpop.f32.mrb[0].mxu0
    %873 = vdwg.mxu0
    %874 = vmatprep.subr.bf16.mxu0 0
    %875 = vmatpush1.bf16.msra.mxu0 %v642
    %876 = vmatprep.subr.bf16.mxu0 0
    %877 = vmatpush1.bf16.msra.mxu0 %v643
    %878 = vmatprep.subr.bf16.mxu0 0
    %879 = vmatpush1.bf16.msra.mxu0 %v644
    %880 = vmatprep.subr.bf16.mxu0 0
    %881 = vmatpush1.bf16.msra.mxu0 %v645
    %882 = vmatprep.subr.bf16.mxu0 0
    %883 = vmatpush1.bf16.msra.mxu0 %v646
    %884 = vmatprep.subr.bf16.mxu0 0
    %885 = vmatpush1.bf16.msra.mxu0 %v647
    %886 = vmatprep.subr.bf16.mxu0 0
    %887 = vmatpush1.bf16.msra.mxu0 %v648
    %888 = vmatprep.subr.bf16.mxu0 0
    %889 = vmatpush1.bf16.msra.mxu0 %v649
    %890 = vmatprep.subr.bf16.mxu0 0
    %891 = vmatpush1.bf16.msra.mxu0 %v650
    %892 = vmatprep.subr.bf16.mxu0 0
    %893 = vmatpush1.bf16.msra.mxu0 %v651
    %894 = vmatprep.subr.bf16.mxu0 0
    %895 = vmatpush1.bf16.msra.mxu0 %v652
    %896 = vmatprep.subr.bf16.mxu0 0
    %897 = vmatpush1.bf16.msra.mxu0 %v653
    %898 = vmatprep.subr.bf16.mxu0 0
    %899 = vmatpush1.bf16.msra.mxu0 %v654
    %900 = vmatprep.subr.bf16.mxu0 0
    %901 = vmatpush1.bf16.msra.mxu0 %v655
    %902 = vmatprep.subr.bf16.mxu0 0
    %903 = vmatpush1.bf16.msra.mxu0 %v656
    %904 = vmatprep.subr.bf16.mxu0 0
    %905 = vmatpush1.bf16.msra.mxu0 %v657
    %906 = vmatprep.mubr.bf16.mxu0 %v241
    %907 = vmatmul.mubr.bf16.gmra.mrb[0].mxu0 %v239
    %v908 = vpop.f32.mrb[0].mxu0
    %v909 = vadd.f32 %v869, %v908
    %v910 = vpop.f32.mrb[0].mxu0
    %v911 = vpop.f32.mrb[0].mxu0
    %v912 = vpop.f32.mrb[0].mxu0
    %913 = vdwg.mxu0
    %914 = vmatprep.subr.bf16.mxu0 0
    %915 = vmatpush1.bf16.msra.mxu0 %v658
    %916 = vmatprep.subr.bf16.mxu0 0
    %917 = vmatpush1.bf16.msra.mxu0 %v659
    %918 = vmatprep.subr.bf16.mxu0 0
    %919 = vmatpush1.bf16.msra.mxu0 %v660
    %920 = vmatprep.subr.bf16.mxu0 0
    %921 = vmatpush1.bf16.msra.mxu0 %v661
    %922 = vmatprep.subr.bf16.mxu0 0
    %923 = vmatpush1.bf16.msra.mxu0 %v662
    %924 = vmatprep.subr.bf16.mxu0 0
    %925 = vmatpush1.bf16.msra.mxu0 %v663
    %926 = vmatprep.subr.bf16.mxu0 0
    %927 = vmatpush1.bf16.msra.mxu0 %v664
    %928 = vmatprep.subr.bf16.mxu0 0
    %929 = vmatpush1.bf16.msra.mxu0 %v665
    %930 = vmatprep.subr.bf16.mxu0 0
    %931 = vmatpush1.bf16.msra.mxu0 %v666
    %932 = vmatprep.subr.bf16.mxu0 0
    %933 = vmatpush1.bf16.msra.mxu0 %v667
    %934 = vmatprep.subr.bf16.mxu0 0
    %935 = vmatpush1.bf16.msra.mxu0 %v668
    %936 = vmatprep.subr.bf16.mxu0 0
    %937 = vmatpush1.bf16.msra.mxu0 %v669
    %938 = vmatprep.subr.bf16.mxu0 0
    %939 = vmatpush1.bf16.msra.mxu0 %v670
    %940 = vmatprep.subr.bf16.mxu0 0
    %941 = vmatpush1.bf16.msra.mxu0 %v671
    %942 = vmatprep.subr.bf16.mxu0 0
    %943 = vmatpush1.bf16.msra.mxu0 %v672
    %944 = vmatprep.subr.bf16.mxu0 0
    %945 = vmatpush1.bf16.msra.mxu0 %v673
    %946 = vmatprep.mubr.bf16.mxu0 %v263
    %947 = vmatmul.mubr.bf16.gmra.mrb[0].mxu0 %v256
    %v948 = vpop.f32.mrb[0].mxu0
    %v949 = vadd.f32 %v909, %v948
    %v950 = vpop.f32.mrb[0].mxu0
    %v951 = vpop.f32.mrb[0].mxu0
    %v952 = vpop.f32.mrb[0].mxu0
    %953 = vdwg.mxu0
    %vm954 = vcmp.ge.f32.partialorder %v949, 0.0
    %v955 = vmul.f32 %v949, 0.01
    %v956 = vsel %vm954, %v949, %v955
    %v957 = vld [vmem:[%s3] sm:$0xff]
    %v958 = vld [vmem:[%s3 + $0x8] sm:$0xff]
    %v959 = vld [vmem:[%s3 + $0x10] sm:$0xff]
    %v960 = vld [vmem:[%s3 + $0x18] sm:$0xff]
    %v961 = vld [vmem:[%s3 + $0x20] sm:$0xff]
    %v962 = vld [vmem:[%s3 + $0x28] sm:$0xff]
    %v963 = vld [vmem:[%s3 + $0x30] sm:$0xff]
    %v964 = vld [vmem:[%s3 + $0x38] sm:$0xff]
    %v965 = vld [vmem:[%s3 + $0x40] sm:$0xff]
    %v966 = vld [vmem:[%s3 + $0x48] sm:$0xff]
    %v967 = vld [vmem:[%s3 + $0x50] sm:$0xff]
    %v968 = vld [vmem:[%s3 + $0x58] sm:$0xff]
    %v969 = vld [vmem:[%s3 + $0x60] sm:$0xff]
    %v970 = vld [vmem:[%s3 + $0x68] sm:$0xff]
    %v971 = vld [vmem:[%s3 + $0x70] sm:$0xff]
    %v972 = vld [vmem:[%s3 + $0x78] sm:$0xff]
    %v973 = vld [vmem:[%s4] sm:$0x1]
    %v975 = vlaneseq
    %v976 = vshrl.u32 %v975, 7
    %v977 = vsub.s32 0, %v976
    %v978 = vrot.slane %v973, %v977
    %980 = vmatprep.subr.mxu0 0.0
    %981 = vmatpush1.msra.mxu0 %v957
    %982 = vmatprep.subr.mxu0 0.0
    %983 = vmatpush1.msra.mxu0 %v958
    %984 = vmatprep.subr.mxu0 0.0
    %985 = vmatpush1.msra.mxu0 %v959
    %986 = vmatprep.subr.mxu0 0.0
    %987 = vmatpush1.msra.mxu0 %v960
    %988 = vmatprep.subr.mxu0 0.0
    %989 = vmatpush1.msra.mxu0 %v961
    %990 = vmatprep.subr.mxu0 0.0
    %991 = vmatpush1.msra.mxu0 %v962
    %992 = vmatprep.subr.mxu0 0.0
    %993 = vmatpush1.msra.mxu0 %v963
    %994 = vmatprep.subr.mxu0 0.0
    %995 = vmatpush1.msra.mxu0 %v964
    %996 = vmatprep.subr.mxu0 0.0
    %997 = vmatpush1.msra.mxu0 %v965
    %998 = vmatprep.subr.mxu0 0.0
    %999 = vmatpush1.msra.mxu0 %v966
    %1000 = vmatprep.subr.mxu0 0.0
    %1001 = vmatpush1.msra.mxu0 %v967
    %1002 = vmatprep.subr.mxu0 0.0
    %1003 = vmatpush1.msra.mxu0 %v968
    %1004 = vmatprep.subr.mxu0 0.0
    %1005 = vmatpush1.msra.mxu0 %v969
    %1006 = vmatprep.subr.mxu0 0.0
    %1007 = vmatpush1.msra.mxu0 %v970
    %1008 = vmatprep.subr.mxu0 0.0
    %1009 = vmatpush1.msra.mxu0 %v971
    %1010 = vmatprep.subr.mxu0 0.0
    %1011 = vmatpush1.msra.mxu0 %v972
    %1012 = vmatprep.subr.mxu0 0.0
    %1013 = vmatpush1.msra.mxu0 0.0
    %1014 = vmatprep.subr.mxu0 0.0
    %1015 = vmatpush1.msra.mxu0 0.0
    %1016 = vmatprep.subr.mxu0 0.0
    %1017 = vmatpush1.msra.mxu0 0.0
    %1018 = vmatprep.subr.mxu0 0.0
    %1019 = vmatpush1.msra.mxu0 0.0
    %1020 = vmatprep.subr.mxu0 0.0
    %1021 = vmatpush1.msra.mxu0 0.0
    %1022 = vmatprep.subr.mxu0 0.0
    %1023 = vmatpush1.msra.mxu0 0.0
    %1024 = vmatprep.subr.mxu0 0.0
    %1025 = vmatpush1.msra.mxu0 0.0
    %1026 = vmatprep.subr.mxu0 0.0
    %1027 = vmatpush1.msra.mxu0 0.0
    %1028 = vmatprep.subr.mxu0 0.0
    %1029 = vmatpush1.msra.mxu0 0.0
    %1030 = vmatprep.subr.mxu0 0.0
    %1031 = vmatpush1.msra.mxu0 0.0
    %1032 = vmatprep.subr.mxu0 0.0
    %1033 = vmatpush1.msra.mxu0 0.0
    %1034 = vmatprep.subr.mxu0 0.0
    %1035 = vmatpush1.msra.mxu0 0.0
    %1036 = vmatprep.subr.mxu0 0.0
    %1037 = vmatpush1.msra.mxu0 0.0
    %1038 = vmatprep.subr.mxu0 0.0
    %1039 = vmatpush1.msra.mxu0 0.0
    %1040 = vmatprep.subr.mxu0 0.0
    %1041 = vmatpush1.msra.mxu0 0.0
    %1042 = vmatprep.subr.mxu0 0.0
    %1043 = vmatpush1.msra.mxu0 0.0
    %1044 = vmatprep.mubr.f32.mxu0 0.0
    %1045 = vmatmul.mubr.f32.gmra.mrb[0].mxu0 %v956
    %v1046 = vpop.f32.mrb[0].mxu0
    %v1047 = vadd.f32 %v978, %v1046
    %v1048 = vpop.f32.mrb[0].mxu0
    %1049 = vdwg.mxu0
    %1050 = vst [vmem:[#allocation2] sm:$0x3] %v1047
    // Predicated region
    $region22: #{custom_cnn_forward.7} parent=1 // pred_check
      _
    $region23: #{custom_cnn_forward.7} parent=1 // pred_check_branch
      %1052 = sbr.rel (0) target = $region25
    $region24: #{custom_cnn_forward.7} parent=1 // pred_region
      %s1054 = ssub.s32 32, 32
      %1055 = vsyncadd [#allocation3], %s1054
      %s1057 = sshll.u32 [#allocation2], 4
      %s1058 = int_to_ptr.vmem [resolvable:$true] %s1057
      %1060 = dma.vmem_to_hbm [thread:$0]  %s1058, 32, %s5, [#allocation3]
    $region25: #{custom_cnn_forward.7} parent=1 // pred_fallthru
      _
    // Predicated region
    $region26: #{custom_cnn_forward.7} parent=1 // pred_check
      _
    $region27: #{custom_cnn_forward.7} parent=1 // pred_check_branch
      %1062 = sbr.rel (0) target = $region29
    $region28: #{custom_cnn_forward.7} parent=1 // pred_region
      %1063 = dma.done [#allocation3], 32
    $region29: #{custom_cnn_forward.7} parent=1 // pred_fallthru
      _
    %1064 = vsyncpa [#allocation3], 1

</llo_original>
